<compile_context>
chip_gen: v7x
topology: tpu7x:2x2x1
jax: 0.10.0
libtpu: 0.0.40
codegen_flags: <defaults>
</compile_context>

<pallas_src>
import math
from functools import partial

import jax
import jax.numpy as jnp
from jax import lax
from jax.experimental import pallas as pl
from jax.experimental.pallas import tpu as pltpu

# Run the pure-JAX reference matmuls at full f32 fidelity so the kernel-vs-
# reference comparison is not polluted by XLA's default low-precision passes.
jax.config.update("jax_default_matmul_precision", "highest")

LANE = 128               # vreg lane width
SUBLANE = 8              # f32 sublane granule
_MIN_ROWS_PER_CORE = 128  # only split the batch axis across TCs above this


def _round_up(n, m):
    return ((n + m - 1) // m) * m


def _num_tensorcores_per_device():
    """Megacore chips (v4 / v5p / v7x) expose 2 TensorCores behind one JAX
    device; v5e / v6e have a single TensorCore.  Used only to decide whether
    the 'parallel' batch grid axis should have >= 2 steps."""
    try:
        kind = jax.devices()[0].device_kind.lower()
    except Exception:
        return 1
    return 2 if any(tag in kind for tag in ("v4", "v5p", "7x", "v7")) else 1


_NUM_TC = _num_tensorcores_per_device()


# ---------------------------------------------------------------------------
# Pallas kernels
# ---------------------------------------------------------------------------

def _trunk_kernel(n_tail, x_ref, brow_ref, w0s_ref, w0c_ref, b0_ref, *refs):
    """Fused Fourier-feature MLP trunk (EUP-bound: sin/cos/tanh dominate).

    x_ref    : (bm, 1)       scalar locations (batch tile)
    brow_ref : (1, modes)    Fourier matrix, pre-transposed & pre-scaled by 2*pi
    w0s/w0c  : (modes, h0)   layer-0 weight split into sin / cos halves
    refs     : n_tail * (w, b) tail layers (last one lane-padded) + output ref
    All math stays f32: the large Fourier arguments need f32 range for sin/cos
    argument reduction, and the idle MXU gains nothing from bf16 operands.
    """
    o_ref = refs[-1]
    proj = x_ref[...] * brow_ref[...]            # (bm, modes) outer product
    # No concat: the sin/cos halves feed two MXU dots into one f32 accumulator.
    h = (jnp.dot(jnp.sin(proj), w0s_ref[...], preferred_element_type=jnp.float32)
         + jnp.dot(jnp.cos(proj), w0c_ref[...], preferred_element_type=jnp.float32))
    h = jnp.tanh(h + b0_ref[...])
    for l in range(n_tail):
        w = refs[2 * l][...]
        b = refs[2 * l + 1][...]
        h = jnp.dot(h, w, preferred_element_type=jnp.float32) + b
        if l < n_tail - 1:
            h = jnp.tanh(h)
    o_ref[...] = h                               # lane-dense (bm, 128k) store


def _mlp_kernel(tanh_flags, x_ref, *refs):
    """Fused (optional-projection +) FFNet: per-layer Linear, tanh where
    tanh_flags[l] is True."""
    o_ref = refs[-1]
    h = x_ref[...]
    for l, do_tanh in enumerate(tanh_flags):
        w = refs[2 * l][...]
        b = refs[2 * l + 1][...]
        if w.shape[0] == 1:
            h = h * w + b        # K == 1: outer product on the VPU, skip MXU
        else:
            h = jnp.dot(h, w, preferred_element_type=jnp.float32) + b
        if do_tanh:
            h = jnp.tanh(h)
    o_ref[...] = h


# ---------------------------------------------------------------------------
# pallas_call wrappers
# ---------------------------------------------------------------------------

def _batch_tiling(n, bm, num_cores=_NUM_TC):
    """Generation-aware, padding-tight batch tiling.

    * single grid step on single-TensorCore chips whenever n fits in one tile
      (no per-step pipeline overhead),
    * >= num_cores steps on megacore chips when there are enough rows to
      split (so dimension_semantics=('parallel',) can shard across TCs),
    * bm_eff = round_up(cdiv(n, steps), 8) so per-step padding is < 8 rows.
    """
    bm = max(SUBLANE, _round_up(bm, SUBLANE))
    n8 = _round_up(n, SUBLANE)
    steps = pl.cdiv(n8, bm)
    if num_cores > 1 and n8 >= num_cores * _MIN_ROWS_PER_CORE:
        steps = max(steps, num_cores)
    bm_eff = _round_up(pl.cdiv(n, steps), SUBLANE)
    steps = pl.cdiv(n, bm_eff)
    return bm_eff, steps * bm_eff


def _rep(a):
    # Whole-array block, replicated across the batch grid.  Pallas skips
    # re-issuing the HBM->VMEM copy when the block index is unchanged between
    # consecutive grid steps, so these weights (<100 KiB total) are DMA'd once
    # per call even when the batch grid has several steps.
    return pl.BlockSpec(a.shape, lambda i: (0, 0))


def trunk_forward(x, params, *, bm=2048):
    """TrunkNet forward: (n, 1) locations -> (n, out_size) basis functions."""
    n = x.shape[0]
    out_size = params["out_size"]
    tail = params["tail"]
    out_pad = tail[-1][0].shape[1]
    modes = params["b_row"].shape[1]

    bm_eff, n_pad = _batch_tiling(n, bm)
    if n_pad != n:
        x = jnp.pad(x, ((0, n_pad - n), (0, 0)))

    flat = []
    for w, b in tail:
        flat += [w, b]
    weights = [params["b_row"], params["w0_sin"], params["w0_cos"],
               params["b0"]] + flat

    dims = [2 * modes, params["w0_sin"].shape[1]] + [w.shape[1] for w, _ in tail]
    flops = 2 * n_pad * sum(a * b for a, b in zip(dims[:-1], dims[1:]))
    transcendentals = n_pad * (2 * modes + sum(dims[1:-1]))
    bytes_accessed = (x.dtype.itemsize * n_pad * 1 + 4 * n_pad * out_pad
                      + sum(a.size * a.dtype.itemsize for a in weights))

    out = pl.pallas_call(
        partial(_trunk_kernel, len(tail)),
        out_shape=jax.ShapeDtypeStruct((n_pad, out_pad), jnp.float32),
        grid=(n_pad // bm_eff,),
        in_specs=[pl.BlockSpec((bm_eff, 1), lambda i: (i, 0))]
                 + [_rep(a) for a in weights],
        out_specs=pl.BlockSpec((bm_eff, out_pad), lambda i: (i, 0)),
        compiler_params=pltpu.CompilerParams(
            dimension_semantics=("parallel",)),
        cost_estimate=pl.CostEstimate(flops=int(flops),
                                      transcendentals=int(transcendentals),
                                      bytes_accessed=int(bytes_accessed)),
    )(x, *weights)
    return out[:n, :out_size]


def fused_mlp_forward(x, layers, tanh_flags, out_size, *, bm=2048):
    """Fused MLP: (n, in) -> (n, out_size). `layers` is [(w, b), ...] with
    pre-transposed weights; `tanh_flags[l]` says whether layer l is followed
    by a Tanh."""
    n, in_size = x.shape
    out_pad = layers[-1][0].shape[1]

    bm_eff, n_pad = _batch_tiling(n, bm)
    if n_pad != n:
        x = jnp.pad(x, ((0, n_pad - n), (0, 0)))

    flat = []
    for w, b in layers:
        flat += [w, b]

    dims = [in_size] + [w.shape[1] for w, _ in layers]
    flops = 2 * n_pad * sum(a * b for a, b in zip(dims[:-1], dims[1:]))
    transcendentals = n_pad * sum(d for d, t in zip(dims[1:], tanh_flags) if t)
    bytes_accessed = (x.dtype.itemsize * n_pad * in_size + 4 * n_pad * out_pad
                      + sum(a.size * a.dtype.itemsize for a in flat))

    out = pl.pallas_call(
        partial(_mlp_kernel, tuple(tanh_flags)),
        out_shape=jax.ShapeDtypeStruct((n_pad, out_pad), jnp.float32),
        grid=(n_pad // bm_eff,),
        in_specs=[pl.BlockSpec((bm_eff, in_size), lambda i: (i, 0))]
                 + [_rep(a) for a in flat],
        out_specs=pl.BlockSpec((bm_eff, out_pad), lambda i: (i, 0)),
        compiler_params=pltpu.CompilerParams(
            dimension_semantics=("parallel",)),
        cost_estimate=pl.CostEstimate(flops=int(flops),
                                      transcendentals=int(transcendentals),
                                      bytes_accessed=int(bytes_accessed)),
    )(x, *flat)
    return out[:n, :out_size]


def ffnet_forward(x, params, *, bm=2048):
    layers = params["layers"]
    tanh_flags = tuple([True] * (len(layers) - 1) + [False])
    return fused_mlp_forward(x, layers, tanh_flags, params["out_size"], bm=bm)


def encode_initial_state(x, trunk_output, x_dnn_params, *, bm=2048):
    """Fused x-projection + encoder: x_dnn(einsum('ni,bn->bi', trunk, x)) in
    ONE pallas_call (the projection is layer 0 of the fused MLP, no tanh)."""
    m = trunk_output.shape[1]
    proj_layer = (trunk_output, jnp.zeros((1, m), jnp.float32))
    layers = [proj_layer] + list(x_dnn_params["layers"])
    tanh_flags = ((False,)
                  + tuple([True] * (len(x_dnn_params["layers"]) - 1) + [False]))
    return fused_mlp_forward(x, layers, tanh_flags, x_dnn_params["out_size"],
                             bm=bm)


# ---------------------------------------------------------------------------
# Pure-JAX references (validate the kernels)
# ---------------------------------------------------------------------------

def trunk_reference(x, params):
    proj = x * params["b_row"]            # b_row already carries the 2*pi scale
    h = jnp.tanh(jnp.sin(proj) @ params["w0_sin"]
                 + jnp.cos(proj) @ params["w0_cos"] + params["b0"])
    tail = params["tail"]
    for l, (w, b) in enumerate(tail):
        h = h @ w + b
        if l < len(tail) - 1:
            h = jnp.tanh(h)
    return h[:, :params["out_size"]]


def ffnet_reference(x, params):
    h = x
    layers = params["layers"]
    for l, (w, b) in enumerate(layers):
        h = h @ w + b
        if l < len(layers) - 1:
            h = jnp.tanh(h)
    return h[:, :params["out_size"]]


def encode_reference(x, trunk_output, x_dnn_params):
    x_proj = jnp.einsum("ni,bn->bi", trunk_output, x)
    return ffnet_reference(x_proj, x_dnn_params)


# ---------------------------------------------------------------------------
# Parameter construction (synthetic, torch-style init; weights pre-transposed)
# ---------------------------------------------------------------------------

def _linear_params(key, fan_in, fan_out, pad_in=0, pad_out=0):
    """nn.Linear-style init stored as (in, out) / (1, out).  Zero padding keeps
    the padded units mathematically inert (exactly the unpadded layer)."""
    kw, kb = jax.random.split(key)
    bound = 1.0 / math.sqrt(fan_in)
    w = jax.random.uniform(kw, (fan_in, fan_out), jnp.float32, -bound, bound)
    b = jax.random.uniform(kb, (1, fan_out), jnp.float32, -bound, bound)
    if pad_in or pad_out:
        w = jnp.pad(w, ((0, pad_in), (0, pad_out)))
        b = jnp.pad(b, ((0, 0), (0, pad_out)))
    return w, b


def init_trunk(key, modes, hidden, out_size, b_scale=100.0):
    kB, k0, *ktail = jax.random.split(key, 2 + len(hidden))
    # Fourier matrix B (torch buffer of shape (modes, 1), std=b_scale), stored
    # pre-transposed (1, modes) and pre-scaled by 2*pi (it is a constant).
    b_row = (2.0 * math.pi * b_scale) * jax.random.normal(kB, (1, modes), jnp.float32)
    w0, b0 = _linear_params(k0, 2 * modes, hidden[0])
    w0_sin, w0_cos = w0[:modes], w0[modes:]      # split -> no in-kernel concat
    sizes = list(hidden) + [out_size]
    out_pad = _round_up(out_size, LANE)          # lane-dense output store
    tail = []
    for l, k in enumerate(ktail):
        pad_out = (out_pad - out_size) if l == len(sizes) - 2 else 0
        tail.append(_linear_params(k, sizes[l], sizes[l + 1], pad_out=pad_out))
    return {"b_row": b_row, "w0_sin": w0_sin, "w0_cos": w0_cos, "b0": b0,
            "tail": tail, "out_size": out_size}


def init_ffnet(key, in_size, hidden, out_size):
    # Hidden widths are zero-padded to 128 LANES (not just 8 sublanes): the
    # padded units are mathematically inert but give full-width MXU passes and
    # unmasked weight/activation vld/vst.  Output is lane-padded too.
    true_sizes = [in_size] + list(hidden) + [out_size]
    pad_sizes = ([in_size] + [_round_up(h, LANE) for h in hidden]
                 + [_round_up(out_size, LANE)])
    keys = jax.random.split(key, len(true_sizes) - 1)
    layers = []
    for l in range(len(true_sizes) - 1):
        layers.append(_linear_params(
            keys[l], true_sizes[l], true_sizes[l + 1],
            pad_in=pad_sizes[l] - true_sizes[l],
            pad_out=pad_sizes[l + 1] - true_sizes[l + 1]))
    return {"layers": layers, "out_size": out_size}


def init_lstm(key, input_size, hidden_size, num_layers):
    params = []
    for l, k in enumerate(jax.random.split(key, num_layers)):
        k_ih, k_hh, k_b = jax.random.split(k, 3)
        isz = input_size if l == 0 else hidden_size
        bound = 1.0 / math.sqrt(hidden_size)
        w_ih = jax.random.uniform(k_ih, (isz, 4 * hidden_size), jnp.float32, -bound, bound)
        w_hh = jax.random.uniform(k_hh, (hidden_size, 4 * hidden_size), jnp.float32, -bound, bound)
        b = jax.random.uniform(k_b, (1, 4 * hidden_size), jnp.float32, -bound, bound)
        params.append((w_ih, w_hh, b))
    return params


# ---------------------------------------------------------------------------
# Plain-JAX glue: LSTM + CausalFlowModel forward
# ---------------------------------------------------------------------------

def lstm_forward(u_seq, h0, c0, params):
    """Multi-layer LSTM (torch gate order i, f, g, o), batch-first outputs.

    The layer-0 input projection is hoisted out of the sequential scan: one
    batched (B*T, in) x (in, 4H) matmul instead of T tiny matmuls on the
    critical path.  Higher layers consume the layer below's hidden state, so
    their input projections stay inside the scan.
    """
    B, T, _ = u_seq.shape
    w_ih0, _, b0_ = params[0]
    gates_in0 = (u_seq.reshape(B * T, -1) @ w_ih0 + b0_).reshape(B, T, -1)

    def step(carry, g0_t):
        hs, cs = carry
        inp = None
        new_h, new_c = [], []
        for l, (w_ih, w_hh, b) in enumerate(params):
            if l == 0:
                gates = g0_t + hs[0] @ w_hh
            else:
                gates = inp @ w_ih + hs[l] @ w_hh + b
            i, f, g, o = jnp.split(gates, 4, axis=-1)
            c = jax.nn.sigmoid(f) * cs[l] + jax.nn.sigmoid(i) * jnp.tanh(g)
            h = jax.nn.sigmoid(o) * jnp.tanh(c)
            new_h.append(h)
            new_c.append(c)
            inp = h
        return (jnp.stack(new_h), jnp.stack(new_c)), inp

    _, y = lax.scan(step, (h0, c0), jnp.swapaxes(gates_in0, 0, 1))
    return jnp.swapaxes(y, 0, 1)          # (B, T, H): top-layer outputs


def init_causal_flow_model(key, *, trunk_modes, control_rnn_size, control_rnn_depth,
                           encoder_size, encoder_depth, decoder_size, decoder_depth,
                           trunk_hidden=(64, 32), fourier_modes=128,
                           use_nonlinear=True):
    k_tr, k_enc, k_dec, k_rnn, k_out = jax.random.split(key, 5)
    control_dim = trunk_modes                 # in_size_encoder == basis modes
    x_dnn_osz = control_rnn_depth * control_rnn_size
    params = {
        "trunk": init_trunk(k_tr, fourier_modes, trunk_hidden, trunk_modes),
        "x_dnn": init_ffnet(k_enc, control_dim,
                            encoder_depth * (encoder_size * x_dnn_osz,), x_dnn_osz),
        "u_dnn": init_ffnet(k_dec, control_rnn_size,
                            decoder_depth * (decoder_size * control_rnn_size,),
                            trunk_modes),
        "u_rnn": init_lstm(k_rnn, 1 + control_dim, control_rnn_size, control_rnn_depth),
        "output_NN": init_ffnet(k_out, 1, [50, 50], 1),
    }
    cfg = dict(control_rnn_size=control_rnn_size,
               control_rnn_depth=control_rnn_depth,
               use_nonlinear=use_nonlinear)
    return params, cfg


def causal_flow_forward(params, cfg, x, rnn_input_padded, lengths, locations, deltas,
                        *, ffnet_fn=ffnet_forward, trunk_fn=trunk_forward,
                        encode_fn=None):
    """Mirror of CausalFlowModel.forward (inference mode).

    x                : (B, n_loc)          state sampled at `locations`
    rnn_input_padded : (B, T, n_loc + 1)   padded payload of the PackedSequence
    lengths          : (B,)                valid sequence lengths
    locations        : (n_loc,)
    deltas           : (B, T, 1)
    """
    if encode_fn is None:
        encode_fn = encode_initial_state
    H = cfg["control_rnn_size"]
    L = cfg["control_rnn_depth"]
    B = rnn_input_padded.shape[0]

    u = rnn_input_padded[:, :, :-1]                                  # (B, T, n_loc)
    trunk_output = trunk_fn(locations.reshape(-1, 1), params["trunk"])   # (n_loc, m)

    u_proj = jnp.einsum("ni,btn->bti", trunk_output, u)              # (B, T, m)
    u_deltas = jnp.concatenate([u_proj, deltas], axis=-1)            # (B, T, m+1)

    # Fused x-projection + encoder (one pallas_call): h0 = x_dnn(x @ trunk).
    h0 = encode_fn(x, trunk_output, params["x_dnn"])                 # (B, L*H)
    h0 = h0.reshape(B, L, H).transpose(1, 0, 2)                      # (L, B, H)
    c0 = jnp.zeros_like(h0)

    h = lstm_forward(u_deltas, h0, c0, params["u_rnn"])              # (B, T, H)
    h_shift = jnp.roll(h, shift=1, axis=1)
    h_shift = h_shift.at[:, 0, :].set(h0[-1])
    encoded_controls = (1.0 - deltas) * h_shift + deltas * h
    last = encoded_controls[jnp.arange(B), lengths - 1, :]           # (B, H)

    output_flow = ffnet_fn(last, params["u_dnn"])                    # (B, m)
    output = jnp.einsum("ni,bi->bn", trunk_output, output_flow)      # (B, n_loc)
    if cfg["use_nonlinear"]:
        output = ffnet_fn(output.reshape(-1, 1), params["output_NN"]).reshape(B, -1)
    return output, trunk_output


# ---------------------------------------------------------------------------
# Demo / correctness check
# ---------------------------------------------------------------------------

if __name__ == "__main__":
    key = jax.random.PRNGKey(0)
    k_par, k_x, k_u, k_d, k_big, k_awk = jax.random.split(key, 6)

    # Small CausalFlowModel configuration.
    n_loc = 16               # measurement locations (original state dimension)
    trunk_modes = 8          # basis functions = control_dim = decoder out size
    control_rnn_size = 16
    control_rnn_depth = 2
    B, T = 4, 6

    params, cfg = init_causal_flow_model(
        k_par, trunk_modes=trunk_modes, control_rnn_size=control_rnn_size,
        control_rnn_depth=control_rnn_depth, encoder_size=2, encoder_depth=2,
        decoder_size=2, decoder_depth=2, trunk_hidden=(64, 32),
        fourier_modes=128, use_nonlinear=True)

    x = jax.random.normal(k_x, (B, n_loc), jnp.float32)
    rnn_input = jax.random.normal(k_u, (B, T, n_loc + 1), jnp.float32)
    deltas = jax.random.uniform(k_d, (B, T, 1), jnp.float32)
    locations = jnp.linspace(0.0, 1.0, n_loc)
    lengths = jnp.array([T, T - 1, T - 2, T - 3], dtype=jnp.int32)  # packed order

    out, trunk_out = causal_flow_forward(
        params, cfg, x, rnn_input, lengths, locations, deltas)
    out = jax.block_until_ready(out)
    assert out.shape == (B, n_loc) and trunk_out.shape == (n_loc, trunk_modes)

    ref_out, ref_trunk = causal_flow_forward(
        params, cfg, x, rnn_input, lengths, locations, deltas,
        ffnet_fn=ffnet_reference, trunk_fn=trunk_reference,
        encode_fn=encode_reference)
    assert jnp.allclose(trunk_out, ref_trunk, atol=1e-3, rtol=1e-3)
    assert jnp.allclose(out, ref_out, atol=1e-2, rtol=1e-2)

    # Large-batch trunk path: single grid step on v5e/v6e, >= 2 parallel steps
    # (one per TensorCore) on megacore chips (v4/v5p/v7x).
    x_big = jax.random.uniform(k_big, (1024, 1), jnp.float32)
    big = jax.block_until_ready(trunk_forward(x_big, params["trunk"]))
    big_ref = trunk_reference(x_big, params["trunk"])
    assert jnp.allclose(big, big_ref, atol=1e-3, rtol=1e-3)

    # Awkward batch size: exercises the tight-padding tiling (per-step padding
    # < 8 rows instead of up-to-bm-8 garbage rows).
    x_awk = jax.random.uniform(k_awk, (520, 1), jnp.float32)
    awk = jax.block_until_ready(trunk_forward(x_awk, params["trunk"], bm=512))
    awk_ref = trunk_reference(x_awk, params["trunk"])
    assert jnp.allclose(awk, awk_ref, atol=1e-3, rtol=1e-3)

    print("KERNEL_OK")
</pallas_src>

<mosaic_0001>
module attributes {stable_mosaic.version = 11 : i64} {
  func.func @_trunk_kernel(%arg0: i32, %arg1: memref<16x1xf32, #tpu.memory_space<vmem>>, %arg2: memref<1x128xf32, #tpu.memory_space<vmem>>, %arg3: memref<128x64xf32, #tpu.memory_space<vmem>>, %arg4: memref<128x64xf32, #tpu.memory_space<vmem>>, %arg5: memref<1x64xf32, #tpu.memory_space<vmem>>, %arg6: memref<64x32xf32, #tpu.memory_space<vmem>>, %arg7: memref<1x32xf32, #tpu.memory_space<vmem>>, %arg8: memref<32x128xf32, #tpu.memory_space<vmem>>, %arg9: memref<1x128xf32, #tpu.memory_space<vmem>>, %arg10: memref<16x128xf32, #tpu.memory_space<vmem>>) attributes {dimension_semantics = [#tpu.dimension_semantics<parallel>], iteration_bounds = array<i64: 1>, scalar_prefetch = 0 : i64, scratch_operands = 0 : i64, tpu.core_type = #tpu.core_type<tc>, window_params = [{transform_indices = @transform_0, window_bounds = array<i64: 16, 1>}, {pipeline_mode = #tpu.pipeline_mode<synchronous>, transform_indices = @transform_1, window_bounds = array<i64: 1, 128>}, {pipeline_mode = #tpu.pipeline_mode<synchronous>, transform_indices = @transform_2, window_bounds = array<i64: 128, 64>}, {pipeline_mode = #tpu.pipeline_mode<synchronous>, transform_indices = @transform_3, window_bounds = array<i64: 128, 64>}, {pipeline_mode = #tpu.pipeline_mode<synchronous>, transform_indices = @transform_4, window_bounds = array<i64: 1, 64>}, {pipeline_mode = #tpu.pipeline_mode<synchronous>, transform_indices = @transform_5, window_bounds = array<i64: 64, 32>}, {pipeline_mode = #tpu.pipeline_mode<synchronous>, transform_indices = @transform_6, window_bounds = array<i64: 1, 32>}, {pipeline_mode = #tpu.pipeline_mode<synchronous>, transform_indices = @transform_7, window_bounds = array<i64: 32, 128>}, {pipeline_mode = #tpu.pipeline_mode<synchronous>, transform_indices = @transform_8, window_bounds = array<i64: 1, 128>}, {transform_indices = @transform_9, window_bounds = array<i64: 16, 128>}]} {
    %c0 = arith.constant 0 : index
    %c0_0 = arith.constant 0 : index
    %0 = vector.load %arg1[%c0, %c0_0] : memref<16x1xf32, #tpu.memory_space<vmem>>, vector<16x1xf32>
    %c0_1 = arith.constant 0 : index
    %c0_2 = arith.constant 0 : index
    %1 = vector.load %arg2[%c0_1, %c0_2] : memref<1x128xf32, #tpu.memory_space<vmem>>, vector<1x128xf32>
    %2 = vector.broadcast %0 : vector<16x1xf32> to vector<16x128xf32>
    %3 = vector.broadcast %1 : vector<1x128xf32> to vector<16x128xf32>
    %4 = arith.mulf %2, %3 : vector<16x128xf32>
    %5 = math.sin %4 : vector<16x128xf32>
    %c0_3 = arith.constant 0 : index
    %c0_4 = arith.constant 0 : index
    %6 = vector.load %arg3[%c0_3, %c0_4] : memref<128x64xf32, #tpu.memory_space<vmem>>, vector<128x64xf32>
    %cst = arith.constant dense<0.000000e+00> : vector<16x64xf32>
    %7 = tpu.matmul %5, %6, %cst {dimension_numbers = #tpu.dot_dimension_numbers<[1], [0], [0], [1], [0, 0, 1, 1], [], []>, precision = #tpu.contract_precision<fp32>} : vector<16x128xf32>, vector<128x64xf32>, vector<16x64xf32> -> vector<16x64xf32>
    %8 = math.cos %4 : vector<16x128xf32>
    %c0_5 = arith.constant 0 : index
    %c0_6 = arith.constant 0 : index
    %9 = vector.load %arg4[%c0_5, %c0_6] : memref<128x64xf32, #tpu.memory_space<vmem>>, vector<128x64xf32>
    %cst_7 = arith.constant dense<0.000000e+00> : vector<16x64xf32>
    %10 = tpu.matmul %8, %9, %cst_7 {dimension_numbers = #tpu.dot_dimension_numbers<[1], [0], [0], [1], [0, 0, 1, 1], [], []>, precision = #tpu.contract_precision<fp32>} : vector<16x128xf32>, vector<128x64xf32>, vector<16x64xf32> -> vector<16x64xf32>
    %11 = arith.addf %7, %10 : vector<16x64xf32>
    %c0_8 = arith.constant 0 : index
    %c0_9 = arith.constant 0 : index
    %12 = vector.load %arg5[%c0_8, %c0_9] : memref<1x64xf32, #tpu.memory_space<vmem>>, vector<1x64xf32>
    %13 = vector.broadcast %12 : vector<1x64xf32> to vector<16x64xf32>
    %14 = arith.addf %11, %13 : vector<16x64xf32>
    %15 = math.tanh %14 : vector<16x64xf32>
    %c0_10 = arith.constant 0 : index
    %c0_11 = arith.constant 0 : index
    %16 = vector.load %arg6[%c0_10, %c0_11] : memref<64x32xf32, #tpu.memory_space<vmem>>, vector<64x32xf32>
    %c0_12 = arith.constant 0 : index
    %c0_13 = arith.constant 0 : index
    %17 = vector.load %arg7[%c0_12, %c0_13] : memref<1x32xf32, #tpu.memory_space<vmem>>, vector<1x32xf32>
    %cst_14 = arith.constant dense<0.000000e+00> : vector<16x32xf32>
    %18 = tpu.matmul %15, %16, %cst_14 {dimension_numbers = #tpu.dot_dimension_numbers<[1], [0], [0], [1], [0, 0, 1, 1], [], []>, precision = #tpu.contract_precision<fp32>} : vector<16x64xf32>, vector<64x32xf32>, vector<16x32xf32> -> vector<16x32xf32>
    %19 = vector.broadcast %17 : vector<1x32xf32> to vector<16x32xf32>
    %20 = arith.addf %18, %19 : vector<16x32xf32>
    %21 = math.tanh %20 : vector<16x32xf32>
    %c0_15 = arith.constant 0 : index
    %c0_16 = arith.constant 0 : index
    %22 = vector.load %arg8[%c0_15, %c0_16] : memref<32x128xf32, #tpu.memory_space<vmem>>, vector<32x128xf32>
    %c0_17 = arith.constant 0 : index
    %c0_18 = arith.constant 0 : index
    %23 = vector.load %arg9[%c0_17, %c0_18] : memref<1x128xf32, #tpu.memory_space<vmem>>, vector<1x128xf32>
    %cst_19 = arith.constant dense<0.000000e+00> : vector<16x128xf32>
    %24 = tpu.matmul %21, %22, %cst_19 {dimension_numbers = #tpu.dot_dimension_numbers<[1], [0], [0], [1], [0, 0, 1, 1], [], []>, precision = #tpu.contract_precision<fp32>} : vector<16x32xf32>, vector<32x128xf32>, vector<16x128xf32> -> vector<16x128xf32>
    %25 = vector.broadcast %23 : vector<1x128xf32> to vector<16x128xf32>
    %26 = arith.addf %24, %25 : vector<16x128xf32>
    %c0_20 = arith.constant 0 : index
    %c0_21 = arith.constant 0 : index
    %27 = vector.load %arg10[%c0_20, %c0_21] : memref<16x128xf32, #tpu.memory_space<vmem>>, vector<16x128xf32>
    tpu.vector_store %arg10[%c0_20, %c0_21], %26 {strides = array<i32>} : memref<16x128xf32, #tpu.memory_space<vmem>>, vector<16x128xf32>,
    return
  }
  func.func @transform_0(%arg0: i32) -> (i32, i32) {
    %c0_i32 = arith.constant 0 : i32
    %c0_i32_0 = arith.constant 0 : i32
    return %arg0, %c0_i32 : i32, i32
  }
  func.func @transform_1(%arg0: i32) -> (i32, i32) {
    %c0_i32 = arith.constant 0 : i32
    %c0_i32_0 = arith.constant 0 : i32
    %c0_i32_1 = arith.constant 0 : i32
    return %c0_i32, %c0_i32_0 : i32, i32
  }
  func.func @transform_2(%arg0: i32) -> (i32, i32) {
    %c0_i32 = arith.constant 0 : i32
    %c0_i32_0 = arith.constant 0 : i32
    %c0_i32_1 = arith.constant 0 : i32
    return %c0_i32, %c0_i32_0 : i32, i32
  }
  func.func @transform_3(%arg0: i32) -> (i32, i32) {
    %c0_i32 = arith.constant 0 : i32
    %c0_i32_0 = arith.constant 0 : i32
    %c0_i32_1 = arith.constant 0 : i32
    return %c0_i32, %c0_i32_0 : i32, i32
  }
  func.func @transform_4(%arg0: i32) -> (i32, i32) {
    %c0_i32 = arith.constant 0 : i32
    %c0_i32_0 = arith.constant 0 : i32
    %c0_i32_1 = arith.constant 0 : i32
    return %c0_i32, %c0_i32_0 : i32, i32
  }
  func.func @transform_5(%arg0: i32) -> (i32, i32) {
    %c0_i32 = arith.constant 0 : i32
    %c0_i32_0 = arith.constant 0 : i32
    %c0_i32_1 = arith.constant 0 : i32
    return %c0_i32, %c0_i32_0 : i32, i32
  }
  func.func @transform_6(%arg0: i32) -> (i32, i32) {
    %c0_i32 = arith.constant 0 : i32
    %c0_i32_0 = arith.constant 0 : i32
    %c0_i32_1 = arith.constant 0 : i32
    return %c0_i32, %c0_i32_0 : i32, i32
  }
  func.func @transform_7(%arg0: i32) -> (i32, i32) {
    %c0_i32 = arith.constant 0 : i32
    %c0_i32_0 = arith.constant 0 : i32
    %c0_i32_1 = arith.constant 0 : i32
    return %c0_i32, %c0_i32_0 : i32, i32
  }
  func.func @transform_8(%arg0: i32) -> (i32, i32) {
    %c0_i32 = arith.constant 0 : i32
    %c0_i32_0 = arith.constant 0 : i32
    %c0_i32_1 = arith.constant 0 : i32
    return %c0_i32, %c0_i32_0 : i32, i32
  }
  func.func @transform_9(%arg0: i32) -> (i32, i32) {
    %c0_i32 = arith.constant 0 : i32
    %c0_i32_0 = arith.constant 0 : i32
    return %arg0, %c0_i32 : i32, i32
  }
}

</mosaic_0001>

<llo_original>
// kernel: tpu_custom_call.1
$region0: #{tpu_custom_call.1}
  #allocation0 [shape = 'u32[]', space=smem, size = 0x4, offset = 0x4, fixed_abs, tag = 'smem constant byte address 0x4 - core index']
  #allocation1 [shape = 'u32[144,128]{1,0:T(1,128)}', space=vmem, size = 0x12000, scoped, tag = 'internal scratch']
  %s0 = inlined_call_operand.vmem [shape: f32[16,1], index: 0, kind: input, shape index: {}]
  %s1 = inlined_call_operand.vmem [shape: f32[1,128], index: 1, kind: input, shape index: {}]
  %s2 = inlined_call_operand.vmem [shape: f32[128,64], index: 2, kind: input, shape index: {}]
  %s3 = inlined_call_operand.vmem [shape: f32[128,64], index: 3, kind: input, shape index: {}]
  %s4 = inlined_call_operand.vmem [shape: f32[1,64], index: 4, kind: input, shape index: {}]
  %s5 = inlined_call_operand.vmem [shape: f32[64,32], index: 5, kind: input, shape index: {}]
  %s6 = inlined_call_operand.vmem [shape: f32[1,32], index: 6, kind: input, shape index: {}]
  %s7 = inlined_call_operand.vmem [shape: f32[32,128], index: 7, kind: input, shape index: {}]
  %s8 = inlined_call_operand.vmem [shape: f32[1,128], index: 8, kind: input, shape index: {}]
  %s9 = inlined_call_operand.hbm [shape: f32[16,128], index: 9, kind: output, shape index: {}]
  %s10 = sld [smem:[#allocation0]]
  $region46: #{tpu_custom_call.1} parent=0
    _
  %s12 = ssub.s32 1, %s10
  %s13 = scalar_select 0, %s12, %s10
  $region1: #{tpu_custom_call.1} parent=0
    #allocation2 [shape = 'u8[8192]{0}', space=vmem, size = 0x2000, scoped, tag = 'output window, operand 0, single buffered']
    #allocation3 [shape = 's32[1]{0}', space=sflag, size = 0x4, scoped, tag = 'scoped memory for tpu_custom_call.1']
    %14 = vsyncpa [#allocation3], 0
    // Predicated region
    $region2: #{tpu_custom_call.1} parent=1 // pred_check
      _
    $region3: #{tpu_custom_call.1} parent=1 // pred_check_branch
      %16 = sbr.rel (0) target = $region5
    $region4: #{tpu_custom_call.1} parent=1 // pred_region
      _
    $region5: #{tpu_custom_call.1} parent=1 // pred_fallthru
      _
    // Predicated region
    $region6: #{tpu_custom_call.1} parent=1 // pred_check
      _
    $region7: #{tpu_custom_call.1} parent=1 // pred_check_branch
      %18 = sbr.rel (0) target = $region9
    $region8: #{tpu_custom_call.1} parent=1 // pred_region
      _
    $region9: #{tpu_custom_call.1} parent=1 // pred_fallthru
      _
    // Predicated region
    $region10: #{tpu_custom_call.1} parent=1 // pred_check
      _
    $region11: #{tpu_custom_call.1} parent=1 // pred_check_branch
      %20 = sbr.rel (0) target = $region13
    $region12: #{tpu_custom_call.1} parent=1 // pred_region
      _
    $region13: #{tpu_custom_call.1} parent=1 // pred_fallthru
      _
    // Predicated region
    $region14: #{tpu_custom_call.1} parent=1 // pred_check
      _
    $region15: #{tpu_custom_call.1} parent=1 // pred_check_branch
      %22 = sbr.rel (0) target = $region17
    $region16: #{tpu_custom_call.1} parent=1 // pred_region
      _
    $region17: #{tpu_custom_call.1} parent=1 // pred_fallthru
      _
    // Predicated region
    $region18: #{tpu_custom_call.1} parent=1 // pred_check
      _
    $region19: #{tpu_custom_call.1} parent=1 // pred_check_branch
      %24 = sbr.rel (0) target = $region21
    $region20: #{tpu_custom_call.1} parent=1 // pred_region
      _
    $region21: #{tpu_custom_call.1} parent=1 // pred_fallthru
      _
    // Predicated region
    $region22: #{tpu_custom_call.1} parent=1 // pred_check
      _
    $region23: #{tpu_custom_call.1} parent=1 // pred_check_branch
      %26 = sbr.rel (0) target = $region25
    $region24: #{tpu_custom_call.1} parent=1 // pred_region
      _
    $region25: #{tpu_custom_call.1} parent=1 // pred_fallthru
      _
    // Predicated region
    $region26: #{tpu_custom_call.1} parent=1 // pred_check
      _
    $region27: #{tpu_custom_call.1} parent=1 // pred_check_branch
      %28 = sbr.rel (0) target = $region29
    $region28: #{tpu_custom_call.1} parent=1 // pred_region
      _
    $region29: #{tpu_custom_call.1} parent=1 // pred_fallthru
      _
    // Predicated region
    $region30: #{tpu_custom_call.1} parent=1 // pred_check
      _
    $region31: #{tpu_custom_call.1} parent=1 // pred_check_branch
      %30 = sbr.rel (0) target = $region33
    $region32: #{tpu_custom_call.1} parent=1 // pred_region
      _
    $region33: #{tpu_custom_call.1} parent=1 // pred_fallthru
      _
    // Predicated region
    $region34: #{tpu_custom_call.1} parent=1 // pred_check
      _
    $region35: #{tpu_custom_call.1} parent=1 // pred_check_branch
      %32 = sbr.rel (0) target = $region37
    $region36: #{tpu_custom_call.1} parent=1 // pred_region
      _
    $region37: #{tpu_custom_call.1} parent=1 // pred_fallthru
      _
    %v33 = vld [vmem:[%s0] sm:$0xff]
    %v34 = vld [vmem:[%s0 + $0x8] sm:$0xff]
    %v35 = vld [vmem:[%s1] sm:$0x1]
    %37 = vset.pattern.permute.xlu0 0
    %38 = vperm.xlu0 %37, %v33
    %v39 = vpop.permute.xlu0 %38
    %42 = vset.pattern.permute.xlu0 0
    %43 = vperm.xlu0 %42, %v34
    %v44 = vpop.permute.xlu0 %43
    %v47 = vlaneseq
    %v48 = vshrl.u32 %v47, 7
    %v49 = vsub.s32 0, %v48
    %v50 = vrot.slane %v35, %v49
    %v52 = vmul.f32 %v39, %v50
    %v53 = vmul.f32 %v44, %v50
    %v54 = vand.u32 2147483647, %v52
    %vm55 = vcmp.le.f32.partialorder %v54, 0.7853982
    %vm56 = vcmp.lt.s32.totalorder %v52, 0
    %v57 = vand.u32 %v52, 2139095040
    %v58 = vshrl.u32 %v57, 23
    %v59 = vsub.s32 %v58, 127
    %v60 = vand.u32 2147483647, %v52
    %v61 = vand.u32 %v60, 8388607
    %v62 = vor.u32 %v61, 8388608
    %v63 = vsub.s32 0, %v62
    %v64 = vadd.s32 %v59, 1
    %vm65 = vcmp.gt.s32.totalorder %v64, 0
    %v66 = vsel %vm65, %v64, 0
    %v67 = vshrl.u32 %v66, 5
    %v68 = vand.u32 %v66, 31
    %v69 = vsub.s32 32, %v68
    %v70 = vshrl.u32 683565275, %v69
    %v71 = vshll.u32 683565275, %v68
    %v72 = vshrl.u32 2475754826, %v69
    %v73 = vor.u32 %v71, %v72
    %v74 = vshll.u32 2475754826, %v68
    %v75 = vshrl.u32 2131351028, %v69
    %v76 = vor.u32 %v74, %v75
    %v77 = vshll.u32 2131351028, %v68
    %v78 = vshrl.u32 2102212464, %v69
    %v79 = vor.u32 %v77, %v78
    %v80 = vshll.u32 2102212464, %v68
    %v81 = vshrl.u32 920167782, %v69
    %v82 = vor.u32 %v80, %v81
    %v83 = vshll.u32 920167782, %v68
    %v84 = vshrl.u32 1326507024, %v69
    %v85 = vor.u32 %v83, %v84
    %vm86 = vcmp.lt.s32.totalorder %v67, 1
    %vm87 = vcmp.lt.s32.totalorder %v67, 2
    %vm88 = vcmp.lt.s32.totalorder %v67, 3
    %vm89 = vcmp.lt.s32.totalorder %v67, 4
    %v90 = vsel %vm86, %v70, %v73
    %v91 = vsel %vm89, %v79, 2102212464
    %v92 = vsel %vm88, %v76, %v91
    %v93 = vsel %vm87, %v90, %v92
    %v94 = vsel %vm86, %v73, %v76
    %v95 = vsel %vm89, %v82, 920167782
    %v96 = vsel %vm88, %v79, %v95
    %v97 = vsel %vm87, %v94, %v96
    %v98 = vsel %vm86, %v76, %v79
    %v99 = vsel %vm89, %v85, 1326507024
    %v100 = vsel %vm88, %v82, %v99
    %v101 = vsel %vm87, %v98, %v100
    %v102 = vshll.u32 %v62, 8
    %v103 = vmul.u32.u64.compose %v102, %v101
    %v104 = vextract.low.u32 %v103
    %v105 = vextract.high.u32 %v103
    %v106 = vmul.u32.u64.compose %v102, %v97
    %v107 = vextract.low.u32 %v106
    %v108 = vextract.high.u32 %v106
    %v109 = vmul.u32 %v102, %v93
    %v110 = vadd.s32 %v105, %v107
    %vm111 = vc.u32 %v105, %v107
    %v112 = vadd.s32 %v108, 1
    %v113 = vsel %vm111, %v112, %v108
    %v114 = vadd.s32 %v109, %v113
    %v115 = vadd.s32 %v114, 536870912
    %v116 = vshrl.u32 %v115, 30
    %v117 = vshll.u32 %v116, 30
    %v118 = vsub.s32 %v114, %v117
    %vm119 = vcmp.lt.s32.totalorder %v118, 0
    %v120 = vsub.s32 0, %v118
    %v121 = vsel %vm119, %v120, %v118
    %v122 = vclz %v121
    %v123 = vsub.s32 %v122, 2
    %vm124 = vcmp.gt.s32.totalorder 0, %v123
    %v125 = vsel %vm124, 0, %v123
    %v126 = vsub.s32 32, %v125
    %v127 = vshll.u32 %v118, %v125
    %v128 = vshrl.u32 %v110, %v126
    %v129 = vor.u32 %v127, %v128
    %v130 = vsub.s32 4294967266, %v125
    %v131 = vadd.s32 %v130, 127
    %v132 = vshll.u32 %v131, 23
    %v133 = vor.u32 4788187, %v132
    %v134 = vand.u32 2147483647, %v133
    %v136 = vcvt.s32.f32 %v129
    %v137 = vmul.f32 %v136, %v134
    %v138 = vxor.u32 %v137, 2147483648
    %v139 = vsel %vm56, %v138, %v137
    %v140 = vsub.s32 4, %v116
    %v141 = vsel %vm56, %v140, %v116
    %v142 = vsel %vm55, %v52, %v139
    %v143 = vsel %vm55, 0, %v141
    %v144 = vcosq.f32.pop %v142
    %v145 = vsinq.f32.pop %v142
    %vm146 = vweird.f32 %v52
    %v147 = vadd.s32 %v143, 3
    %v148 = vand.u32 %v147, 3
    %vm149 = vcmp.lt.s32.totalorder %v148, 2
    %vm150 = vcmp.eq.s32.totalorder %v148, 0
    %v151 = vxor.u32 %v145, 2147483648
    %v152 = vsel %vm150, %v144, %v151
    %vm153 = vcmp.eq.s32.totalorder %v148, 2
    %v154 = vxor.u32 %v144, 2147483648
    %v155 = vsel %vm153, %v154, %v145
    %v156 = vsel %vm149, %v152, %v155
    %v157 = vsel %vm146, nan, %v156
    %v158 = vand.u32 2147483647, %v53
    %vm159 = vcmp.le.f32.partialorder %v158, 0.7853982
    %vm160 = vcmp.lt.s32.totalorder %v53, 0
    %v161 = vand.u32 %v53, 2139095040
    %v162 = vshrl.u32 %v161, 23
    %v163 = vsub.s32 %v162, 127
    %v164 = vand.u32 2147483647, %v53
    %v165 = vand.u32 %v164, 8388607
    %v166 = vor.u32 %v165, 8388608
    %v167 = vsub.s32 0, %v166
    %v168 = vadd.s32 %v163, 1
    %vm169 = vcmp.gt.s32.totalorder %v168, 0
    %v170 = vsel %vm169, %v168, 0
    %v171 = vshrl.u32 %v170, 5
    %v172 = vand.u32 %v170, 31
    %v173 = vsub.s32 32, %v172
    %v174 = vshrl.u32 683565275, %v173
    %v175 = vshll.u32 683565275, %v172
    %v176 = vshrl.u32 2475754826, %v173
    %v177 = vor.u32 %v175, %v176
    %v178 = vshll.u32 2475754826, %v172
    %v179 = vshrl.u32 2131351028, %v173
    %v180 = vor.u32 %v178, %v179
    %v181 = vshll.u32 2131351028, %v172
    %v182 = vshrl.u32 2102212464, %v173
    %v183 = vor.u32 %v181, %v182
    %v184 = vshll.u32 2102212464, %v172
    %v185 = vshrl.u32 920167782, %v173
    %v186 = vor.u32 %v184, %v185
    %v187 = vshll.u32 920167782, %v172
    %v188 = vshrl.u32 1326507024, %v173
    %v189 = vor.u32 %v187, %v188
    %vm190 = vcmp.lt.s32.totalorder %v171, 1
    %vm191 = vcmp.lt.s32.totalorder %v171, 2
    %vm192 = vcmp.lt.s32.totalorder %v171, 3
    %vm193 = vcmp.lt.s32.totalorder %v171, 4
    %v194 = vsel %vm190, %v174, %v177
    %v195 = vsel %vm193, %v183, 2102212464
    %v196 = vsel %vm192, %v180, %v195
    %v197 = vsel %vm191, %v194, %v196
    %v198 = vsel %vm190, %v177, %v180
    %v199 = vsel %vm193, %v186, 920167782
    %v200 = vsel %vm192, %v183, %v199
    %v201 = vsel %vm191, %v198, %v200
    %v202 = vsel %vm190, %v180, %v183
    %v203 = vsel %vm193, %v189, 1326507024
    %v204 = vsel %vm192, %v186, %v203
    %v205 = vsel %vm191, %v202, %v204
    %v206 = vshll.u32 %v166, 8
    %v207 = vmul.u32.u64.compose %v206, %v205
    %v208 = vextract.low.u32 %v207
    %v209 = vextract.high.u32 %v207
    %v210 = vmul.u32.u64.compose %v206, %v201
    %v211 = vextract.low.u32 %v210
    %v212 = vextract.high.u32 %v210
    %v213 = vmul.u32 %v206, %v197
    %v214 = vadd.s32 %v209, %v211
    %vm215 = vc.u32 %v209, %v211
    %v216 = vadd.s32 %v212, 1
    %v217 = vsel %vm215, %v216, %v212
    %v218 = vadd.s32 %v213, %v217
    %v219 = vadd.s32 %v218, 536870912
    %v220 = vshrl.u32 %v219, 30
    %v221 = vshll.u32 %v220, 30
    %v222 = vsub.s32 %v218, %v221
    %vm223 = vcmp.lt.s32.totalorder %v222, 0
    %v224 = vsub.s32 0, %v222
    %v225 = vsel %vm223, %v224, %v222
    %v226 = vclz %v225
    %v227 = vsub.s32 %v226, 2
    %vm228 = vcmp.gt.s32.totalorder 0, %v227
    %v229 = vsel %vm228, 0, %v227
    %v230 = vsub.s32 32, %v229
    %v231 = vshll.u32 %v222, %v229
    %v232 = vshrl.u32 %v214, %v230
    %v233 = vor.u32 %v231, %v232
    %v234 = vsub.s32 4294967266, %v229
    %v235 = vadd.s32 %v234, 127
    %v236 = vshll.u32 %v235, 23
    %v237 = vor.u32 4788187, %v236
    %v238 = vand.u32 2147483647, %v237
    %v240 = vcvt.s32.f32 %v233
    %v241 = vmul.f32 %v240, %v238
    %v242 = vxor.u32 %v241, 2147483648
    %v243 = vsel %vm160, %v242, %v241
    %v244 = vsub.s32 4, %v220
    %v245 = vsel %vm160, %v244, %v220
    %v246 = vsel %vm159, %v53, %v243
    %v247 = vsel %vm159, 0, %v245
    %v248 = vcosq.f32.pop %v246
    %v249 = vsinq.f32.pop %v246
    %vm250 = vweird.f32 %v53
    %v251 = vadd.s32 %v247, 3
    %v252 = vand.u32 %v251, 3
    %vm253 = vcmp.lt.s32.totalorder %v252, 2
    %vm254 = vcmp.eq.s32.totalorder %v252, 0
    %v255 = vxor.u32 %v249, 2147483648
    %v256 = vsel %vm254, %v248, %v255
    %vm257 = vcmp.eq.s32.totalorder %v252, 2
    %v258 = vxor.u32 %v248, 2147483648
    %v259 = vsel %vm257, %v258, %v249
    %v260 = vsel %vm253, %v256, %v259
    %v261 = vsel %vm250, nan, %v260
    %v262 = vld [vmem:[%s2] sm:$0xff]
    %v263 = vld [vmem:[%s2 + $0x8] sm:$0xff]
    %v264 = vld [vmem:[%s2 + $0x10] sm:$0xff]
    %v265 = vld [vmem:[%s2 + $0x18] sm:$0xff]
    %v266 = vld [vmem:[%s2 + $0x20] sm:$0xff]
    %v267 = vld [vmem:[%s2 + $0x28] sm:$0xff]
    %v268 = vld [vmem:[%s2 + $0x30] sm:$0xff]
    %v269 = vld [vmem:[%s2 + $0x38] sm:$0xff]
    %v270 = vld [vmem:[%s2 + $0x40] sm:$0xff]
    %v271 = vld [vmem:[%s2 + $0x48] sm:$0xff]
    %v272 = vld [vmem:[%s2 + $0x50] sm:$0xff]
    %v273 = vld [vmem:[%s2 + $0x58] sm:$0xff]
    %v274 = vld [vmem:[%s2 + $0x60] sm:$0xff]
    %v275 = vld [vmem:[%s2 + $0x68] sm:$0xff]
    %v276 = vld [vmem:[%s2 + $0x70] sm:$0xff]
    %v277 = vld [vmem:[%s2 + $0x78] sm:$0xff]
    %v278 = vand.u32 2147483647, %v52
    %vm279 = vcmp.le.f32.partialorder %v278, 0.7853982
    %vm280 = vcmp.lt.s32.totalorder %v52, 0
    %v281 = vand.u32 %v52, 2139095040
    %v282 = vshrl.u32 %v281, 23
    %v283 = vsub.s32 %v282, 127
    %v284 = vand.u32 2147483647, %v52
    %v285 = vand.u32 %v284, 8388607
    %v286 = vor.u32 %v285, 8388608
    %v287 = vsub.s32 0, %v286
    %v288 = vadd.s32 %v283, 1
    %vm289 = vcmp.gt.s32.totalorder %v288, 0
    %v290 = vsel %vm289, %v288, 0
    %v291 = vshrl.u32 %v290, 5
    %v292 = vand.u32 %v290, 31
    %v293 = vsub.s32 32, %v292
    %v294 = vshrl.u32 683565275, %v293
    %v295 = vshll.u32 683565275, %v292
    %v296 = vshrl.u32 2475754826, %v293
    %v297 = vor.u32 %v295, %v296
    %v298 = vshll.u32 2475754826, %v292
    %v299 = vshrl.u32 2131351028, %v293
    %v300 = vor.u32 %v298, %v299
    %v301 = vshll.u32 2131351028, %v292
    %v302 = vshrl.u32 2102212464, %v293
    %v303 = vor.u32 %v301, %v302
    %v304 = vshll.u32 2102212464, %v292
    %v305 = vshrl.u32 920167782, %v293
    %v306 = vor.u32 %v304, %v305
    %v307 = vshll.u32 920167782, %v292
    %v308 = vshrl.u32 1326507024, %v293
    %v309 = vor.u32 %v307, %v308
    %vm310 = vcmp.lt.s32.totalorder %v291, 1
    %vm311 = vcmp.lt.s32.totalorder %v291, 2
    %vm312 = vcmp.lt.s32.totalorder %v291, 3
    %vm313 = vcmp.lt.s32.totalorder %v291, 4
    %v314 = vsel %vm310, %v294, %v297
    %v315 = vsel %vm313, %v303, 2102212464
    %v316 = vsel %vm312, %v300, %v315
    %v317 = vsel %vm311, %v314, %v316
    %v318 = vsel %vm310, %v297, %v300
    %v319 = vsel %vm313, %v306, 920167782
    %v320 = vsel %vm312, %v303, %v319
    %v321 = vsel %vm311, %v318, %v320
    %v322 = vsel %vm310, %v300, %v303
    %v323 = vsel %vm313, %v309, 1326507024
    %v324 = vsel %vm312, %v306, %v323
    %v325 = vsel %vm311, %v322, %v324
    %v326 = vshll.u32 %v286, 8
    %v327 = vmul.u32.u64.compose %v326, %v325
    %v328 = vextract.low.u32 %v327
    %v329 = vextract.high.u32 %v327
    %v330 = vmul.u32.u64.compose %v326, %v321
    %v331 = vextract.low.u32 %v330
    %v332 = vextract.high.u32 %v330
    %v333 = vmul.u32 %v326, %v317
    %v334 = vadd.s32 %v329, %v331
    %vm335 = vc.u32 %v329, %v331
    %v336 = vadd.s32 %v332, 1
    %v337 = vsel %vm335, %v336, %v332
    %v338 = vadd.s32 %v333, %v337
    %v339 = vadd.s32 %v338, 536870912
    %v340 = vshrl.u32 %v339, 30
    %v341 = vshll.u32 %v340, 30
    %v342 = vsub.s32 %v338, %v341
    %vm343 = vcmp.lt.s32.totalorder %v342, 0
    %v344 = vsub.s32 0, %v342
    %v345 = vsel %vm343, %v344, %v342
    %v346 = vclz %v345
    %v347 = vsub.s32 %v346, 2
    %vm348 = vcmp.gt.s32.totalorder 0, %v347
    %v349 = vsel %vm348, 0, %v347
    %v350 = vsub.s32 32, %v349
    %v351 = vshll.u32 %v342, %v349
    %v352 = vshrl.u32 %v334, %v350
    %v353 = vor.u32 %v351, %v352
    %v354 = vsub.s32 4294967266, %v349
    %v355 = vadd.s32 %v354, 127
    %v356 = vshll.u32 %v355, 23
    %v357 = vor.u32 4788187, %v356
    %v358 = vand.u32 2147483647, %v357
    %v360 = vcvt.s32.f32 %v353
    %v361 = vmul.f32 %v360, %v358
    %v362 = vxor.u32 %v361, 2147483648
    %v363 = vsel %vm280, %v362, %v361
    %v364 = vsub.s32 4, %v340
    %v365 = vsel %vm280, %v364, %v340
    %v366 = vsel %vm279, %v52, %v363
    %v367 = vsel %vm279, 0, %v365
    %v368 = vcosq.f32.pop %v366
    %v369 = vsinq.f32.pop %v366
    %vm370 = vweird.f32 %v52
    %v371 = vand.u32 %v367, 3
    %vm372 = vcmp.lt.s32.totalorder %v371, 2
    %vm373 = vcmp.eq.s32.totalorder %v371, 0
    %v374 = vxor.u32 %v369, 2147483648
    %v375 = vsel %vm373, %v368, %v374
    %vm376 = vcmp.eq.s32.totalorder %v371, 2
    %v377 = vxor.u32 %v368, 2147483648
    %v378 = vsel %vm376, %v377, %v369
    %v379 = vsel %vm372, %v375, %v378
    %v380 = vsel %vm370, nan, %v379
    %v381 = vand.u32 2147483647, %v53
    %vm382 = vcmp.le.f32.partialorder %v381, 0.7853982
    %vm383 = vcmp.lt.s32.totalorder %v53, 0
    %v384 = vand.u32 %v53, 2139095040
    %v385 = vshrl.u32 %v384, 23
    %v386 = vsub.s32 %v385, 127
    %v387 = vand.u32 2147483647, %v53
    %v388 = vand.u32 %v387, 8388607
    %v389 = vor.u32 %v388, 8388608
    %v390 = vsub.s32 0, %v389
    %v391 = vadd.s32 %v386, 1
    %vm392 = vcmp.gt.s32.totalorder %v391, 0
    %v393 = vsel %vm392, %v391, 0
    %v394 = vshrl.u32 %v393, 5
    %v395 = vand.u32 %v393, 31
    %v396 = vsub.s32 32, %v395
    %v397 = vshrl.u32 683565275, %v396
    %v398 = vshll.u32 683565275, %v395
    %v399 = vshrl.u32 2475754826, %v396
    %v400 = vor.u32 %v398, %v399
    %v401 = vshll.u32 2475754826, %v395
    %v402 = vshrl.u32 2131351028, %v396
    %v403 = vor.u32 %v401, %v402
    %v404 = vshll.u32 2131351028, %v395
    %v405 = vshrl.u32 2102212464, %v396
    %v406 = vor.u32 %v404, %v405
    %v407 = vshll.u32 2102212464, %v395
    %v408 = vshrl.u32 920167782, %v396
    %v409 = vor.u32 %v407, %v408
    %v410 = vshll.u32 920167782, %v395
    %v411 = vshrl.u32 1326507024, %v396
    %v412 = vor.u32 %v410, %v411
    %vm413 = vcmp.lt.s32.totalorder %v394, 1
    %vm414 = vcmp.lt.s32.totalorder %v394, 2
    %vm415 = vcmp.lt.s32.totalorder %v394, 3
    %vm416 = vcmp.lt.s32.totalorder %v394, 4
    %v417 = vsel %vm413, %v397, %v400
    %v418 = vsel %vm416, %v406, 2102212464
    %v419 = vsel %vm415, %v403, %v418
    %v420 = vsel %vm414, %v417, %v419
    %v421 = vsel %vm413, %v400, %v403
    %v422 = vsel %vm416, %v409, 920167782
    %v423 = vsel %vm415, %v406, %v422
    %v424 = vsel %vm414, %v421, %v423
    %v425 = vsel %vm413, %v403, %v406
    %v426 = vsel %vm416, %v412, 1326507024
    %v427 = vsel %vm415, %v409, %v426
    %v428 = vsel %vm414, %v425, %v427
    %v429 = vshll.u32 %v389, 8
    %v430 = vmul.u32.u64.compose %v429, %v428
    %v431 = vextract.low.u32 %v430
    %v432 = vextract.high.u32 %v430
    %v433 = vmul.u32.u64.compose %v429, %v424
    %v434 = vextract.low.u32 %v433
    %v435 = vextract.high.u32 %v433
    %v436 = vmul.u32 %v429, %v420
    %v437 = vadd.s32 %v432, %v434
    %vm438 = vc.u32 %v432, %v434
    %v439 = vadd.s32 %v435, 1
    %v440 = vsel %vm438, %v439, %v435
    %v441 = vadd.s32 %v436, %v440
    %v442 = vadd.s32 %v441, 536870912
    %v443 = vshrl.u32 %v442, 30
    %v444 = vshll.u32 %v443, 30
    %v445 = vsub.s32 %v441, %v444
    %vm446 = vcmp.lt.s32.totalorder %v445, 0
    %v447 = vsub.s32 0, %v445
    %v448 = vsel %vm446, %v447, %v445
    %v449 = vclz %v448
    %v450 = vsub.s32 %v449, 2
    %vm451 = vcmp.gt.s32.totalorder 0, %v450
    %v452 = vsel %vm451, 0, %v450
    %v453 = vsub.s32 32, %v452
    %v454 = vshll.u32 %v445, %v452
    %v455 = vshrl.u32 %v437, %v453
    %v456 = vor.u32 %v454, %v455
    %v457 = vsub.s32 4294967266, %v452
    %v458 = vadd.s32 %v457, 127
    %v459 = vshll.u32 %v458, 23
    %v460 = vor.u32 4788187, %v459
    %v461 = vand.u32 2147483647, %v460
    %v463 = vcvt.s32.f32 %v456
    %v464 = vmul.f32 %v463, %v461
    %v465 = vxor.u32 %v464, 2147483648
    %v466 = vsel %vm383, %v465, %v464
    %v467 = vsub.s32 4, %v443
    %v468 = vsel %vm383, %v467, %v443
    %v469 = vsel %vm382, %v53, %v466
    %v470 = vsel %vm382, 0, %v468
    %v471 = vcosq.f32.pop %v469
    %v472 = vsinq.f32.pop %v469
    %vm473 = vweird.f32 %v53
    %v474 = vand.u32 %v470, 3
    %vm475 = vcmp.lt.s32.totalorder %v474, 2
    %vm476 = vcmp.eq.s32.totalorder %v474, 0
    %v477 = vxor.u32 %v472, 2147483648
    %v478 = vsel %vm476, %v471, %v477
    %vm479 = vcmp.eq.s32.totalorder %v474, 2
    %v480 = vxor.u32 %v471, 2147483648
    %v481 = vsel %vm479, %v480, %v472
    %v482 = vsel %vm475, %v478, %v481
    %v483 = vsel %vm473, nan, %v482
    %v484 = vld [vmem:[%s3] sm:$0xff]
    %v485 = vld [vmem:[%s3 + $0x8] sm:$0xff]
    %v486 = vld [vmem:[%s3 + $0x10] sm:$0xff]
    %v487 = vld [vmem:[%s3 + $0x18] sm:$0xff]
    %v488 = vld [vmem:[%s3 + $0x20] sm:$0xff]
    %v489 = vld [vmem:[%s3 + $0x28] sm:$0xff]
    %v490 = vld [vmem:[%s3 + $0x30] sm:$0xff]
    %v491 = vld [vmem:[%s3 + $0x38] sm:$0xff]
    %v492 = vld [vmem:[%s3 + $0x40] sm:$0xff]
    %v493 = vld [vmem:[%s3 + $0x48] sm:$0xff]
    %v494 = vld [vmem:[%s3 + $0x50] sm:$0xff]
    %v495 = vld [vmem:[%s3 + $0x58] sm:$0xff]
    %v496 = vld [vmem:[%s3 + $0x60] sm:$0xff]
    %v497 = vld [vmem:[%s3 + $0x68] sm:$0xff]
    %v498 = vld [vmem:[%s3 + $0x70] sm:$0xff]
    %v499 = vld [vmem:[%s3 + $0x78] sm:$0xff]
    %500 = vmatprep.subr.mxu0 0.0
    %v501 = vand.u32 %v484, 4294901760
    %502 = vmatpush1.msra.mxu0 %v501
    %503 = vmatprep.subr.mxu0 0.0
    %v504 = vand.u32 %v485, 4294901760
    %505 = vmatpush1.msra.mxu0 %v504
    %506 = vmatprep.subr.mxu0 0.0
    %v507 = vand.u32 %v486, 4294901760
    %508 = vmatpush1.msra.mxu0 %v507
    %509 = vmatprep.subr.mxu0 0.0
    %v510 = vand.u32 %v487, 4294901760
    %511 = vmatpush1.msra.mxu0 %v510
    %512 = vmatprep.subr.mxu0 0.0
    %v513 = vand.u32 %v488, 4294901760
    %514 = vmatpush1.msra.mxu0 %v513
    %515 = vmatprep.subr.mxu0 0.0
    %v516 = vand.u32 %v489, 4294901760
    %517 = vmatpush1.msra.mxu0 %v516
    %518 = vmatprep.subr.mxu0 0.0
    %v519 = vand.u32 %v490, 4294901760
    %520 = vmatpush1.msra.mxu0 %v519
    %521 = vmatprep.subr.mxu0 0.0
    %v522 = vand.u32 %v491, 4294901760
    %523 = vmatpush1.msra.mxu0 %v522
    %524 = vmatprep.subr.mxu0 0.0
    %v525 = vand.u32 %v492, 4294901760
    %526 = vmatpush1.msra.mxu0 %v525
    %527 = vmatprep.subr.mxu0 0.0
    %v528 = vand.u32 %v493, 4294901760
    %529 = vmatpush1.msra.mxu0 %v528
    %530 = vmatprep.subr.mxu0 0.0
    %v531 = vand.u32 %v494, 4294901760
    %532 = vmatpush1.msra.mxu0 %v531
    %533 = vmatprep.subr.mxu0 0.0
    %v534 = vand.u32 %v495, 4294901760
    %535 = vmatpush1.msra.mxu0 %v534
    %536 = vmatprep.subr.mxu0 0.0
    %v537 = vand.u32 %v496, 4294901760
    %538 = vmatpush1.msra.mxu0 %v537
    %539 = vmatprep.subr.mxu0 0.0
    %v540 = vand.u32 %v497, 4294901760
    %541 = vmatpush1.msra.mxu0 %v540
    %542 = vmatprep.subr.mxu0 0.0
    %v543 = vand.u32 %v498, 4294901760
    %544 = vmatpush1.msra.mxu0 %v543
    %545 = vmatprep.subr.mxu0 0.0
    %v546 = vand.u32 %v499, 4294901760
    %547 = vmatpush1.msra.mxu0 %v546
    %548 = vmatprep.subr.mxu0 0.0
    %549 = vmatpush1.msra.mxu0 0.0
    %550 = vmatprep.subr.mxu0 0.0
    %551 = vmatpush1.msra.mxu0 0.0
    %552 = vmatprep.subr.mxu0 0.0
    %553 = vmatpush1.msra.mxu0 0.0
    %554 = vmatprep.subr.mxu0 0.0
    %555 = vmatpush1.msra.mxu0 0.0
    %556 = vmatprep.subr.mxu0 0.0
    %557 = vmatpush1.msra.mxu0 0.0
    %558 = vmatprep.subr.mxu0 0.0
    %559 = vmatpush1.msra.mxu0 0.0
    %560 = vmatprep.subr.mxu0 0.0
    %561 = vmatpush1.msra.mxu0 0.0
    %562 = vmatprep.subr.mxu0 0.0
    %563 = vmatpush1.msra.mxu0 0.0
    %564 = vmatprep.subr.mxu0 0.0
    %565 = vmatpush1.msra.mxu0 0.0
    %566 = vmatprep.subr.mxu0 0.0
    %567 = vmatpush1.msra.mxu0 0.0
    %568 = vmatprep.subr.mxu0 0.0
    %569 = vmatpush1.msra.mxu0 0.0
    %570 = vmatprep.subr.mxu0 0.0
    %571 = vmatpush1.msra.mxu0 0.0
    %572 = vmatprep.subr.mxu0 0.0
    %573 = vmatpush1.msra.mxu0 0.0
    %574 = vmatprep.subr.mxu0 0.0
    %575 = vmatpush1.msra.mxu0 0.0
    %576 = vmatprep.subr.mxu0 0.0
    %577 = vmatpush1.msra.mxu0 0.0
    %578 = vmatprep.subr.mxu0 0.0
    %579 = vmatpush1.msra.mxu0 0.0
    %580 = vmatprep.mubr.f32.mxu0 0.0
    %v581 = vand.u32 %v380, 4294901760
    %v582 = vsub.f32 %v380, %v581
    %v583 = vand.u32 %v582, 4294901760
    %v584 = vsub.f32 %v582, %v583
    %v585 = vand.u32 %v584, 4294901760
    %586 = vmatmul.mubr.f32.gmra.mrb[0].mxu0 %v585
    %v587 = vpop.f32.mrb[0].mxu0
    %v588 = vadd.f32 0.0, %v587
    %v589 = vpop.f32.mrb[0].mxu0
    %590 = vmatprep.mubr.f32.mxu0 0.0
    %v591 = vand.u32 %v483, 4294901760
    %v592 = vsub.f32 %v483, %v591
    %v593 = vand.u32 %v592, 4294901760
    %v594 = vsub.f32 %v592, %v593
    %v595 = vand.u32 %v594, 4294901760
    %596 = vmatmul.mubr.f32.gmra.mrb[0].mxu0 %v595
    %v597 = vpop.f32.mrb[0].mxu0
    %v598 = vadd.f32 0.0, %v597
    %v599 = vpop.f32.mrb[0].mxu0
    %600 = vdwg.mxu0
    %601 = vmatprep.subr.mxu0 0.0
    %v602 = vand.u32 %v484, 4294901760
    %v603 = vsub.f32 %v484, %v602
    %v604 = vand.u32 %v603, 4294901760
    %v605 = vsub.f32 %v603, %v604
    %v606 = vand.u32 %v605, 4294901760
    %607 = vmatpush1.msra.mxu0 %v606
    %608 = vmatprep.subr.mxu0 0.0
    %v609 = vand.u32 %v485, 4294901760
    %v610 = vsub.f32 %v485, %v609
    %v611 = vand.u32 %v610, 4294901760
    %v612 = vsub.f32 %v610, %v611
    %v613 = vand.u32 %v612, 4294901760
    %614 = vmatpush1.msra.mxu0 %v613
    %615 = vmatprep.subr.mxu0 0.0
    %v616 = vand.u32 %v486, 4294901760
    %v617 = vsub.f32 %v486, %v616
    %v618 = vand.u32 %v617, 4294901760
    %v619 = vsub.f32 %v617, %v618
    %v620 = vand.u32 %v619, 4294901760
    %621 = vmatpush1.msra.mxu0 %v620
    %622 = vmatprep.subr.mxu0 0.0
    %v623 = vand.u32 %v487, 4294901760
    %v624 = vsub.f32 %v487, %v623
    %v625 = vand.u32 %v624, 4294901760
    %v626 = vsub.f32 %v624, %v625
    %v627 = vand.u32 %v626, 4294901760
    %628 = vmatpush1.msra.mxu0 %v627
    %629 = vmatprep.subr.mxu0 0.0
    %v630 = vand.u32 %v488, 4294901760
    %v631 = vsub.f32 %v488, %v630
    %v632 = vand.u32 %v631, 4294901760
    %v633 = vsub.f32 %v631, %v632
    %v634 = vand.u32 %v633, 4294901760
    %635 = vmatpush1.msra.mxu0 %v634
    %636 = vmatprep.subr.mxu0 0.0
    %v637 = vand.u32 %v489, 4294901760
    %v638 = vsub.f32 %v489, %v637
    %v639 = vand.u32 %v638, 4294901760
    %v640 = vsub.f32 %v638, %v639
    %v641 = vand.u32 %v640, 4294901760
    %642 = vmatpush1.msra.mxu0 %v641
    %643 = vmatprep.subr.mxu0 0.0
    %v644 = vand.u32 %v490, 4294901760
    %v645 = vsub.f32 %v490, %v644
    %v646 = vand.u32 %v645, 4294901760
    %v647 = vsub.f32 %v645, %v646
    %v648 = vand.u32 %v647, 4294901760
    %649 = vmatpush1.msra.mxu0 %v648
    %650 = vmatprep.subr.mxu0 0.0
    %v651 = vand.u32 %v491, 4294901760
    %v652 = vsub.f32 %v491, %v651
    %v653 = vand.u32 %v652, 4294901760
    %v654 = vsub.f32 %v652, %v653
    %v655 = vand.u32 %v654, 4294901760
    %656 = vmatpush1.msra.mxu0 %v655
    %657 = vmatprep.subr.mxu0 0.0
    %v658 = vand.u32 %v492, 4294901760
    %v659 = vsub.f32 %v492, %v658
    %v660 = vand.u32 %v659, 4294901760
    %v661 = vsub.f32 %v659, %v660
    %v662 = vand.u32 %v661, 4294901760
    %663 = vmatpush1.msra.mxu0 %v662
    %664 = vmatprep.subr.mxu0 0.0
    %v665 = vand.u32 %v493, 4294901760
    %v666 = vsub.f32 %v493, %v665
    %v667 = vand.u32 %v666, 4294901760
    %v668 = vsub.f32 %v666, %v667
    %v669 = vand.u32 %v668, 4294901760
    %670 = vmatpush1.msra.mxu0 %v669
    %671 = vmatprep.subr.mxu0 0.0
    %v672 = vand.u32 %v494, 4294901760
    %v673 = vsub.f32 %v494, %v672
    %v674 = vand.u32 %v673, 4294901760
    %v675 = vsub.f32 %v673, %v674
    %v676 = vand.u32 %v675, 4294901760
    %677 = vmatpush1.msra.mxu0 %v676
    %678 = vmatprep.subr.mxu0 0.0
    %v679 = vand.u32 %v495, 4294901760
    %v680 = vsub.f32 %v495, %v679
    %v681 = vand.u32 %v680, 4294901760
    %v682 = vsub.f32 %v680, %v681
    %v683 = vand.u32 %v682, 4294901760
    %684 = vmatpush1.msra.mxu0 %v683
    %685 = vmatprep.subr.mxu0 0.0
    %v686 = vand.u32 %v496, 4294901760
    %v687 = vsub.f32 %v496, %v686
    %v688 = vand.u32 %v687, 4294901760
    %v689 = vsub.f32 %v687, %v688
    %v690 = vand.u32 %v689, 4294901760
    %691 = vmatpush1.msra.mxu0 %v690
    %692 = vmatprep.subr.mxu0 0.0
    %v693 = vand.u32 %v497, 4294901760
    %v694 = vsub.f32 %v497, %v693
    %v695 = vand.u32 %v694, 4294901760
    %v696 = vsub.f32 %v694, %v695
    %v697 = vand.u32 %v696, 4294901760
    %698 = vmatpush1.msra.mxu0 %v697
    %699 = vmatprep.subr.mxu0 0.0
    %v700 = vand.u32 %v498, 4294901760
    %v701 = vsub.f32 %v498, %v700
    %v702 = vand.u32 %v701, 4294901760
    %v703 = vsub.f32 %v701, %v702
    %v704 = vand.u32 %v703, 4294901760
    %705 = vmatpush1.msra.mxu0 %v704
    %706 = vmatprep.subr.mxu0 0.0
    %v707 = vand.u32 %v499, 4294901760
    %v708 = vsub.f32 %v499, %v707
    %v709 = vand.u32 %v708, 4294901760
    %v710 = vsub.f32 %v708, %v709
    %v711 = vand.u32 %v710, 4294901760
    %712 = vmatpush1.msra.mxu0 %v711
    %713 = vmatprep.subr.mxu0 0.0
    %714 = vmatpush1.msra.mxu0 0.0
    %715 = vmatprep.subr.mxu0 0.0
    %716 = vmatpush1.msra.mxu0 0.0
    %717 = vmatprep.subr.mxu0 0.0
    %718 = vmatpush1.msra.mxu0 0.0
    %719 = vmatprep.subr.mxu0 0.0
    %720 = vmatpush1.msra.mxu0 0.0
    %721 = vmatprep.subr.mxu0 0.0
    %722 = vmatpush1.msra.mxu0 0.0
    %723 = vmatprep.subr.mxu0 0.0
    %724 = vmatpush1.msra.mxu0 0.0
    %725 = vmatprep.subr.mxu0 0.0
    %726 = vmatpush1.msra.mxu0 0.0
    %727 = vmatprep.subr.mxu0 0.0
    %728 = vmatpush1.msra.mxu0 0.0
    %729 = vmatprep.subr.mxu0 0.0
    %730 = vmatpush1.msra.mxu0 0.0
    %731 = vmatprep.subr.mxu0 0.0
    %732 = vmatpush1.msra.mxu0 0.0
    %733 = vmatprep.subr.mxu0 0.0
    %734 = vmatpush1.msra.mxu0 0.0
    %735 = vmatprep.subr.mxu0 0.0
    %736 = vmatpush1.msra.mxu0 0.0
    %737 = vmatprep.subr.mxu0 0.0
    %738 = vmatpush1.msra.mxu0 0.0
    %739 = vmatprep.subr.mxu0 0.0
    %740 = vmatpush1.msra.mxu0 0.0
    %741 = vmatprep.subr.mxu0 0.0
    %742 = vmatpush1.msra.mxu0 0.0
    %743 = vmatprep.subr.mxu0 0.0
    %744 = vmatpush1.msra.mxu0 0.0
    %745 = vmatprep.mubr.f32.mxu0 0.0
    %v746 = vand.u32 %v380, 4294901760
    %747 = vmatmul.mubr.f32.gmra.mrb[0].mxu0 %v746
    %v748 = vpop.f32.mrb[0].mxu0
    %v749 = vadd.f32 %v588, %v748
    %v750 = vpop.f32.mrb[0].mxu0
    %751 = vmatprep.mubr.f32.mxu0 0.0
    %v752 = vand.u32 %v483, 4294901760
    %753 = vmatmul.mubr.f32.gmra.mrb[0].mxu0 %v752
    %v754 = vpop.f32.mrb[0].mxu0
    %v755 = vadd.f32 %v598, %v754
    %v756 = vpop.f32.mrb[0].mxu0
    %757 = vdwg.mxu0
    %758 = vmatprep.subr.mxu0 0.0
    %v759 = vand.u32 %v484, 4294901760
    %v760 = vsub.f32 %v484, %v759
    %761 = vmatpush1.msra.mxu0 %v760
    %762 = vmatprep.subr.mxu0 0.0
    %v763 = vand.u32 %v485, 4294901760
    %v764 = vsub.f32 %v485, %v763
    %765 = vmatpush1.msra.mxu0 %v764
    %766 = vmatprep.subr.mxu0 0.0
    %v767 = vand.u32 %v486, 4294901760
    %v768 = vsub.f32 %v486, %v767
    %769 = vmatpush1.msra.mxu0 %v768
    %770 = vmatprep.subr.mxu0 0.0
    %v771 = vand.u32 %v487, 4294901760
    %v772 = vsub.f32 %v487, %v771
    %773 = vmatpush1.msra.mxu0 %v772
    %774 = vmatprep.subr.mxu0 0.0
    %v775 = vand.u32 %v488, 4294901760
    %v776 = vsub.f32 %v488, %v775
    %777 = vmatpush1.msra.mxu0 %v776
    %778 = vmatprep.subr.mxu0 0.0
    %v779 = vand.u32 %v489, 4294901760
    %v780 = vsub.f32 %v489, %v779
    %781 = vmatpush1.msra.mxu0 %v780
    %782 = vmatprep.subr.mxu0 0.0
    %v783 = vand.u32 %v490, 4294901760
    %v784 = vsub.f32 %v490, %v783
    %785 = vmatpush1.msra.mxu0 %v784
    %786 = vmatprep.subr.mxu0 0.0
    %v787 = vand.u32 %v491, 4294901760
    %v788 = vsub.f32 %v491, %v787
    %789 = vmatpush1.msra.mxu0 %v788
    %790 = vmatprep.subr.mxu0 0.0
    %v791 = vand.u32 %v492, 4294901760
    %v792 = vsub.f32 %v492, %v791
    %793 = vmatpush1.msra.mxu0 %v792
    %794 = vmatprep.subr.mxu0 0.0
    %v795 = vand.u32 %v493, 4294901760
    %v796 = vsub.f32 %v493, %v795
    %797 = vmatpush1.msra.mxu0 %v796
    %798 = vmatprep.subr.mxu0 0.0
    %v799 = vand.u32 %v494, 4294901760
    %v800 = vsub.f32 %v494, %v799
    %801 = vmatpush1.msra.mxu0 %v800
    %802 = vmatprep.subr.mxu0 0.0
    %v803 = vand.u32 %v495, 4294901760
    %v804 = vsub.f32 %v495, %v803
    %805 = vmatpush1.msra.mxu0 %v804
    %806 = vmatprep.subr.mxu0 0.0
    %v807 = vand.u32 %v496, 4294901760
    %v808 = vsub.f32 %v496, %v807
    %809 = vmatpush1.msra.mxu0 %v808
    %810 = vmatprep.subr.mxu0 0.0
    %v811 = vand.u32 %v497, 4294901760
    %v812 = vsub.f32 %v497, %v811
    %813 = vmatpush1.msra.mxu0 %v812
    %814 = vmatprep.subr.mxu0 0.0
    %v815 = vand.u32 %v498, 4294901760
    %v816 = vsub.f32 %v498, %v815
    %817 = vmatpush1.msra.mxu0 %v816
    %818 = vmatprep.subr.mxu0 0.0
    %v819 = vand.u32 %v499, 4294901760
    %v820 = vsub.f32 %v499, %v819
    %821 = vmatpush1.msra.mxu0 %v820
    %822 = vmatprep.subr.mxu0 0.0
    %823 = vmatpush1.msra.mxu0 0.0
    %824 = vmatprep.subr.mxu0 0.0
    %825 = vmatpush1.msra.mxu0 0.0
    %826 = vmatprep.subr.mxu0 0.0
    %827 = vmatpush1.msra.mxu0 0.0
    %828 = vmatprep.subr.mxu0 0.0
    %829 = vmatpush1.msra.mxu0 0.0
    %830 = vmatprep.subr.mxu0 0.0
    %831 = vmatpush1.msra.mxu0 0.0
    %832 = vmatprep.subr.mxu0 0.0
    %833 = vmatpush1.msra.mxu0 0.0
    %834 = vmatprep.subr.mxu0 0.0
    %835 = vmatpush1.msra.mxu0 0.0
    %836 = vmatprep.subr.mxu0 0.0
    %837 = vmatpush1.msra.mxu0 0.0
    %838 = vmatprep.subr.mxu0 0.0
    %839 = vmatpush1.msra.mxu0 0.0
    %840 = vmatprep.subr.mxu0 0.0
    %841 = vmatpush1.msra.mxu0 0.0
    %842 = vmatprep.subr.mxu0 0.0
    %843 = vmatpush1.msra.mxu0 0.0
    %844 = vmatprep.subr.mxu0 0.0
    %845 = vmatpush1.msra.mxu0 0.0
    %846 = vmatprep.subr.mxu0 0.0
    %847 = vmatpush1.msra.mxu0 0.0
    %848 = vmatprep.subr.mxu0 0.0
    %849 = vmatpush1.msra.mxu0 0.0
    %850 = vmatprep.subr.mxu0 0.0
    %851 = vmatpush1.msra.mxu0 0.0
    %852 = vmatprep.subr.mxu0 0.0
    %853 = vmatpush1.msra.mxu0 0.0
    %854 = vmatprep.mubr.f32.mxu0 0.0
    %v855 = vand.u32 %v380, 4294901760
    %v856 = vsub.f32 %v380, %v855
    %857 = vmatmul.mubr.f32.gmra.mrb[0].mxu0 %v856
    %v858 = vpop.f32.mrb[0].mxu0
    %v859 = vadd.f32 %v749, %v858
    %v860 = vpop.f32.mrb[0].mxu0
    %861 = vmatprep.mubr.f32.mxu0 0.0
    %v862 = vand.u32 %v483, 4294901760
    %v863 = vsub.f32 %v483, %v862
    %864 = vmatmul.mubr.f32.gmra.mrb[0].mxu0 %v863
    %v865 = vpop.f32.mrb[0].mxu0
    %v866 = vadd.f32 %v755, %v865
    %v867 = vpop.f32.mrb[0].mxu0
    %868 = vdwg.mxu0
    %869 = vmatprep.subr.mxu0 0.0
    %v870 = vand.u32 %v484, 4294901760
    %871 = vmatpush1.msra.mxu0 %v870
    %872 = vmatprep.subr.mxu0 0.0
    %v873 = vand.u32 %v485, 4294901760
    %874 = vmatpush1.msra.mxu0 %v873
    %875 = vmatprep.subr.mxu0 0.0
    %v876 = vand.u32 %v486, 4294901760
    %877 = vmatpush1.msra.mxu0 %v876
    %878 = vmatprep.subr.mxu0 0.0
    %v879 = vand.u32 %v487, 4294901760
    %880 = vmatpush1.msra.mxu0 %v879
    %881 = vmatprep.subr.mxu0 0.0
    %v882 = vand.u32 %v488, 4294901760
    %883 = vmatpush1.msra.mxu0 %v882
    %884 = vmatprep.subr.mxu0 0.0
    %v885 = vand.u32 %v489, 4294901760
    %886 = vmatpush1.msra.mxu0 %v885
    %887 = vmatprep.subr.mxu0 0.0
    %v888 = vand.u32 %v490, 4294901760
    %889 = vmatpush1.msra.mxu0 %v888
    %890 = vmatprep.subr.mxu0 0.0
    %v891 = vand.u32 %v491, 4294901760
    %892 = vmatpush1.msra.mxu0 %v891
    %893 = vmatprep.subr.mxu0 0.0
    %v894 = vand.u32 %v492, 4294901760
    %895 = vmatpush1.msra.mxu0 %v894
    %896 = vmatprep.subr.mxu0 0.0
    %v897 = vand.u32 %v493, 4294901760
    %898 = vmatpush1.msra.mxu0 %v897
    %899 = vmatprep.subr.mxu0 0.0
    %v900 = vand.u32 %v494, 4294901760
    %901 = vmatpush1.msra.mxu0 %v900
    %902 = vmatprep.subr.mxu0 0.0
    %v903 = vand.u32 %v495, 4294901760
    %904 = vmatpush1.msra.mxu0 %v903
    %905 = vmatprep.subr.mxu0 0.0
    %v906 = vand.u32 %v496, 4294901760
    %907 = vmatpush1.msra.mxu0 %v906
    %908 = vmatprep.subr.mxu0 0.0
    %v909 = vand.u32 %v497, 4294901760
    %910 = vmatpush1.msra.mxu0 %v909
    %911 = vmatprep.subr.mxu0 0.0
    %v912 = vand.u32 %v498, 4294901760
    %913 = vmatpush1.msra.mxu0 %v912
    %914 = vmatprep.subr.mxu0 0.0
    %v915 = vand.u32 %v499, 4294901760
    %916 = vmatpush1.msra.mxu0 %v915
    %917 = vmatprep.subr.mxu0 0.0
    %918 = vmatpush1.msra.mxu0 0.0
    %919 = vmatprep.subr.mxu0 0.0
    %920 = vmatpush1.msra.mxu0 0.0
    %921 = vmatprep.subr.mxu0 0.0
    %922 = vmatpush1.msra.mxu0 0.0
    %923 = vmatprep.subr.mxu0 0.0
    %924 = vmatpush1.msra.mxu0 0.0
    %925 = vmatprep.subr.mxu0 0.0
    %926 = vmatpush1.msra.mxu0 0.0
    %927 = vmatprep.subr.mxu0 0.0
    %928 = vmatpush1.msra.mxu0 0.0
    %929 = vmatprep.subr.mxu0 0.0
    %930 = vmatpush1.msra.mxu0 0.0
    %931 = vmatprep.subr.mxu0 0.0
    %932 = vmatpush1.msra.mxu0 0.0
    %933 = vmatprep.subr.mxu0 0.0
    %934 = vmatpush1.msra.mxu0 0.0
    %935 = vmatprep.subr.mxu0 0.0
    %936 = vmatpush1.msra.mxu0 0.0
    %937 = vmatprep.subr.mxu0 0.0
    %938 = vmatpush1.msra.mxu0 0.0
    %939 = vmatprep.subr.mxu0 0.0
    %940 = vmatpush1.msra.mxu0 0.0
    %941 = vmatprep.subr.mxu0 0.0
    %942 = vmatpush1.msra.mxu0 0.0
    %943 = vmatprep.subr.mxu0 0.0
    %944 = vmatpush1.msra.mxu0 0.0
    %945 = vmatprep.subr.mxu0 0.0
    %946 = vmatpush1.msra.mxu0 0.0
    %947 = vmatprep.subr.mxu0 0.0
    %948 = vmatpush1.msra.mxu0 0.0
    %949 = vmatprep.mubr.f32.mxu0 0.0
    %v950 = vand.u32 %v380, 4294901760
    %v951 = vsub.f32 %v380, %v950
    %v952 = vand.u32 %v951, 4294901760
    %953 = vmatmul.mubr.f32.gmra.mrb[0].mxu0 %v952
    %v954 = vpop.f32.mrb[0].mxu0
    %v955 = vadd.f32 %v859, %v954
    %v956 = vpop.f32.mrb[0].mxu0
    %957 = vmatprep.mubr.f32.mxu0 0.0
    %v958 = vand.u32 %v483, 4294901760
    %v959 = vsub.f32 %v483, %v958
    %v960 = vand.u32 %v959, 4294901760
    %961 = vmatmul.mubr.f32.gmra.mrb[0].mxu0 %v960
    %v962 = vpop.f32.mrb[0].mxu0
    %v963 = vadd.f32 %v866, %v962
    %v964 = vpop.f32.mrb[0].mxu0
    %965 = vdwg.mxu0
    %966 = vmatprep.subr.mxu0 0.0
    %v967 = vand.u32 %v484, 4294901760
    %v968 = vsub.f32 %v484, %v967
    %v969 = vand.u32 %v968, 4294901760
    %970 = vmatpush1.msra.mxu0 %v969
    %971 = vmatprep.subr.mxu0 0.0
    %v972 = vand.u32 %v485, 4294901760
    %v973 = vsub.f32 %v485, %v972
    %v974 = vand.u32 %v973, 4294901760
    %975 = vmatpush1.msra.mxu0 %v974
    %976 = vmatprep.subr.mxu0 0.0
    %v977 = vand.u32 %v486, 4294901760
    %v978 = vsub.f32 %v486, %v977
    %v979 = vand.u32 %v978, 4294901760
    %980 = vmatpush1.msra.mxu0 %v979
    %981 = vmatprep.subr.mxu0 0.0
    %v982 = vand.u32 %v487, 4294901760
    %v983 = vsub.f32 %v487, %v982
    %v984 = vand.u32 %v983, 4294901760
    %985 = vmatpush1.msra.mxu0 %v984
    %986 = vmatprep.subr.mxu0 0.0
    %v987 = vand.u32 %v488, 4294901760
    %v988 = vsub.f32 %v488, %v987
    %v989 = vand.u32 %v988, 4294901760
    %990 = vmatpush1.msra.mxu0 %v989
    %991 = vmatprep.subr.mxu0 0.0
    %v992 = vand.u32 %v489, 4294901760
    %v993 = vsub.f32 %v489, %v992
    %v994 = vand.u32 %v993, 4294901760
    %995 = vmatpush1.msra.mxu0 %v994
    %996 = vmatprep.subr.mxu0 0.0
    %v997 = vand.u32 %v490, 4294901760
    %v998 = vsub.f32 %v490, %v997
    %v999 = vand.u32 %v998, 4294901760
    %1000 = vmatpush1.msra.mxu0 %v999
    %1001 = vmatprep.subr.mxu0 0.0
    %v1002 = vand.u32 %v491, 4294901760
    %v1003 = vsub.f32 %v491, %v1002
    %v1004 = vand.u32 %v1003, 4294901760
    %1005 = vmatpush1.msra.mxu0 %v1004
    %1006 = vmatprep.subr.mxu0 0.0
    %v1007 = vand.u32 %v492, 4294901760
    %v1008 = vsub.f32 %v492, %v1007
    %v1009 = vand.u32 %v1008, 4294901760
    %1010 = vmatpush1.msra.mxu0 %v1009
    %1011 = vmatprep.subr.mxu0 0.0
    %v1012 = vand.u32 %v493, 4294901760
    %v1013 = vsub.f32 %v493, %v1012
    %v1014 = vand.u32 %v1013, 4294901760
    %1015 = vmatpush1.msra.mxu0 %v1014
    %1016 = vmatprep.subr.mxu0 0.0
    %v1017 = vand.u32 %v494, 4294901760
    %v1018 = vsub.f32 %v494, %v1017
    %v1019 = vand.u32 %v1018, 4294901760
    %1020 = vmatpush1.msra.mxu0 %v1019
    %1021 = vmatprep.subr.mxu0 0.0
    %v1022 = vand.u32 %v495, 4294901760
    %v1023 = vsub.f32 %v495, %v1022
    %v1024 = vand.u32 %v1023, 4294901760
    %1025 = vmatpush1.msra.mxu0 %v1024
    %1026 = vmatprep.subr.mxu0 0.0
    %v1027 = vand.u32 %v496, 4294901760
    %v1028 = vsub.f32 %v496, %v1027
    %v1029 = vand.u32 %v1028, 4294901760
    %1030 = vmatpush1.msra.mxu0 %v1029
    %1031 = vmatprep.subr.mxu0 0.0
    %v1032 = vand.u32 %v497, 4294901760
    %v1033 = vsub.f32 %v497, %v1032
    %v1034 = vand.u32 %v1033, 4294901760
    %1035 = vmatpush1.msra.mxu0 %v1034
    %1036 = vmatprep.subr.mxu0 0.0
    %v1037 = vand.u32 %v498, 4294901760
    %v1038 = vsub.f32 %v498, %v1037
    %v1039 = vand.u32 %v1038, 4294901760
    %1040 = vmatpush1.msra.mxu0 %v1039
    %1041 = vmatprep.subr.mxu0 0.0
    %v1042 = vand.u32 %v499, 4294901760
    %v1043 = vsub.f32 %v499, %v1042
    %v1044 = vand.u32 %v1043, 4294901760
    %1045 = vmatpush1.msra.mxu0 %v1044
    %1046 = vmatprep.subr.mxu0 0.0
    %1047 = vmatpush1.msra.mxu0 0.0
    %1048 = vmatprep.subr.mxu0 0.0
    %1049 = vmatpush1.msra.mxu0 0.0
    %1050 = vmatprep.subr.mxu0 0.0
    %1051 = vmatpush1.msra.mxu0 0.0
    %1052 = vmatprep.subr.mxu0 0.0
    %1053 = vmatpush1.msra.mxu0 0.0
    %1054 = vmatprep.subr.mxu0 0.0
    %1055 = vmatpush1.msra.mxu0 0.0
    %1056 = vmatprep.subr.mxu0 0.0
    %1057 = vmatpush1.msra.mxu0 0.0
    %1058 = vmatprep.subr.mxu0 0.0
    %1059 = vmatpush1.msra.mxu0 0.0
    %1060 = vmatprep.subr.mxu0 0.0
    %1061 = vmatpush1.msra.mxu0 0.0
    %1062 = vmatprep.subr.mxu0 0.0
    %1063 = vmatpush1.msra.mxu0 0.0
    %1064 = vmatprep.subr.mxu0 0.0
    %1065 = vmatpush1.msra.mxu0 0.0
    %1066 = vmatprep.subr.mxu0 0.0
    %1067 = vmatpush1.msra.mxu0 0.0
    %1068 = vmatprep.subr.mxu0 0.0
    %1069 = vmatpush1.msra.mxu0 0.0
    %1070 = vmatprep.subr.mxu0 0.0
    %1071 = vmatpush1.msra.mxu0 0.0
    %1072 = vmatprep.subr.mxu0 0.0
    %1073 = vmatpush1.msra.mxu0 0.0
    %1074 = vmatprep.subr.mxu0 0.0
    %1075 = vmatpush1.msra.mxu0 0.0
    %1076 = vmatprep.subr.mxu0 0.0
    %1077 = vmatpush1.msra.mxu0 0.0
    %1078 = vmatprep.mubr.f32.mxu0 0.0
    %v1079 = vand.u32 %v380, 4294901760
    %1080 = vmatmul.mubr.f32.gmra.mrb[0].mxu0 %v1079
    %v1081 = vpop.f32.mrb[0].mxu0
    %v1082 = vadd.f32 %v955, %v1081
    %v1083 = vpop.f32.mrb[0].mxu0
    %1084 = vmatprep.mubr.f32.mxu0 0.0
    %v1085 = vand.u32 %v483, 4294901760
    %1086 = vmatmul.mubr.f32.gmra.mrb[0].mxu0 %v1085
    %v1087 = vpop.f32.mrb[0].mxu0
    %v1088 = vadd.f32 %v963, %v1087
    %v1089 = vpop.f32.mrb[0].mxu0
    %1090 = vdwg.mxu0
    %1091 = vmatprep.subr.mxu0 0.0
    %v1092 = vand.u32 %v484, 4294901760
    %1093 = vmatpush1.msra.mxu0 %v1092
    %1094 = vmatprep.subr.mxu0 0.0
    %v1095 = vand.u32 %v485, 4294901760
    %1096 = vmatpush1.msra.mxu0 %v1095
    %1097 = vmatprep.subr.mxu0 0.0
    %v1098 = vand.u32 %v486, 4294901760
    %1099 = vmatpush1.msra.mxu0 %v1098
    %1100 = vmatprep.subr.mxu0 0.0
    %v1101 = vand.u32 %v487, 4294901760
    %1102 = vmatpush1.msra.mxu0 %v1101
    %1103 = vmatprep.subr.mxu0 0.0
    %v1104 = vand.u32 %v488, 4294901760
    %1105 = vmatpush1.msra.mxu0 %v1104
    %1106 = vmatprep.subr.mxu0 0.0
    %v1107 = vand.u32 %v489, 4294901760
    %1108 = vmatpush1.msra.mxu0 %v1107
    %1109 = vmatprep.subr.mxu0 0.0
    %v1110 = vand.u32 %v490, 4294901760
    %1111 = vmatpush1.msra.mxu0 %v1110
    %1112 = vmatprep.subr.mxu0 0.0
    %v1113 = vand.u32 %v491, 4294901760
    %1114 = vmatpush1.msra.mxu0 %v1113
    %1115 = vmatprep.subr.mxu0 0.0
    %v1116 = vand.u32 %v492, 4294901760
    %1117 = vmatpush1.msra.mxu0 %v1116
    %1118 = vmatprep.subr.mxu0 0.0
    %v1119 = vand.u32 %v493, 4294901760
    %1120 = vmatpush1.msra.mxu0 %v1119
    %1121 = vmatprep.subr.mxu0 0.0
    %v1122 = vand.u32 %v494, 4294901760
    %1123 = vmatpush1.msra.mxu0 %v1122
    %1124 = vmatprep.subr.mxu0 0.0
    %v1125 = vand.u32 %v495, 4294901760
    %1126 = vmatpush1.msra.mxu0 %v1125
    %1127 = vmatprep.subr.mxu0 0.0
    %v1128 = vand.u32 %v496, 4294901760
    %1129 = vmatpush1.msra.mxu0 %v1128
    %1130 = vmatprep.subr.mxu0 0.0
    %v1131 = vand.u32 %v497, 4294901760
    %1132 = vmatpush1.msra.mxu0 %v1131
    %1133 = vmatprep.subr.mxu0 0.0
    %v1134 = vand.u32 %v498, 4294901760
    %1135 = vmatpush1.msra.mxu0 %v1134
    %1136 = vmatprep.subr.mxu0 0.0
    %v1137 = vand.u32 %v499, 4294901760
    %1138 = vmatpush1.msra.mxu0 %v1137
    %1139 = vmatprep.subr.mxu0 0.0
    %1140 = vmatpush1.msra.mxu0 0.0
    %1141 = vmatprep.subr.mxu0 0.0
    %1142 = vmatpush1.msra.mxu0 0.0
    %1143 = vmatprep.subr.mxu0 0.0
    %1144 = vmatpush1.msra.mxu0 0.0
    %1145 = vmatprep.subr.mxu0 0.0
    %1146 = vmatpush1.msra.mxu0 0.0
    %1147 = vmatprep.subr.mxu0 0.0
    %1148 = vmatpush1.msra.mxu0 0.0
    %1149 = vmatprep.subr.mxu0 0.0
    %1150 = vmatpush1.msra.mxu0 0.0
    %1151 = vmatprep.subr.mxu0 0.0
    %1152 = vmatpush1.msra.mxu0 0.0
    %1153 = vmatprep.subr.mxu0 0.0
    %1154 = vmatpush1.msra.mxu0 0.0
    %1155 = vmatprep.subr.mxu0 0.0
    %1156 = vmatpush1.msra.mxu0 0.0
    %1157 = vmatprep.subr.mxu0 0.0
    %1158 = vmatpush1.msra.mxu0 0.0
    %1159 = vmatprep.subr.mxu0 0.0
    %1160 = vmatpush1.msra.mxu0 0.0
    %1161 = vmatprep.subr.mxu0 0.0
    %1162 = vmatpush1.msra.mxu0 0.0
    %1163 = vmatprep.subr.mxu0 0.0
    %1164 = vmatpush1.msra.mxu0 0.0
    %1165 = vmatprep.subr.mxu0 0.0
    %1166 = vmatpush1.msra.mxu0 0.0
    %1167 = vmatprep.subr.mxu0 0.0
    %1168 = vmatpush1.msra.mxu0 0.0
    %1169 = vmatprep.subr.mxu0 0.0
    %1170 = vmatpush1.msra.mxu0 0.0
    %1171 = vmatprep.mubr.f32.mxu0 0.0
    %v1172 = vand.u32 %v380, 4294901760
    %1173 = vmatmul.mubr.f32.gmra.mrb[0].mxu0 %v1172
    %v1174 = vpop.f32.mrb[0].mxu0
    %v1175 = vadd.f32 %v1082, %v1174
    %v1176 = vpop.f32.mrb[0].mxu0
    %1177 = vmatprep.mubr.f32.mxu0 0.0
    %v1178 = vand.u32 %v483, 4294901760
    %1179 = vmatmul.mubr.f32.gmra.mrb[0].mxu0 %v1178
    %v1180 = vpop.f32.mrb[0].mxu0
    %v1181 = vadd.f32 %v1088, %v1180
    %v1182 = vpop.f32.mrb[0].mxu0
    %1183 = vdwg.mxu0
    %1184 = vmatprep.subr.mxu0 0.0
    %v1185 = vand.u32 %v262, 4294901760
    %1186 = vmatpush1.msra.mxu0 %v1185
    %1187 = vmatprep.subr.mxu0 0.0
    %v1188 = vand.u32 %v263, 4294901760
    %1189 = vmatpush1.msra.mxu0 %v1188
    %1190 = vmatprep.subr.mxu0 0.0
    %v1191 = vand.u32 %v264, 4294901760
    %1192 = vmatpush1.msra.mxu0 %v1191
    %1193 = vmatprep.subr.mxu0 0.0
    %v1194 = vand.u32 %v265, 4294901760
    %1195 = vmatpush1.msra.mxu0 %v1194
    %1196 = vmatprep.subr.mxu0 0.0
    %v1197 = vand.u32 %v266, 4294901760
    %1198 = vmatpush1.msra.mxu0 %v1197
    %1199 = vmatprep.subr.mxu0 0.0
    %v1200 = vand.u32 %v267, 4294901760
    %1201 = vmatpush1.msra.mxu0 %v1200
    %1202 = vmatprep.subr.mxu0 0.0
    %v1203 = vand.u32 %v268, 4294901760
    %1204 = vmatpush1.msra.mxu0 %v1203
    %1205 = vmatprep.subr.mxu0 0.0
    %v1206 = vand.u32 %v269, 4294901760
    %1207 = vmatpush1.msra.mxu0 %v1206
    %1208 = vmatprep.subr.mxu0 0.0
    %v1209 = vand.u32 %v270, 4294901760
    %1210 = vmatpush1.msra.mxu0 %v1209
    %1211 = vmatprep.subr.mxu0 0.0
    %v1212 = vand.u32 %v271, 4294901760
    %1213 = vmatpush1.msra.mxu0 %v1212
    %1214 = vmatprep.subr.mxu0 0.0
    %v1215 = vand.u32 %v272, 4294901760
    %1216 = vmatpush1.msra.mxu0 %v1215
    %1217 = vmatprep.subr.mxu0 0.0
    %v1218 = vand.u32 %v273, 4294901760
    %1219 = vmatpush1.msra.mxu0 %v1218
    %1220 = vmatprep.subr.mxu0 0.0
    %v1221 = vand.u32 %v274, 4294901760
    %1222 = vmatpush1.msra.mxu0 %v1221
    %1223 = vmatprep.subr.mxu0 0.0
    %v1224 = vand.u32 %v275, 4294901760
    %1225 = vmatpush1.msra.mxu0 %v1224
    %1226 = vmatprep.subr.mxu0 0.0
    %v1227 = vand.u32 %v276, 4294901760
    %1228 = vmatpush1.msra.mxu0 %v1227
    %1229 = vmatprep.subr.mxu0 0.0
    %v1230 = vand.u32 %v277, 4294901760
    %1231 = vmatpush1.msra.mxu0 %v1230
    %1232 = vmatprep.subr.mxu0 0.0
    %1233 = vmatpush1.msra.mxu0 0.0
    %1234 = vmatprep.subr.mxu0 0.0
    %1235 = vmatpush1.msra.mxu0 0.0
    %1236 = vmatprep.subr.mxu0 0.0
    %1237 = vmatpush1.msra.mxu0 0.0
    %1238 = vmatprep.subr.mxu0 0.0
    %1239 = vmatpush1.msra.mxu0 0.0
    %1240 = vmatprep.subr.mxu0 0.0
    %1241 = vmatpush1.msra.mxu0 0.0
    %1242 = vmatprep.subr.mxu0 0.0
    %1243 = vmatpush1.msra.mxu0 0.0
    %1244 = vmatprep.subr.mxu0 0.0
    %1245 = vmatpush1.msra.mxu0 0.0
    %1246 = vmatprep.subr.mxu0 0.0
    %1247 = vmatpush1.msra.mxu0 0.0
    %1248 = vmatprep.subr.mxu0 0.0
    %1249 = vmatpush1.msra.mxu0 0.0
    %1250 = vmatprep.subr.mxu0 0.0
    %1251 = vmatpush1.msra.mxu0 0.0
    %1252 = vmatprep.subr.mxu0 0.0
    %1253 = vmatpush1.msra.mxu0 0.0
    %1254 = vmatprep.subr.mxu0 0.0
    %1255 = vmatpush1.msra.mxu0 0.0
    %1256 = vmatprep.subr.mxu0 0.0
    %1257 = vmatpush1.msra.mxu0 0.0
    %1258 = vmatprep.subr.mxu0 0.0
    %1259 = vmatpush1.msra.mxu0 0.0
    %1260 = vmatprep.subr.mxu0 0.0
    %1261 = vmatpush1.msra.mxu0 0.0
    %1262 = vmatprep.subr.mxu0 0.0
    %1263 = vmatpush1.msra.mxu0 0.0
    %1264 = vmatprep.mubr.f32.mxu0 0.0
    %v1265 = vand.u32 %v157, 4294901760
    %v1266 = vsub.f32 %v157, %v1265
    %v1267 = vand.u32 %v1266, 4294901760
    %v1268 = vsub.f32 %v1266, %v1267
    %v1269 = vand.u32 %v1268, 4294901760
    %1270 = vmatmul.mubr.f32.gmra.mrb[0].mxu0 %v1269
    %v1271 = vpop.f32.mrb[0].mxu0
    %v1272 = vadd.f32 %v1175, %v1271
    %v1273 = vpop.f32.mrb[0].mxu0
    %1274 = vmatprep.mubr.f32.mxu0 0.0
    %v1275 = vand.u32 %v261, 4294901760
    %v1276 = vsub.f32 %v261, %v1275
    %v1277 = vand.u32 %v1276, 4294901760
    %v1278 = vsub.f32 %v1276, %v1277
    %v1279 = vand.u32 %v1278, 4294901760
    %1280 = vmatmul.mubr.f32.gmra.mrb[0].mxu0 %v1279
    %v1281 = vpop.f32.mrb[0].mxu0
    %v1282 = vadd.f32 %v1181, %v1281
    %v1283 = vpop.f32.mrb[0].mxu0
    %1284 = vdwg.mxu0
    %1285 = vmatprep.subr.mxu0 0.0
    %v1286 = vand.u32 %v262, 4294901760
    %v1287 = vsub.f32 %v262, %v1286
    %v1288 = vand.u32 %v1287, 4294901760
    %v1289 = vsub.f32 %v1287, %v1288
    %v1290 = vand.u32 %v1289, 4294901760
    %1291 = vmatpush1.msra.mxu0 %v1290
    %1292 = vmatprep.subr.mxu0 0.0
    %v1293 = vand.u32 %v263, 4294901760
    %v1294 = vsub.f32 %v263, %v1293
    %v1295 = vand.u32 %v1294, 4294901760
    %v1296 = vsub.f32 %v1294, %v1295
    %v1297 = vand.u32 %v1296, 4294901760
    %1298 = vmatpush1.msra.mxu0 %v1297
    %1299 = vmatprep.subr.mxu0 0.0
    %v1300 = vand.u32 %v264, 4294901760
    %v1301 = vsub.f32 %v264, %v1300
    %v1302 = vand.u32 %v1301, 4294901760
    %v1303 = vsub.f32 %v1301, %v1302
    %v1304 = vand.u32 %v1303, 4294901760
    %1305 = vmatpush1.msra.mxu0 %v1304
    %1306 = vmatprep.subr.mxu0 0.0
    %v1307 = vand.u32 %v265, 4294901760
    %v1308 = vsub.f32 %v265, %v1307
    %v1309 = vand.u32 %v1308, 4294901760
    %v1310 = vsub.f32 %v1308, %v1309
    %v1311 = vand.u32 %v1310, 4294901760
    %1312 = vmatpush1.msra.mxu0 %v1311
    %1313 = vmatprep.subr.mxu0 0.0
    %v1314 = vand.u32 %v266, 4294901760
    %v1315 = vsub.f32 %v266, %v1314
    %v1316 = vand.u32 %v1315, 4294901760
    %v1317 = vsub.f32 %v1315, %v1316
    %v1318 = vand.u32 %v1317, 4294901760
    %1319 = vmatpush1.msra.mxu0 %v1318
    %1320 = vmatprep.subr.mxu0 0.0
    %v1321 = vand.u32 %v267, 4294901760
    %v1322 = vsub.f32 %v267, %v1321
    %v1323 = vand.u32 %v1322, 4294901760
    %v1324 = vsub.f32 %v1322, %v1323
    %v1325 = vand.u32 %v1324, 4294901760
    %1326 = vmatpush1.msra.mxu0 %v1325
    %1327 = vmatprep.subr.mxu0 0.0
    %v1328 = vand.u32 %v268, 4294901760
    %v1329 = vsub.f32 %v268, %v1328
    %v1330 = vand.u32 %v1329, 4294901760
    %v1331 = vsub.f32 %v1329, %v1330
    %v1332 = vand.u32 %v1331, 4294901760
    %1333 = vmatpush1.msra.mxu0 %v1332
    %1334 = vmatprep.subr.mxu0 0.0
    %v1335 = vand.u32 %v269, 4294901760
    %v1336 = vsub.f32 %v269, %v1335
    %v1337 = vand.u32 %v1336, 4294901760
    %v1338 = vsub.f32 %v1336, %v1337
    %v1339 = vand.u32 %v1338, 4294901760
    %1340 = vmatpush1.msra.mxu0 %v1339
    %1341 = vmatprep.subr.mxu0 0.0
    %v1342 = vand.u32 %v270, 4294901760
    %v1343 = vsub.f32 %v270, %v1342
    %v1344 = vand.u32 %v1343, 4294901760
    %v1345 = vsub.f32 %v1343, %v1344
    %v1346 = vand.u32 %v1345, 4294901760
    %1347 = vmatpush1.msra.mxu0 %v1346
    %1348 = vmatprep.subr.mxu0 0.0
    %v1349 = vand.u32 %v271, 4294901760
    %v1350 = vsub.f32 %v271, %v1349
    %v1351 = vand.u32 %v1350, 4294901760
    %v1352 = vsub.f32 %v1350, %v1351
    %v1353 = vand.u32 %v1352, 4294901760
    %1354 = vmatpush1.msra.mxu0 %v1353
    %1355 = vmatprep.subr.mxu0 0.0
    %v1356 = vand.u32 %v272, 4294901760
    %v1357 = vsub.f32 %v272, %v1356
    %v1358 = vand.u32 %v1357, 4294901760
    %v1359 = vsub.f32 %v1357, %v1358
    %v1360 = vand.u32 %v1359, 4294901760
    %1361 = vmatpush1.msra.mxu0 %v1360
    %1362 = vmatprep.subr.mxu0 0.0
    %v1363 = vand.u32 %v273, 4294901760
    %v1364 = vsub.f32 %v273, %v1363
    %v1365 = vand.u32 %v1364, 4294901760
    %v1366 = vsub.f32 %v1364, %v1365
    %v1367 = vand.u32 %v1366, 4294901760
    %1368 = vmatpush1.msra.mxu0 %v1367
    %1369 = vmatprep.subr.mxu0 0.0
    %v1370 = vand.u32 %v274, 4294901760
    %v1371 = vsub.f32 %v274, %v1370
    %v1372 = vand.u32 %v1371, 4294901760
    %v1373 = vsub.f32 %v1371, %v1372
    %v1374 = vand.u32 %v1373, 4294901760
    %1375 = vmatpush1.msra.mxu0 %v1374
    %1376 = vmatprep.subr.mxu0 0.0
    %v1377 = vand.u32 %v275, 4294901760
    %v1378 = vsub.f32 %v275, %v1377
    %v1379 = vand.u32 %v1378, 4294901760
    %v1380 = vsub.f32 %v1378, %v1379
    %v1381 = vand.u32 %v1380, 4294901760
    %1382 = vmatpush1.msra.mxu0 %v1381
    %1383 = vmatprep.subr.mxu0 0.0
    %v1384 = vand.u32 %v276, 4294901760
    %v1385 = vsub.f32 %v276, %v1384
    %v1386 = vand.u32 %v1385, 4294901760
    %v1387 = vsub.f32 %v1385, %v1386
    %v1388 = vand.u32 %v1387, 4294901760
    %1389 = vmatpush1.msra.mxu0 %v1388
    %1390 = vmatprep.subr.mxu0 0.0
    %v1391 = vand.u32 %v277, 4294901760
    %v1392 = vsub.f32 %v277, %v1391
    %v1393 = vand.u32 %v1392, 4294901760
    %v1394 = vsub.f32 %v1392, %v1393
    %v1395 = vand.u32 %v1394, 4294901760
    %1396 = vmatpush1.msra.mxu0 %v1395
    %1397 = vmatprep.subr.mxu0 0.0
    %1398 = vmatpush1.msra.mxu0 0.0
    %1399 = vmatprep.subr.mxu0 0.0
    %1400 = vmatpush1.msra.mxu0 0.0
    %1401 = vmatprep.subr.mxu0 0.0
    %1402 = vmatpush1.msra.mxu0 0.0
    %1403 = vmatprep.subr.mxu0 0.0
    %1404 = vmatpush1.msra.mxu0 0.0
    %1405 = vmatprep.subr.mxu0 0.0
    %1406 = vmatpush1.msra.mxu0 0.0
    %1407 = vmatprep.subr.mxu0 0.0
    %1408 = vmatpush1.msra.mxu0 0.0
    %1409 = vmatprep.subr.mxu0 0.0
    %1410 = vmatpush1.msra.mxu0 0.0
    %1411 = vmatprep.subr.mxu0 0.0
    %1412 = vmatpush1.msra.mxu0 0.0
    %1413 = vmatprep.subr.mxu0 0.0
    %1414 = vmatpush1.msra.mxu0 0.0
    %1415 = vmatprep.subr.mxu0 0.0
    %1416 = vmatpush1.msra.mxu0 0.0
    %1417 = vmatprep.subr.mxu0 0.0
    %1418 = vmatpush1.msra.mxu0 0.0
    %1419 = vmatprep.subr.mxu0 0.0
    %1420 = vmatpush1.msra.mxu0 0.0
    %1421 = vmatprep.subr.mxu0 0.0
    %1422 = vmatpush1.msra.mxu0 0.0
    %1423 = vmatprep.subr.mxu0 0.0
    %1424 = vmatpush1.msra.mxu0 0.0
    %1425 = vmatprep.subr.mxu0 0.0
    %1426 = vmatpush1.msra.mxu0 0.0
    %1427 = vmatprep.subr.mxu0 0.0
    %1428 = vmatpush1.msra.mxu0 0.0
    %1429 = vmatprep.mubr.f32.mxu0 0.0
    %v1430 = vand.u32 %v157, 4294901760
    %1431 = vmatmul.mubr.f32.gmra.mrb[0].mxu0 %v1430
    %v1432 = vpop.f32.mrb[0].mxu0
    %v1433 = vadd.f32 %v1272, %v1432
    %v1434 = vpop.f32.mrb[0].mxu0
    %1435 = vmatprep.mubr.f32.mxu0 0.0
    %v1436 = vand.u32 %v261, 4294901760
    %1437 = vmatmul.mubr.f32.gmra.mrb[0].mxu0 %v1436
    %v1438 = vpop.f32.mrb[0].mxu0
    %v1439 = vadd.f32 %v1282, %v1438
    %v1440 = vpop.f32.mrb[0].mxu0
    %1441 = vdwg.mxu0
    %1442 = vmatprep.subr.mxu0 0.0
    %v1443 = vand.u32 %v262, 4294901760
    %v1444 = vsub.f32 %v262, %v1443
    %1445 = vmatpush1.msra.mxu0 %v1444
    %1446 = vmatprep.subr.mxu0 0.0
    %v1447 = vand.u32 %v263, 4294901760
    %v1448 = vsub.f32 %v263, %v1447
    %1449 = vmatpush1.msra.mxu0 %v1448
    %1450 = vmatprep.subr.mxu0 0.0
    %v1451 = vand.u32 %v264, 4294901760
    %v1452 = vsub.f32 %v264, %v1451
    %1453 = vmatpush1.msra.mxu0 %v1452
    %1454 = vmatprep.subr.mxu0 0.0
    %v1455 = vand.u32 %v265, 4294901760
    %v1456 = vsub.f32 %v265, %v1455
    %1457 = vmatpush1.msra.mxu0 %v1456
    %1458 = vmatprep.subr.mxu0 0.0
    %v1459 = vand.u32 %v266, 4294901760
    %v1460 = vsub.f32 %v266, %v1459
    %1461 = vmatpush1.msra.mxu0 %v1460
    %1462 = vmatprep.subr.mxu0 0.0
    %v1463 = vand.u32 %v267, 4294901760
    %v1464 = vsub.f32 %v267, %v1463
    %1465 = vmatpush1.msra.mxu0 %v1464
    %1466 = vmatprep.subr.mxu0 0.0
    %v1467 = vand.u32 %v268, 4294901760
    %v1468 = vsub.f32 %v268, %v1467
    %1469 = vmatpush1.msra.mxu0 %v1468
    %1470 = vmatprep.subr.mxu0 0.0
    %v1471 = vand.u32 %v269, 4294901760
    %v1472 = vsub.f32 %v269, %v1471
    %1473 = vmatpush1.msra.mxu0 %v1472
    %1474 = vmatprep.subr.mxu0 0.0
    %v1475 = vand.u32 %v270, 4294901760
    %v1476 = vsub.f32 %v270, %v1475
    %1477 = vmatpush1.msra.mxu0 %v1476
    %1478 = vmatprep.subr.mxu0 0.0
    %v1479 = vand.u32 %v271, 4294901760
    %v1480 = vsub.f32 %v271, %v1479
    %1481 = vmatpush1.msra.mxu0 %v1480
    %1482 = vmatprep.subr.mxu0 0.0
    %v1483 = vand.u32 %v272, 4294901760
    %v1484 = vsub.f32 %v272, %v1483
    %1485 = vmatpush1.msra.mxu0 %v1484
    %1486 = vmatprep.subr.mxu0 0.0
    %v1487 = vand.u32 %v273, 4294901760
    %v1488 = vsub.f32 %v273, %v1487
    %1489 = vmatpush1.msra.mxu0 %v1488
    %1490 = vmatprep.subr.mxu0 0.0
    %v1491 = vand.u32 %v274, 4294901760
    %v1492 = vsub.f32 %v274, %v1491
    %1493 = vmatpush1.msra.mxu0 %v1492
    %1494 = vmatprep.subr.mxu0 0.0
    %v1495 = vand.u32 %v275, 4294901760
    %v1496 = vsub.f32 %v275, %v1495
    %1497 = vmatpush1.msra.mxu0 %v1496
    %1498 = vmatprep.subr.mxu0 0.0
    %v1499 = vand.u32 %v276, 4294901760
    %v1500 = vsub.f32 %v276, %v1499
    %1501 = vmatpush1.msra.mxu0 %v1500
    %1502 = vmatprep.subr.mxu0 0.0
    %v1503 = vand.u32 %v277, 4294901760
    %v1504 = vsub.f32 %v277, %v1503
    %1505 = vmatpush1.msra.mxu0 %v1504
    %1506 = vmatprep.subr.mxu0 0.0
    %1507 = vmatpush1.msra.mxu0 0.0
    %1508 = vmatprep.subr.mxu0 0.0
    %1509 = vmatpush1.msra.mxu0 0.0
    %1510 = vmatprep.subr.mxu0 0.0
    %1511 = vmatpush1.msra.mxu0 0.0
    %1512 = vmatprep.subr.mxu0 0.0
    %1513 = vmatpush1.msra.mxu0 0.0
    %1514 = vmatprep.subr.mxu0 0.0
    %1515 = vmatpush1.msra.mxu0 0.0
    %1516 = vmatprep.subr.mxu0 0.0
    %1517 = vmatpush1.msra.mxu0 0.0
    %1518 = vmatprep.subr.mxu0 0.0
    %1519 = vmatpush1.msra.mxu0 0.0
    %1520 = vmatprep.subr.mxu0 0.0
    %1521 = vmatpush1.msra.mxu0 0.0
    %1522 = vmatprep.subr.mxu0 0.0
    %1523 = vmatpush1.msra.mxu0 0.0
    %1524 = vmatprep.subr.mxu0 0.0
    %1525 = vmatpush1.msra.mxu0 0.0
    %1526 = vmatprep.subr.mxu0 0.0
    %1527 = vmatpush1.msra.mxu0 0.0
    %1528 = vmatprep.subr.mxu0 0.0
    %1529 = vmatpush1.msra.mxu0 0.0
    %1530 = vmatprep.subr.mxu0 0.0
    %1531 = vmatpush1.msra.mxu0 0.0
    %1532 = vmatprep.subr.mxu0 0.0
    %1533 = vmatpush1.msra.mxu0 0.0
    %1534 = vmatprep.subr.mxu0 0.0
    %1535 = vmatpush1.msra.mxu0 0.0
    %1536 = vmatprep.subr.mxu0 0.0
    %1537 = vmatpush1.msra.mxu0 0.0
    %1538 = vmatprep.mubr.f32.mxu0 0.0
    %v1539 = vand.u32 %v157, 4294901760
    %v1540 = vsub.f32 %v157, %v1539
    %1541 = vmatmul.mubr.f32.gmra.mrb[0].mxu0 %v1540
    %v1542 = vpop.f32.mrb[0].mxu0
    %v1543 = vadd.f32 %v1433, %v1542
    %v1544 = vpop.f32.mrb[0].mxu0
    %1545 = vmatprep.mubr.f32.mxu0 0.0
    %v1546 = vand.u32 %v261, 4294901760
    %v1547 = vsub.f32 %v261, %v1546
    %1548 = vmatmul.mubr.f32.gmra.mrb[0].mxu0 %v1547
    %v1549 = vpop.f32.mrb[0].mxu0
    %v1550 = vadd.f32 %v1439, %v1549
    %v1551 = vpop.f32.mrb[0].mxu0
    %1552 = vdwg.mxu0
    %1553 = vmatprep.subr.mxu0 0.0
    %v1554 = vand.u32 %v262, 4294901760
    %1555 = vmatpush1.msra.mxu0 %v1554
    %1556 = vmatprep.subr.mxu0 0.0
    %v1557 = vand.u32 %v263, 4294901760
    %1558 = vmatpush1.msra.mxu0 %v1557
    %1559 = vmatprep.subr.mxu0 0.0
    %v1560 = vand.u32 %v264, 4294901760
    %1561 = vmatpush1.msra.mxu0 %v1560
    %1562 = vmatprep.subr.mxu0 0.0
    %v1563 = vand.u32 %v265, 4294901760
    %1564 = vmatpush1.msra.mxu0 %v1563
    %1565 = vmatprep.subr.mxu0 0.0
    %v1566 = vand.u32 %v266, 4294901760
    %1567 = vmatpush1.msra.mxu0 %v1566
    %1568 = vmatprep.subr.mxu0 0.0
    %v1569 = vand.u32 %v267, 4294901760
    %1570 = vmatpush1.msra.mxu0 %v1569
    %1571 = vmatprep.subr.mxu0 0.0
    %v1572 = vand.u32 %v268, 4294901760
    %1573 = vmatpush1.msra.mxu0 %v1572
    %1574 = vmatprep.subr.mxu0 0.0
    %v1575 = vand.u32 %v269, 4294901760
    %1576 = vmatpush1.msra.mxu0 %v1575
    %1577 = vmatprep.subr.mxu0 0.0
    %v1578 = vand.u32 %v270, 4294901760
    %1579 = vmatpush1.msra.mxu0 %v1578
    %1580 = vmatprep.subr.mxu0 0.0
    %v1581 = vand.u32 %v271, 4294901760
    %1582 = vmatpush1.msra.mxu0 %v1581
    %1583 = vmatprep.subr.mxu0 0.0
    %v1584 = vand.u32 %v272, 4294901760
    %1585 = vmatpush1.msra.mxu0 %v1584
    %1586 = vmatprep.subr.mxu0 0.0
    %v1587 = vand.u32 %v273, 4294901760
    %1588 = vmatpush1.msra.mxu0 %v1587
    %1589 = vmatprep.subr.mxu0 0.0
    %v1590 = vand.u32 %v274, 4294901760
    %1591 = vmatpush1.msra.mxu0 %v1590
    %1592 = vmatprep.subr.mxu0 0.0
    %v1593 = vand.u32 %v275, 4294901760
    %1594 = vmatpush1.msra.mxu0 %v1593
    %1595 = vmatprep.subr.mxu0 0.0
    %v1596 = vand.u32 %v276, 4294901760
    %1597 = vmatpush1.msra.mxu0 %v1596
    %1598 = vmatprep.subr.mxu0 0.0
    %v1599 = vand.u32 %v277, 4294901760
    %1600 = vmatpush1.msra.mxu0 %v1599
    %1601 = vmatprep.subr.mxu0 0.0
    %1602 = vmatpush1.msra.mxu0 0.0
    %1603 = vmatprep.subr.mxu0 0.0
    %1604 = vmatpush1.msra.mxu0 0.0
    %1605 = vmatprep.subr.mxu0 0.0
    %1606 = vmatpush1.msra.mxu0 0.0
    %1607 = vmatprep.subr.mxu0 0.0
    %1608 = vmatpush1.msra.mxu0 0.0
    %1609 = vmatprep.subr.mxu0 0.0
    %1610 = vmatpush1.msra.mxu0 0.0
    %1611 = vmatprep.subr.mxu0 0.0
    %1612 = vmatpush1.msra.mxu0 0.0
    %1613 = vmatprep.subr.mxu0 0.0
    %1614 = vmatpush1.msra.mxu0 0.0
    %1615 = vmatprep.subr.mxu0 0.0
    %1616 = vmatpush1.msra.mxu0 0.0
    %1617 = vmatprep.subr.mxu0 0.0
    %1618 = vmatpush1.msra.mxu0 0.0
    %1619 = vmatprep.subr.mxu0 0.0
    %1620 = vmatpush1.msra.mxu0 0.0
    %1621 = vmatprep.subr.mxu0 0.0
    %1622 = vmatpush1.msra.mxu0 0.0
    %1623 = vmatprep.subr.mxu0 0.0
    %1624 = vmatpush1.msra.mxu0 0.0
    %1625 = vmatprep.subr.mxu0 0.0
    %1626 = vmatpush1.msra.mxu0 0.0
    %1627 = vmatprep.subr.mxu0 0.0
    %1628 = vmatpush1.msra.mxu0 0.0
    %1629 = vmatprep.subr.mxu0 0.0
    %1630 = vmatpush1.msra.mxu0 0.0
    %1631 = vmatprep.subr.mxu0 0.0
    %1632 = vmatpush1.msra.mxu0 0.0
    %1633 = vmatprep.mubr.f32.mxu0 0.0
    %v1634 = vand.u32 %v157, 4294901760
    %v1635 = vsub.f32 %v157, %v1634
    %v1636 = vand.u32 %v1635, 4294901760
    %1637 = vmatmul.mubr.f32.gmra.mrb[0].mxu0 %v1636
    %v1638 = vpop.f32.mrb[0].mxu0
    %v1639 = vadd.f32 %v1543, %v1638
    %v1640 = vpop.f32.mrb[0].mxu0
    %1641 = vmatprep.mubr.f32.mxu0 0.0
    %v1642 = vand.u32 %v261, 4294901760
    %v1643 = vsub.f32 %v261, %v1642
    %v1644 = vand.u32 %v1643, 4294901760
    %1645 = vmatmul.mubr.f32.gmra.mrb[0].mxu0 %v1644
    %v1646 = vpop.f32.mrb[0].mxu0
    %v1647 = vadd.f32 %v1550, %v1646
    %v1648 = vpop.f32.mrb[0].mxu0
    %1649 = vdwg.mxu0
    %1650 = vmatprep.subr.mxu0 0.0
    %v1651 = vand.u32 %v262, 4294901760
    %v1652 = vsub.f32 %v262, %v1651
    %v1653 = vand.u32 %v1652, 4294901760
    %1654 = vmatpush1.msra.mxu0 %v1653
    %1655 = vmatprep.subr.mxu0 0.0
    %v1656 = vand.u32 %v263, 4294901760
    %v1657 = vsub.f32 %v263, %v1656
    %v1658 = vand.u32 %v1657, 4294901760
    %1659 = vmatpush1.msra.mxu0 %v1658
    %1660 = vmatprep.subr.mxu0 0.0
    %v1661 = vand.u32 %v264, 4294901760
    %v1662 = vsub.f32 %v264, %v1661
    %v1663 = vand.u32 %v1662, 4294901760
    %1664 = vmatpush1.msra.mxu0 %v1663
    %1665 = vmatprep.subr.mxu0 0.0
    %v1666 = vand.u32 %v265, 4294901760
    %v1667 = vsub.f32 %v265, %v1666
    %v1668 = vand.u32 %v1667, 4294901760
    %1669 = vmatpush1.msra.mxu0 %v1668
    %1670 = vmatprep.subr.mxu0 0.0
    %v1671 = vand.u32 %v266, 4294901760
    %v1672 = vsub.f32 %v266, %v1671
    %v1673 = vand.u32 %v1672, 4294901760
    %1674 = vmatpush1.msra.mxu0 %v1673
    %1675 = vmatprep.subr.mxu0 0.0
    %v1676 = vand.u32 %v267, 4294901760
    %v1677 = vsub.f32 %v267, %v1676
    %v1678 = vand.u32 %v1677, 4294901760
    %1679 = vmatpush1.msra.mxu0 %v1678
    %1680 = vmatprep.subr.mxu0 0.0
    %v1681 = vand.u32 %v268, 4294901760
    %v1682 = vsub.f32 %v268, %v1681
    %v1683 = vand.u32 %v1682, 4294901760
    %1684 = vmatpush1.msra.mxu0 %v1683
    %1685 = vmatprep.subr.mxu0 0.0
    %v1686 = vand.u32 %v269, 4294901760
    %v1687 = vsub.f32 %v269, %v1686
    %v1688 = vand.u32 %v1687, 4294901760
    %1689 = vmatpush1.msra.mxu0 %v1688
    %1690 = vmatprep.subr.mxu0 0.0
    %v1691 = vand.u32 %v270, 4294901760
    %v1692 = vsub.f32 %v270, %v1691
    %v1693 = vand.u32 %v1692, 4294901760
    %1694 = vmatpush1.msra.mxu0 %v1693
    %1695 = vmatprep.subr.mxu0 0.0
    %v1696 = vand.u32 %v271, 4294901760
    %v1697 = vsub.f32 %v271, %v1696
    %v1698 = vand.u32 %v1697, 4294901760
    %1699 = vmatpush1.msra.mxu0 %v1698
    %1700 = vmatprep.subr.mxu0 0.0
    %v1701 = vand.u32 %v272, 4294901760
    %v1702 = vsub.f32 %v272, %v1701
    %v1703 = vand.u32 %v1702, 4294901760
    %1704 = vmatpush1.msra.mxu0 %v1703
    %1705 = vmatprep.subr.mxu0 0.0
    %v1706 = vand.u32 %v273, 4294901760
    %v1707 = vsub.f32 %v273, %v1706
    %v1708 = vand.u32 %v1707, 4294901760
    %1709 = vmatpush1.msra.mxu0 %v1708
    %1710 = vmatprep.subr.mxu0 0.0
    %v1711 = vand.u32 %v274, 4294901760
    %v1712 = vsub.f32 %v274, %v1711
    %v1713 = vand.u32 %v1712, 4294901760
    %1714 = vmatpush1.msra.mxu0 %v1713
    %1715 = vmatprep.subr.mxu0 0.0
    %v1716 = vand.u32 %v275, 4294901760
    %v1717 = vsub.f32 %v275, %v1716
    %v1718 = vand.u32 %v1717, 4294901760
    %1719 = vmatpush1.msra.mxu0 %v1718
    %1720 = vmatprep.subr.mxu0 0.0
    %v1721 = vand.u32 %v276, 4294901760
    %v1722 = vsub.f32 %v276, %v1721
    %v1723 = vand.u32 %v1722, 4294901760
    %1724 = vmatpush1.msra.mxu0 %v1723
    %1725 = vmatprep.subr.mxu0 0.0
    %v1726 = vand.u32 %v277, 4294901760
    %v1727 = vsub.f32 %v277, %v1726
    %v1728 = vand.u32 %v1727, 4294901760
    %1729 = vmatpush1.msra.mxu0 %v1728
    %1730 = vmatprep.subr.mxu0 0.0
    %1731 = vmatpush1.msra.mxu0 0.0
    %1732 = vmatprep.subr.mxu0 0.0
    %1733 = vmatpush1.msra.mxu0 0.0
    %1734 = vmatprep.subr.mxu0 0.0
    %1735 = vmatpush1.msra.mxu0 0.0
    %1736 = vmatprep.subr.mxu0 0.0
    %1737 = vmatpush1.msra.mxu0 0.0
    %1738 = vmatprep.subr.mxu0 0.0
    %1739 = vmatpush1.msra.mxu0 0.0
    %1740 = vmatprep.subr.mxu0 0.0
    %1741 = vmatpush1.msra.mxu0 0.0
    %1742 = vmatprep.subr.mxu0 0.0
    %1743 = vmatpush1.msra.mxu0 0.0
    %1744 = vmatprep.subr.mxu0 0.0
    %1745 = vmatpush1.msra.mxu0 0.0
    %1746 = vmatprep.subr.mxu0 0.0
    %1747 = vmatpush1.msra.mxu0 0.0
    %1748 = vmatprep.subr.mxu0 0.0
    %1749 = vmatpush1.msra.mxu0 0.0
    %1750 = vmatprep.subr.mxu0 0.0
    %1751 = vmatpush1.msra.mxu0 0.0
    %1752 = vmatprep.subr.mxu0 0.0
    %1753 = vmatpush1.msra.mxu0 0.0
    %1754 = vmatprep.subr.mxu0 0.0
    %1755 = vmatpush1.msra.mxu0 0.0
    %1756 = vmatprep.subr.mxu0 0.0
    %1757 = vmatpush1.msra.mxu0 0.0
    %1758 = vmatprep.subr.mxu0 0.0
    %1759 = vmatpush1.msra.mxu0 0.0
    %1760 = vmatprep.subr.mxu0 0.0
    %1761 = vmatpush1.msra.mxu0 0.0
    %1762 = vmatprep.mubr.f32.mxu0 0.0
    %v1763 = vand.u32 %v157, 4294901760
    %1764 = vmatmul.mubr.f32.gmra.mrb[0].mxu0 %v1763
    %v1765 = vpop.f32.mrb[0].mxu0
    %v1766 = vadd.f32 %v1639, %v1765
    %v1767 = vpop.f32.mrb[0].mxu0
    %1768 = vmatprep.mubr.f32.mxu0 0.0
    %v1769 = vand.u32 %v261, 4294901760
    %1770 = vmatmul.mubr.f32.gmra.mrb[0].mxu0 %v1769
    %v1771 = vpop.f32.mrb[0].mxu0
    %v1772 = vadd.f32 %v1647, %v1771
    %v1773 = vpop.f32.mrb[0].mxu0
    %1774 = vdwg.mxu0
    %1775 = vmatprep.subr.mxu0 0.0
    %v1776 = vand.u32 %v262, 4294901760
    %1777 = vmatpush1.msra.mxu0 %v1776
    %1778 = vmatprep.subr.mxu0 0.0
    %v1779 = vand.u32 %v263, 4294901760
    %1780 = vmatpush1.msra.mxu0 %v1779
    %1781 = vmatprep.subr.mxu0 0.0
    %v1782 = vand.u32 %v264, 4294901760
    %1783 = vmatpush1.msra.mxu0 %v1782
    %1784 = vmatprep.subr.mxu0 0.0
    %v1785 = vand.u32 %v265, 4294901760
    %1786 = vmatpush1.msra.mxu0 %v1785
    %1787 = vmatprep.subr.mxu0 0.0
    %v1788 = vand.u32 %v266, 4294901760
    %1789 = vmatpush1.msra.mxu0 %v1788
    %1790 = vmatprep.subr.mxu0 0.0
    %v1791 = vand.u32 %v267, 4294901760
    %1792 = vmatpush1.msra.mxu0 %v1791
    %1793 = vmatprep.subr.mxu0 0.0
    %v1794 = vand.u32 %v268, 4294901760
    %1795 = vmatpush1.msra.mxu0 %v1794
    %1796 = vmatprep.subr.mxu0 0.0
    %v1797 = vand.u32 %v269, 4294901760
    %1798 = vmatpush1.msra.mxu0 %v1797
    %1799 = vmatprep.subr.mxu0 0.0
    %v1800 = vand.u32 %v270, 4294901760
    %1801 = vmatpush1.msra.mxu0 %v1800
    %1802 = vmatprep.subr.mxu0 0.0
    %v1803 = vand.u32 %v271, 4294901760
    %1804 = vmatpush1.msra.mxu0 %v1803
    %1805 = vmatprep.subr.mxu0 0.0
    %v1806 = vand.u32 %v272, 4294901760
    %1807 = vmatpush1.msra.mxu0 %v1806
    %1808 = vmatprep.subr.mxu0 0.0
    %v1809 = vand.u32 %v273, 4294901760
    %1810 = vmatpush1.msra.mxu0 %v1809
    %1811 = vmatprep.subr.mxu0 0.0
    %v1812 = vand.u32 %v274, 4294901760
    %1813 = vmatpush1.msra.mxu0 %v1812
    %1814 = vmatprep.subr.mxu0 0.0
    %v1815 = vand.u32 %v275, 4294901760
    %1816 = vmatpush1.msra.mxu0 %v1815
    %1817 = vmatprep.subr.mxu0 0.0
    %v1818 = vand.u32 %v276, 4294901760
    %1819 = vmatpush1.msra.mxu0 %v1818
    %1820 = vmatprep.subr.mxu0 0.0
    %v1821 = vand.u32 %v277, 4294901760
    %1822 = vmatpush1.msra.mxu0 %v1821
    %1823 = vmatprep.subr.mxu0 0.0
    %1824 = vmatpush1.msra.mxu0 0.0
    %1825 = vmatprep.subr.mxu0 0.0
    %1826 = vmatpush1.msra.mxu0 0.0
    %1827 = vmatprep.subr.mxu0 0.0
    %1828 = vmatpush1.msra.mxu0 0.0
    %1829 = vmatprep.subr.mxu0 0.0
    %1830 = vmatpush1.msra.mxu0 0.0
    %1831 = vmatprep.subr.mxu0 0.0
    %1832 = vmatpush1.msra.mxu0 0.0
    %1833 = vmatprep.subr.mxu0 0.0
    %1834 = vmatpush1.msra.mxu0 0.0
    %1835 = vmatprep.subr.mxu0 0.0
    %1836 = vmatpush1.msra.mxu0 0.0
    %1837 = vmatprep.subr.mxu0 0.0
    %1838 = vmatpush1.msra.mxu0 0.0
    %1839 = vmatprep.subr.mxu0 0.0
    %1840 = vmatpush1.msra.mxu0 0.0
    %1841 = vmatprep.subr.mxu0 0.0
    %1842 = vmatpush1.msra.mxu0 0.0
    %1843 = vmatprep.subr.mxu0 0.0
    %1844 = vmatpush1.msra.mxu0 0.0
    %1845 = vmatprep.subr.mxu0 0.0
    %1846 = vmatpush1.msra.mxu0 0.0
    %1847 = vmatprep.subr.mxu0 0.0
    %1848 = vmatpush1.msra.mxu0 0.0
    %1849 = vmatprep.subr.mxu0 0.0
    %1850 = vmatpush1.msra.mxu0 0.0
    %1851 = vmatprep.subr.mxu0 0.0
    %1852 = vmatpush1.msra.mxu0 0.0
    %1853 = vmatprep.subr.mxu0 0.0
    %1854 = vmatpush1.msra.mxu0 0.0
    %1855 = vmatprep.mubr.f32.mxu0 0.0
    %v1856 = vand.u32 %v157, 4294901760
    %1857 = vmatmul.mubr.f32.gmra.mrb[0].mxu0 %v1856
    %v1858 = vpop.f32.mrb[0].mxu0
    %v1859 = vadd.f32 %v1766, %v1858
    %v1860 = vpop.f32.mrb[0].mxu0
    %1861 = vmatprep.mubr.f32.mxu0 0.0
    %v1862 = vand.u32 %v261, 4294901760
    %1863 = vmatmul.mubr.f32.gmra.mrb[0].mxu0 %v1862
    %v1864 = vpop.f32.mrb[0].mxu0
    %v1865 = vadd.f32 %v1772, %v1864
    %v1866 = vpop.f32.mrb[0].mxu0
    %1867 = vdwg.mxu0
    %v1868 = vld [vmem:[%s4] sm:$0x1]
    %v1870 = vlaneseq
    %v1871 = vshrl.u32 %v1870, 7
    %v1872 = vsub.s32 0, %v1871
    %v1873 = vrot.slane %v1868, %v1872
    %v1875 = vadd.f32 %v1859, %v1873
    %v1876 = vadd.f32 %v1865, %v1873
    %v1877 = vtanh.pop %v1875
    %v1878 = vtanh.pop %v1876
    %v1879 = vld [vmem:[%s5] sm:$0xff]
    %v1880 = vld [vmem:[%s5 + $0x8] sm:$0xff]
    %v1881 = vld [vmem:[%s5 + $0x10] sm:$0xff]
    %v1882 = vld [vmem:[%s5 + $0x18] sm:$0xff]
    %v1883 = vld [vmem:[%s5 + $0x20] sm:$0xff]
    %v1884 = vld [vmem:[%s5 + $0x28] sm:$0xff]
    %v1885 = vld [vmem:[%s5 + $0x30] sm:$0xff]
    %v1886 = vld [vmem:[%s5 + $0x38] sm:$0xff]
    %v1887 = vld [vmem:[%s6] sm:$0x1]
    %v1889 = vlaneseq
    %v1890 = vshrl.u32 %v1889, 7
    %v1891 = vsub.s32 0, %v1890
    %v1892 = vrot.slane %v1887, %v1891
    %vm1894 = vcmask 523264
    %v1896 = vsel %vm1894, %v1877, 0
    %v1899 = vsel %vm1894, %v1878, 0
    %1901 = vmatprep.subr.mxu0 0.0
    %v1902 = vand.u32 %v1879, 4294901760
    %1903 = vmatpush1.msra.mxu0 %v1902
    %1904 = vmatprep.subr.mxu0 0.0
    %v1905 = vand.u32 %v1880, 4294901760
    %1906 = vmatpush1.msra.mxu0 %v1905
    %1907 = vmatprep.subr.mxu0 0.0
    %v1908 = vand.u32 %v1881, 4294901760
    %1909 = vmatpush1.msra.mxu0 %v1908
    %1910 = vmatprep.subr.mxu0 0.0
    %v1911 = vand.u32 %v1882, 4294901760
    %1912 = vmatpush1.msra.mxu0 %v1911
    %1913 = vmatprep.subr.mxu0 0.0
    %v1914 = vand.u32 %v1883, 4294901760
    %1915 = vmatpush1.msra.mxu0 %v1914
    %1916 = vmatprep.subr.mxu0 0.0
    %v1917 = vand.u32 %v1884, 4294901760
    %1918 = vmatpush1.msra.mxu0 %v1917
    %1919 = vmatprep.subr.mxu0 0.0
    %v1920 = vand.u32 %v1885, 4294901760
    %1921 = vmatpush1.msra.mxu0 %v1920
    %1922 = vmatprep.subr.mxu0 0.0
    %v1923 = vand.u32 %v1886, 4294901760
    %1924 = vmatpush1.msra.mxu0 %v1923
    %1925 = vmatprep.subr.mxu0 0.0
    %1926 = vmatpush1.msra.mxu0 0.0
    %1927 = vmatprep.subr.mxu0 0.0
    %1928 = vmatpush1.msra.mxu0 0.0
    %1929 = vmatprep.subr.mxu0 0.0
    %1930 = vmatpush1.msra.mxu0 0.0
    %1931 = vmatprep.subr.mxu0 0.0
    %1932 = vmatpush1.msra.mxu0 0.0
    %1933 = vmatprep.subr.mxu0 0.0
    %1934 = vmatpush1.msra.mxu0 0.0
    %1935 = vmatprep.subr.mxu0 0.0
    %1936 = vmatpush1.msra.mxu0 0.0
    %1937 = vmatprep.subr.mxu0 0.0
    %1938 = vmatpush1.msra.mxu0 0.0
    %1939 = vmatprep.subr.mxu0 0.0
    %1940 = vmatpush1.msra.mxu0 0.0
    %1941 = vmatprep.subr.mxu0 0.0
    %1942 = vmatpush1.msra.mxu0 0.0
    %1943 = vmatprep.subr.mxu0 0.0
    %1944 = vmatpush1.msra.mxu0 0.0
    %1945 = vmatprep.subr.mxu0 0.0
    %1946 = vmatpush1.msra.mxu0 0.0
    %1947 = vmatprep.subr.mxu0 0.0
    %1948 = vmatpush1.msra.mxu0 0.0
    %1949 = vmatprep.subr.mxu0 0.0
    %1950 = vmatpush1.msra.mxu0 0.0
    %1951 = vmatprep.subr.mxu0 0.0
    %1952 = vmatpush1.msra.mxu0 0.0
    %1953 = vmatprep.subr.mxu0 0.0
    %1954 = vmatpush1.msra.mxu0 0.0
    %1955 = vmatprep.subr.mxu0 0.0
    %1956 = vmatpush1.msra.mxu0 0.0
    %1957 = vmatprep.subr.mxu0 0.0
    %1958 = vmatpush1.msra.mxu0 0.0
    %1959 = vmatprep.subr.mxu0 0.0
    %1960 = vmatpush1.msra.mxu0 0.0
    %1961 = vmatprep.subr.mxu0 0.0
    %1962 = vmatpush1.msra.mxu0 0.0
    %1963 = vmatprep.subr.mxu0 0.0
    %1964 = vmatpush1.msra.mxu0 0.0
    %1965 = vmatprep.subr.mxu0 0.0
    %1966 = vmatpush1.msra.mxu0 0.0
    %1967 = vmatprep.subr.mxu0 0.0
    %1968 = vmatpush1.msra.mxu0 0.0
    %1969 = vmatprep.subr.mxu0 0.0
    %1970 = vmatpush1.msra.mxu0 0.0
    %1971 = vmatprep.subr.mxu0 0.0
    %1972 = vmatpush1.msra.mxu0 0.0
    %1973 = vmatprep.mubr.f32.mxu0 0.0
    %v1974 = vand.u32 %v1896, 4294901760
    %v1975 = vsub.f32 %v1896, %v1974
    %v1976 = vand.u32 %v1975, 4294901760
    %v1977 = vsub.f32 %v1975, %v1976
    %v1978 = vand.u32 %v1977, 4294901760
    %1979 = vmatmul.mubr.f32.gmra.mrb[0].mxu0 %v1978
    %v1980 = vpop.f32.mrb[0].mxu0
    %v1981 = vadd.f32 %v1892, %v1980
    %v1982 = vpop.f32.mrb[0].mxu0
    %1983 = vmatprep.mubr.f32.mxu0 0.0
    %v1984 = vand.u32 %v1899, 4294901760
    %v1985 = vsub.f32 %v1899, %v1984
    %v1986 = vand.u32 %v1985, 4294901760
    %v1987 = vsub.f32 %v1985, %v1986
    %v1988 = vand.u32 %v1987, 4294901760
    %1989 = vmatmul.mubr.f32.gmra.mrb[0].mxu0 %v1988
    %v1990 = vpop.f32.mrb[0].mxu0
    %v1991 = vadd.f32 %v1892, %v1990
    %v1992 = vpop.f32.mrb[0].mxu0
    %1993 = vdwg.mxu0
    %1994 = vmatprep.subr.mxu0 0.0
    %v1995 = vand.u32 %v1879, 4294901760
    %v1996 = vsub.f32 %v1879, %v1995
    %v1997 = vand.u32 %v1996, 4294901760
    %v1998 = vsub.f32 %v1996, %v1997
    %v1999 = vand.u32 %v1998, 4294901760
    %2000 = vmatpush1.msra.mxu0 %v1999
    %2001 = vmatprep.subr.mxu0 0.0
    %v2002 = vand.u32 %v1880, 4294901760
    %v2003 = vsub.f32 %v1880, %v2002
    %v2004 = vand.u32 %v2003, 4294901760
    %v2005 = vsub.f32 %v2003, %v2004
    %v2006 = vand.u32 %v2005, 4294901760
    %2007 = vmatpush1.msra.mxu0 %v2006
    %2008 = vmatprep.subr.mxu0 0.0
    %v2009 = vand.u32 %v1881, 4294901760
    %v2010 = vsub.f32 %v1881, %v2009
    %v2011 = vand.u32 %v2010, 4294901760
    %v2012 = vsub.f32 %v2010, %v2011
    %v2013 = vand.u32 %v2012, 4294901760
    %2014 = vmatpush1.msra.mxu0 %v2013
    %2015 = vmatprep.subr.mxu0 0.0
    %v2016 = vand.u32 %v1882, 4294901760
    %v2017 = vsub.f32 %v1882, %v2016
    %v2018 = vand.u32 %v2017, 4294901760
    %v2019 = vsub.f32 %v2017, %v2018
    %v2020 = vand.u32 %v2019, 4294901760
    %2021 = vmatpush1.msra.mxu0 %v2020
    %2022 = vmatprep.subr.mxu0 0.0
    %v2023 = vand.u32 %v1883, 4294901760
    %v2024 = vsub.f32 %v1883, %v2023
    %v2025 = vand.u32 %v2024, 4294901760
    %v2026 = vsub.f32 %v2024, %v2025
    %v2027 = vand.u32 %v2026, 4294901760
    %2028 = vmatpush1.msra.mxu0 %v2027
    %2029 = vmatprep.subr.mxu0 0.0
    %v2030 = vand.u32 %v1884, 4294901760
    %v2031 = vsub.f32 %v1884, %v2030
    %v2032 = vand.u32 %v2031, 4294901760
    %v2033 = vsub.f32 %v2031, %v2032
    %v2034 = vand.u32 %v2033, 4294901760
    %2035 = vmatpush1.msra.mxu0 %v2034
    %2036 = vmatprep.subr.mxu0 0.0
    %v2037 = vand.u32 %v1885, 4294901760
    %v2038 = vsub.f32 %v1885, %v2037
    %v2039 = vand.u32 %v2038, 4294901760
    %v2040 = vsub.f32 %v2038, %v2039
    %v2041 = vand.u32 %v2040, 4294901760
    %2042 = vmatpush1.msra.mxu0 %v2041
    %2043 = vmatprep.subr.mxu0 0.0
    %v2044 = vand.u32 %v1886, 4294901760
    %v2045 = vsub.f32 %v1886, %v2044
    %v2046 = vand.u32 %v2045, 4294901760
    %v2047 = vsub.f32 %v2045, %v2046
    %v2048 = vand.u32 %v2047, 4294901760
    %2049 = vmatpush1.msra.mxu0 %v2048
    %2050 = vmatprep.subr.mxu0 0.0
    %2051 = vmatpush1.msra.mxu0 0.0
    %2052 = vmatprep.subr.mxu0 0.0
    %2053 = vmatpush1.msra.mxu0 0.0
    %2054 = vmatprep.subr.mxu0 0.0
    %2055 = vmatpush1.msra.mxu0 0.0
    %2056 = vmatprep.subr.mxu0 0.0
    %2057 = vmatpush1.msra.mxu0 0.0
    %2058 = vmatprep.subr.mxu0 0.0
    %2059 = vmatpush1.msra.mxu0 0.0
    %2060 = vmatprep.subr.mxu0 0.0
    %2061 = vmatpush1.msra.mxu0 0.0
    %2062 = vmatprep.subr.mxu0 0.0
    %2063 = vmatpush1.msra.mxu0 0.0
    %2064 = vmatprep.subr.mxu0 0.0
    %2065 = vmatpush1.msra.mxu0 0.0
    %2066 = vmatprep.subr.mxu0 0.0
    %2067 = vmatpush1.msra.mxu0 0.0
    %2068 = vmatprep.subr.mxu0 0.0
    %2069 = vmatpush1.msra.mxu0 0.0
    %2070 = vmatprep.subr.mxu0 0.0
    %2071 = vmatpush1.msra.mxu0 0.0
    %2072 = vmatprep.subr.mxu0 0.0
    %2073 = vmatpush1.msra.mxu0 0.0
    %2074 = vmatprep.subr.mxu0 0.0
    %2075 = vmatpush1.msra.mxu0 0.0
    %2076 = vmatprep.subr.mxu0 0.0
    %2077 = vmatpush1.msra.mxu0 0.0
    %2078 = vmatprep.subr.mxu0 0.0
    %2079 = vmatpush1.msra.mxu0 0.0
    %2080 = vmatprep.subr.mxu0 0.0
    %2081 = vmatpush1.msra.mxu0 0.0
    %2082 = vmatprep.subr.mxu0 0.0
    %2083 = vmatpush1.msra.mxu0 0.0
    %2084 = vmatprep.subr.mxu0 0.0
    %2085 = vmatpush1.msra.mxu0 0.0
    %2086 = vmatprep.subr.mxu0 0.0
    %2087 = vmatpush1.msra.mxu0 0.0
    %2088 = vmatprep.subr.mxu0 0.0
    %2089 = vmatpush1.msra.mxu0 0.0
    %2090 = vmatprep.subr.mxu0 0.0
    %2091 = vmatpush1.msra.mxu0 0.0
    %2092 = vmatprep.subr.mxu0 0.0
    %2093 = vmatpush1.msra.mxu0 0.0
    %2094 = vmatprep.subr.mxu0 0.0
    %2095 = vmatpush1.msra.mxu0 0.0
    %2096 = vmatprep.subr.mxu0 0.0
    %2097 = vmatpush1.msra.mxu0 0.0
    %2098 = vmatprep.mubr.f32.mxu0 0.0
    %v2099 = vand.u32 %v1896, 4294901760
    %2100 = vmatmul.mubr.f32.gmra.mrb[0].mxu0 %v2099
    %v2101 = vpop.f32.mrb[0].mxu0
    %v2102 = vadd.f32 %v1981, %v2101
    %v2103 = vpop.f32.mrb[0].mxu0
    %2104 = vmatprep.mubr.f32.mxu0 0.0
    %v2105 = vand.u32 %v1899, 4294901760
    %2106 = vmatmul.mubr.f32.gmra.mrb[0].mxu0 %v2105
    %v2107 = vpop.f32.mrb[0].mxu0
    %v2108 = vadd.f32 %v1991, %v2107
    %v2109 = vpop.f32.mrb[0].mxu0
    %2110 = vdwg.mxu0
    %2111 = vmatprep.subr.mxu0 0.0
    %v2112 = vand.u32 %v1879, 4294901760
    %v2113 = vsub.f32 %v1879, %v2112
    %2114 = vmatpush1.msra.mxu0 %v2113
    %2115 = vmatprep.subr.mxu0 0.0
    %v2116 = vand.u32 %v1880, 4294901760
    %v2117 = vsub.f32 %v1880, %v2116
    %2118 = vmatpush1.msra.mxu0 %v2117
    %2119 = vmatprep.subr.mxu0 0.0
    %v2120 = vand.u32 %v1881, 4294901760
    %v2121 = vsub.f32 %v1881, %v2120
    %2122 = vmatpush1.msra.mxu0 %v2121
    %2123 = vmatprep.subr.mxu0 0.0
    %v2124 = vand.u32 %v1882, 4294901760
    %v2125 = vsub.f32 %v1882, %v2124
    %2126 = vmatpush1.msra.mxu0 %v2125
    %2127 = vmatprep.subr.mxu0 0.0
    %v2128 = vand.u32 %v1883, 4294901760
    %v2129 = vsub.f32 %v1883, %v2128
    %2130 = vmatpush1.msra.mxu0 %v2129
    %2131 = vmatprep.subr.mxu0 0.0
    %v2132 = vand.u32 %v1884, 4294901760
    %v2133 = vsub.f32 %v1884, %v2132
    %2134 = vmatpush1.msra.mxu0 %v2133
    %2135 = vmatprep.subr.mxu0 0.0
    %v2136 = vand.u32 %v1885, 4294901760
    %v2137 = vsub.f32 %v1885, %v2136
    %2138 = vmatpush1.msra.mxu0 %v2137
    %2139 = vmatprep.subr.mxu0 0.0
    %v2140 = vand.u32 %v1886, 4294901760
    %v2141 = vsub.f32 %v1886, %v2140
    %2142 = vmatpush1.msra.mxu0 %v2141
    %2143 = vmatprep.subr.mxu0 0.0
    %2144 = vmatpush1.msra.mxu0 0.0
    %2145 = vmatprep.subr.mxu0 0.0
    %2146 = vmatpush1.msra.mxu0 0.0
    %2147 = vmatprep.subr.mxu0 0.0
    %2148 = vmatpush1.msra.mxu0 0.0
    %2149 = vmatprep.subr.mxu0 0.0
    %2150 = vmatpush1.msra.mxu0 0.0
    %2151 = vmatprep.subr.mxu0 0.0
    %2152 = vmatpush1.msra.mxu0 0.0
    %2153 = vmatprep.subr.mxu0 0.0
    %2154 = vmatpush1.msra.mxu0 0.0
    %2155 = vmatprep.subr.mxu0 0.0
    %2156 = vmatpush1.msra.mxu0 0.0
    %2157 = vmatprep.subr.mxu0 0.0
    %2158 = vmatpush1.msra.mxu0 0.0
    %2159 = vmatprep.subr.mxu0 0.0
    %2160 = vmatpush1.msra.mxu0 0.0
    %2161 = vmatprep.subr.mxu0 0.0
    %2162 = vmatpush1.msra.mxu0 0.0
    %2163 = vmatprep.subr.mxu0 0.0
    %2164 = vmatpush1.msra.mxu0 0.0
    %2165 = vmatprep.subr.mxu0 0.0
    %2166 = vmatpush1.msra.mxu0 0.0
    %2167 = vmatprep.subr.mxu0 0.0
    %2168 = vmatpush1.msra.mxu0 0.0
    %2169 = vmatprep.subr.mxu0 0.0
    %2170 = vmatpush1.msra.mxu0 0.0
    %2171 = vmatprep.subr.mxu0 0.0
    %2172 = vmatpush1.msra.mxu0 0.0
    %2173 = vmatprep.subr.mxu0 0.0
    %2174 = vmatpush1.msra.mxu0 0.0
    %2175 = vmatprep.subr.mxu0 0.0
    %2176 = vmatpush1.msra.mxu0 0.0
    %2177 = vmatprep.subr.mxu0 0.0
    %2178 = vmatpush1.msra.mxu0 0.0
    %2179 = vmatprep.subr.mxu0 0.0
    %2180 = vmatpush1.msra.mxu0 0.0
    %2181 = vmatprep.subr.mxu0 0.0
    %2182 = vmatpush1.msra.mxu0 0.0
    %2183 = vmatprep.subr.mxu0 0.0
    %2184 = vmatpush1.msra.mxu0 0.0
    %2185 = vmatprep.subr.mxu0 0.0
    %2186 = vmatpush1.msra.mxu0 0.0
    %2187 = vmatprep.subr.mxu0 0.0
    %2188 = vmatpush1.msra.mxu0 0.0
    %2189 = vmatprep.subr.mxu0 0.0
    %2190 = vmatpush1.msra.mxu0 0.0
    %2191 = vmatprep.mubr.f32.mxu0 0.0
    %v2192 = vand.u32 %v1896, 4294901760
    %v2193 = vsub.f32 %v1896, %v2192
    %2194 = vmatmul.mubr.f32.gmra.mrb[0].mxu0 %v2193
    %v2195 = vpop.f32.mrb[0].mxu0
    %v2196 = vadd.f32 %v2102, %v2195
    %v2197 = vpop.f32.mrb[0].mxu0
    %2198 = vmatprep.mubr.f32.mxu0 0.0
    %v2199 = vand.u32 %v1899, 4294901760
    %v2200 = vsub.f32 %v1899, %v2199
    %2201 = vmatmul.mubr.f32.gmra.mrb[0].mxu0 %v2200
    %v2202 = vpop.f32.mrb[0].mxu0
    %v2203 = vadd.f32 %v2108, %v2202
    %v2204 = vpop.f32.mrb[0].mxu0
    %2205 = vdwg.mxu0
    %2206 = vmatprep.subr.mxu0 0.0
    %v2207 = vand.u32 %v1879, 4294901760
    %2208 = vmatpush1.msra.mxu0 %v2207
    %2209 = vmatprep.subr.mxu0 0.0
    %v2210 = vand.u32 %v1880, 4294901760
    %2211 = vmatpush1.msra.mxu0 %v2210
    %2212 = vmatprep.subr.mxu0 0.0
    %v2213 = vand.u32 %v1881, 4294901760
    %2214 = vmatpush1.msra.mxu0 %v2213
    %2215 = vmatprep.subr.mxu0 0.0
    %v2216 = vand.u32 %v1882, 4294901760
    %2217 = vmatpush1.msra.mxu0 %v2216
    %2218 = vmatprep.subr.mxu0 0.0
    %v2219 = vand.u32 %v1883, 4294901760
    %2220 = vmatpush1.msra.mxu0 %v2219
    %2221 = vmatprep.subr.mxu0 0.0
    %v2222 = vand.u32 %v1884, 4294901760
    %2223 = vmatpush1.msra.mxu0 %v2222
    %2224 = vmatprep.subr.mxu0 0.0
    %v2225 = vand.u32 %v1885, 4294901760
    %2226 = vmatpush1.msra.mxu0 %v2225
    %2227 = vmatprep.subr.mxu0 0.0
    %v2228 = vand.u32 %v1886, 4294901760
    %2229 = vmatpush1.msra.mxu0 %v2228
    %2230 = vmatprep.subr.mxu0 0.0
    %2231 = vmatpush1.msra.mxu0 0.0
    %2232 = vmatprep.subr.mxu0 0.0
    %2233 = vmatpush1.msra.mxu0 0.0
    %2234 = vmatprep.subr.mxu0 0.0
    %2235 = vmatpush1.msra.mxu0 0.0
    %2236 = vmatprep.subr.mxu0 0.0
    %2237 = vmatpush1.msra.mxu0 0.0
    %2238 = vmatprep.subr.mxu0 0.0
    %2239 = vmatpush1.msra.mxu0 0.0
    %2240 = vmatprep.subr.mxu0 0.0
    %2241 = vmatpush1.msra.mxu0 0.0
    %2242 = vmatprep.subr.mxu0 0.0
    %2243 = vmatpush1.msra.mxu0 0.0
    %2244 = vmatprep.subr.mxu0 0.0
    %2245 = vmatpush1.msra.mxu0 0.0
    %2246 = vmatprep.subr.mxu0 0.0
    %2247 = vmatpush1.msra.mxu0 0.0
    %2248 = vmatprep.subr.mxu0 0.0
    %2249 = vmatpush1.msra.mxu0 0.0
    %2250 = vmatprep.subr.mxu0 0.0
    %2251 = vmatpush1.msra.mxu0 0.0
    %2252 = vmatprep.subr.mxu0 0.0
    %2253 = vmatpush1.msra.mxu0 0.0
    %2254 = vmatprep.subr.mxu0 0.0
    %2255 = vmatpush1.msra.mxu0 0.0
    %2256 = vmatprep.subr.mxu0 0.0
    %2257 = vmatpush1.msra.mxu0 0.0
    %2258 = vmatprep.subr.mxu0 0.0
    %2259 = vmatpush1.msra.mxu0 0.0
    %2260 = vmatprep.subr.mxu0 0.0
    %2261 = vmatpush1.msra.mxu0 0.0
    %2262 = vmatprep.subr.mxu0 0.0
    %2263 = vmatpush1.msra.mxu0 0.0
    %2264 = vmatprep.subr.mxu0 0.0
    %2265 = vmatpush1.msra.mxu0 0.0
    %2266 = vmatprep.subr.mxu0 0.0
    %2267 = vmatpush1.msra.mxu0 0.0
    %2268 = vmatprep.subr.mxu0 0.0
    %2269 = vmatpush1.msra.mxu0 0.0
    %2270 = vmatprep.subr.mxu0 0.0
    %2271 = vmatpush1.msra.mxu0 0.0
    %2272 = vmatprep.subr.mxu0 0.0
    %2273 = vmatpush1.msra.mxu0 0.0
    %2274 = vmatprep.subr.mxu0 0.0
    %2275 = vmatpush1.msra.mxu0 0.0
    %2276 = vmatprep.subr.mxu0 0.0
    %2277 = vmatpush1.msra.mxu0 0.0
    %2278 = vmatprep.mubr.f32.mxu0 0.0
    %v2279 = vand.u32 %v1896, 4294901760
    %v2280 = vsub.f32 %v1896, %v2279
    %v2281 = vand.u32 %v2280, 4294901760
    %2282 = vmatmul.mubr.f32.gmra.mrb[0].mxu0 %v2281
    %v2283 = vpop.f32.mrb[0].mxu0
    %v2284 = vadd.f32 %v2196, %v2283
    %v2285 = vpop.f32.mrb[0].mxu0
    %2286 = vmatprep.mubr.f32.mxu0 0.0
    %v2287 = vand.u32 %v1899, 4294901760
    %v2288 = vsub.f32 %v1899, %v2287
    %v2289 = vand.u32 %v2288, 4294901760
    %2290 = vmatmul.mubr.f32.gmra.mrb[0].mxu0 %v2289
    %v2291 = vpop.f32.mrb[0].mxu0
    %v2292 = vadd.f32 %v2203, %v2291
    %v2293 = vpop.f32.mrb[0].mxu0
    %2294 = vdwg.mxu0
    %2295 = vmatprep.subr.mxu0 0.0
    %v2296 = vand.u32 %v1879, 4294901760
    %v2297 = vsub.f32 %v1879, %v2296
    %v2298 = vand.u32 %v2297, 4294901760
    %2299 = vmatpush1.msra.mxu0 %v2298
    %2300 = vmatprep.subr.mxu0 0.0
    %v2301 = vand.u32 %v1880, 4294901760
    %v2302 = vsub.f32 %v1880, %v2301
    %v2303 = vand.u32 %v2302, 4294901760
    %2304 = vmatpush1.msra.mxu0 %v2303
    %2305 = vmatprep.subr.mxu0 0.0
    %v2306 = vand.u32 %v1881, 4294901760
    %v2307 = vsub.f32 %v1881, %v2306
    %v2308 = vand.u32 %v2307, 4294901760
    %2309 = vmatpush1.msra.mxu0 %v2308
    %2310 = vmatprep.subr.mxu0 0.0
    %v2311 = vand.u32 %v1882, 4294901760
    %v2312 = vsub.f32 %v1882, %v2311
    %v2313 = vand.u32 %v2312, 4294901760
    %2314 = vmatpush1.msra.mxu0 %v2313
    %2315 = vmatprep.subr.mxu0 0.0
    %v2316 = vand.u32 %v1883, 4294901760
    %v2317 = vsub.f32 %v1883, %v2316
    %v2318 = vand.u32 %v2317, 4294901760
    %2319 = vmatpush1.msra.mxu0 %v2318
    %2320 = vmatprep.subr.mxu0 0.0
    %v2321 = vand.u32 %v1884, 4294901760
    %v2322 = vsub.f32 %v1884, %v2321
    %v2323 = vand.u32 %v2322, 4294901760
    %2324 = vmatpush1.msra.mxu0 %v2323
    %2325 = vmatprep.subr.mxu0 0.0
    %v2326 = vand.u32 %v1885, 4294901760
    %v2327 = vsub.f32 %v1885, %v2326
    %v2328 = vand.u32 %v2327, 4294901760
    %2329 = vmatpush1.msra.mxu0 %v2328
    %2330 = vmatprep.subr.mxu0 0.0
    %v2331 = vand.u32 %v1886, 4294901760
    %v2332 = vsub.f32 %v1886, %v2331
    %v2333 = vand.u32 %v2332, 4294901760
    %2334 = vmatpush1.msra.mxu0 %v2333
    %2335 = vmatprep.subr.mxu0 0.0
    %2336 = vmatpush1.msra.mxu0 0.0
    %2337 = vmatprep.subr.mxu0 0.0
    %2338 = vmatpush1.msra.mxu0 0.0
    %2339 = vmatprep.subr.mxu0 0.0
    %2340 = vmatpush1.msra.mxu0 0.0
    %2341 = vmatprep.subr.mxu0 0.0
    %2342 = vmatpush1.msra.mxu0 0.0
    %2343 = vmatprep.subr.mxu0 0.0
    %2344 = vmatpush1.msra.mxu0 0.0
    %2345 = vmatprep.subr.mxu0 0.0
    %2346 = vmatpush1.msra.mxu0 0.0
    %2347 = vmatprep.subr.mxu0 0.0
    %2348 = vmatpush1.msra.mxu0 0.0
    %2349 = vmatprep.subr.mxu0 0.0
    %2350 = vmatpush1.msra.mxu0 0.0
    %2351 = vmatprep.subr.mxu0 0.0
    %2352 = vmatpush1.msra.mxu0 0.0
    %2353 = vmatprep.subr.mxu0 0.0
    %2354 = vmatpush1.msra.mxu0 0.0
    %2355 = vmatprep.subr.mxu0 0.0
    %2356 = vmatpush1.msra.mxu0 0.0
    %2357 = vmatprep.subr.mxu0 0.0
    %2358 = vmatpush1.msra.mxu0 0.0
    %2359 = vmatprep.subr.mxu0 0.0
    %2360 = vmatpush1.msra.mxu0 0.0
    %2361 = vmatprep.subr.mxu0 0.0
    %2362 = vmatpush1.msra.mxu0 0.0
    %2363 = vmatprep.subr.mxu0 0.0
    %2364 = vmatpush1.msra.mxu0 0.0
    %2365 = vmatprep.subr.mxu0 0.0
    %2366 = vmatpush1.msra.mxu0 0.0
    %2367 = vmatprep.subr.mxu0 0.0
    %2368 = vmatpush1.msra.mxu0 0.0
    %2369 = vmatprep.subr.mxu0 0.0
    %2370 = vmatpush1.msra.mxu0 0.0
    %2371 = vmatprep.subr.mxu0 0.0
    %2372 = vmatpush1.msra.mxu0 0.0
    %2373 = vmatprep.subr.mxu0 0.0
    %2374 = vmatpush1.msra.mxu0 0.0
    %2375 = vmatprep.subr.mxu0 0.0
    %2376 = vmatpush1.msra.mxu0 0.0
    %2377 = vmatprep.subr.mxu0 0.0
    %2378 = vmatpush1.msra.mxu0 0.0
    %2379 = vmatprep.subr.mxu0 0.0
    %2380 = vmatpush1.msra.mxu0 0.0
    %2381 = vmatprep.subr.mxu0 0.0
    %2382 = vmatpush1.msra.mxu0 0.0
    %2383 = vmatprep.mubr.f32.mxu0 0.0
    %v2384 = vand.u32 %v1896, 4294901760
    %2385 = vmatmul.mubr.f32.gmra.mrb[0].mxu0 %v2384
    %v2386 = vpop.f32.mrb[0].mxu0
    %v2387 = vadd.f32 %v2284, %v2386
    %v2388 = vpop.f32.mrb[0].mxu0
    %2389 = vmatprep.mubr.f32.mxu0 0.0
    %v2390 = vand.u32 %v1899, 4294901760
    %2391 = vmatmul.mubr.f32.gmra.mrb[0].mxu0 %v2390
    %v2392 = vpop.f32.mrb[0].mxu0
    %v2393 = vadd.f32 %v2292, %v2392
    %v2394 = vpop.f32.mrb[0].mxu0
    %2395 = vdwg.mxu0
    %2396 = vmatprep.subr.mxu0 0.0
    %v2397 = vand.u32 %v1879, 4294901760
    %2398 = vmatpush1.msra.mxu0 %v2397
    %2399 = vmatprep.subr.mxu0 0.0
    %v2400 = vand.u32 %v1880, 4294901760
    %2401 = vmatpush1.msra.mxu0 %v2400
    %2402 = vmatprep.subr.mxu0 0.0
    %v2403 = vand.u32 %v1881, 4294901760
    %2404 = vmatpush1.msra.mxu0 %v2403
    %2405 = vmatprep.subr.mxu0 0.0
    %v2406 = vand.u32 %v1882, 4294901760
    %2407 = vmatpush1.msra.mxu0 %v2406
    %2408 = vmatprep.subr.mxu0 0.0
    %v2409 = vand.u32 %v1883, 4294901760
    %2410 = vmatpush1.msra.mxu0 %v2409
    %2411 = vmatprep.subr.mxu0 0.0
    %v2412 = vand.u32 %v1884, 4294901760
    %2413 = vmatpush1.msra.mxu0 %v2412
    %2414 = vmatprep.subr.mxu0 0.0
    %v2415 = vand.u32 %v1885, 4294901760
    %2416 = vmatpush1.msra.mxu0 %v2415
    %2417 = vmatprep.subr.mxu0 0.0
    %v2418 = vand.u32 %v1886, 4294901760
    %2419 = vmatpush1.msra.mxu0 %v2418
    %2420 = vmatprep.subr.mxu0 0.0
    %2421 = vmatpush1.msra.mxu0 0.0
    %2422 = vmatprep.subr.mxu0 0.0
    %2423 = vmatpush1.msra.mxu0 0.0
    %2424 = vmatprep.subr.mxu0 0.0
    %2425 = vmatpush1.msra.mxu0 0.0
    %2426 = vmatprep.subr.mxu0 0.0
    %2427 = vmatpush1.msra.mxu0 0.0
    %2428 = vmatprep.subr.mxu0 0.0
    %2429 = vmatpush1.msra.mxu0 0.0
    %2430 = vmatprep.subr.mxu0 0.0
    %2431 = vmatpush1.msra.mxu0 0.0
    %2432 = vmatprep.subr.mxu0 0.0
    %2433 = vmatpush1.msra.mxu0 0.0
    %2434 = vmatprep.subr.mxu0 0.0
    %2435 = vmatpush1.msra.mxu0 0.0
    %2436 = vmatprep.subr.mxu0 0.0
    %2437 = vmatpush1.msra.mxu0 0.0
    %2438 = vmatprep.subr.mxu0 0.0
    %2439 = vmatpush1.msra.mxu0 0.0
    %2440 = vmatprep.subr.mxu0 0.0
    %2441 = vmatpush1.msra.mxu0 0.0
    %2442 = vmatprep.subr.mxu0 0.0
    %2443 = vmatpush1.msra.mxu0 0.0
    %2444 = vmatprep.subr.mxu0 0.0
    %2445 = vmatpush1.msra.mxu0 0.0
    %2446 = vmatprep.subr.mxu0 0.0
    %2447 = vmatpush1.msra.mxu0 0.0
    %2448 = vmatprep.subr.mxu0 0.0
    %2449 = vmatpush1.msra.mxu0 0.0
    %2450 = vmatprep.subr.mxu0 0.0
    %2451 = vmatpush1.msra.mxu0 0.0
    %2452 = vmatprep.subr.mxu0 0.0
    %2453 = vmatpush1.msra.mxu0 0.0
    %2454 = vmatprep.subr.mxu0 0.0
    %2455 = vmatpush1.msra.mxu0 0.0
    %2456 = vmatprep.subr.mxu0 0.0
    %2457 = vmatpush1.msra.mxu0 0.0
    %2458 = vmatprep.subr.mxu0 0.0
    %2459 = vmatpush1.msra.mxu0 0.0
    %2460 = vmatprep.subr.mxu0 0.0
    %2461 = vmatpush1.msra.mxu0 0.0
    %2462 = vmatprep.subr.mxu0 0.0
    %2463 = vmatpush1.msra.mxu0 0.0
    %2464 = vmatprep.subr.mxu0 0.0
    %2465 = vmatpush1.msra.mxu0 0.0
    %2466 = vmatprep.subr.mxu0 0.0
    %2467 = vmatpush1.msra.mxu0 0.0
    %2468 = vmatprep.mubr.f32.mxu0 0.0
    %v2469 = vand.u32 %v1896, 4294901760
    %2470 = vmatmul.mubr.f32.gmra.mrb[0].mxu0 %v2469
    %v2471 = vpop.f32.mrb[0].mxu0
    %v2472 = vadd.f32 %v2387, %v2471
    %v2473 = vpop.f32.mrb[0].mxu0
    %2474 = vmatprep.mubr.f32.mxu0 0.0
    %v2475 = vand.u32 %v1899, 4294901760
    %2476 = vmatmul.mubr.f32.gmra.mrb[0].mxu0 %v2475
    %v2477 = vpop.f32.mrb[0].mxu0
    %v2478 = vadd.f32 %v2393, %v2477
    %v2479 = vpop.f32.mrb[0].mxu0
    %2480 = vdwg.mxu0
    %v2481 = vtanh.pop %v2472
    %v2482 = vtanh.pop %v2478
    %v2483 = vld [vmem:[%s7] sm:$0xff]
    %v2484 = vld [vmem:[%s7 + $0x8] sm:$0xff]
    %v2485 = vld [vmem:[%s7 + $0x10] sm:$0xff]
    %v2486 = vld [vmem:[%s7 + $0x18] sm:$0xff]
    %v2487 = vld [vmem:[%s8] sm:$0x1]
    %v2489 = vlaneseq
    %v2490 = vshrl.u32 %v2489, 7
    %v2491 = vsub.s32 0, %v2490
    %v2492 = vrot.slane %v2487, %v2491
    %vm2494 = vcmask 261120
    %v2496 = vsel %vm2494, %v2481, 0
    %v2499 = vsel %vm2494, %v2482, 0
    %2501 = vmatprep.subr.mxu0 0.0
    %v2502 = vand.u32 %v2483, 4294901760
    %2503 = vmatpush1.msra.mxu0 %v2502
    %2504 = vmatprep.subr.mxu0 0.0
    %v2505 = vand.u32 %v2484, 4294901760
    %2506 = vmatpush1.msra.mxu0 %v2505
    %2507 = vmatprep.subr.mxu0 0.0
    %v2508 = vand.u32 %v2485, 4294901760
    %2509 = vmatpush1.msra.mxu0 %v2508
    %2510 = vmatprep.subr.mxu0 0.0
    %v2511 = vand.u32 %v2486, 4294901760
    %2512 = vmatpush1.msra.mxu0 %v2511
    %2513 = vmatprep.subr.mxu0 0.0
    %2514 = vmatpush1.msra.mxu0 0.0
    %2515 = vmatprep.subr.mxu0 0.0
    %2516 = vmatpush1.msra.mxu0 0.0
    %2517 = vmatprep.subr.mxu0 0.0
    %2518 = vmatpush1.msra.mxu0 0.0
    %2519 = vmatprep.subr.mxu0 0.0
    %2520 = vmatpush1.msra.mxu0 0.0
    %2521 = vmatprep.subr.mxu0 0.0
    %2522 = vmatpush1.msra.mxu0 0.0
    %2523 = vmatprep.subr.mxu0 0.0
    %2524 = vmatpush1.msra.mxu0 0.0
    %2525 = vmatprep.subr.mxu0 0.0
    %2526 = vmatpush1.msra.mxu0 0.0
    %2527 = vmatprep.subr.mxu0 0.0
    %2528 = vmatpush1.msra.mxu0 0.0
    %2529 = vmatprep.subr.mxu0 0.0
    %2530 = vmatpush1.msra.mxu0 0.0
    %2531 = vmatprep.subr.mxu0 0.0
    %2532 = vmatpush1.msra.mxu0 0.0
    %2533 = vmatprep.subr.mxu0 0.0
    %2534 = vmatpush1.msra.mxu0 0.0
    %2535 = vmatprep.subr.mxu0 0.0
    %2536 = vmatpush1.msra.mxu0 0.0
    %2537 = vmatprep.subr.mxu0 0.0
    %2538 = vmatpush1.msra.mxu0 0.0
    %2539 = vmatprep.subr.mxu0 0.0
    %2540 = vmatpush1.msra.mxu0 0.0
    %2541 = vmatprep.subr.mxu0 0.0
    %2542 = vmatpush1.msra.mxu0 0.0
    %2543 = vmatprep.subr.mxu0 0.0
    %2544 = vmatpush1.msra.mxu0 0.0
    %2545 = vmatprep.subr.mxu0 0.0
    %2546 = vmatpush1.msra.mxu0 0.0
    %2547 = vmatprep.subr.mxu0 0.0
    %2548 = vmatpush1.msra.mxu0 0.0
    %2549 = vmatprep.subr.mxu0 0.0
    %2550 = vmatpush1.msra.mxu0 0.0
    %2551 = vmatprep.subr.mxu0 0.0
    %2552 = vmatpush1.msra.mxu0 0.0
    %2553 = vmatprep.subr.mxu0 0.0
    %2554 = vmatpush1.msra.mxu0 0.0
    %2555 = vmatprep.subr.mxu0 0.0
    %2556 = vmatpush1.msra.mxu0 0.0
    %2557 = vmatprep.subr.mxu0 0.0
    %2558 = vmatpush1.msra.mxu0 0.0
    %2559 = vmatprep.subr.mxu0 0.0
    %2560 = vmatpush1.msra.mxu0 0.0
    %2561 = vmatprep.subr.mxu0 0.0
    %2562 = vmatpush1.msra.mxu0 0.0
    %2563 = vmatprep.subr.mxu0 0.0
    %2564 = vmatpush1.msra.mxu0 0.0
    %2565 = vmatprep.subr.mxu0 0.0
    %2566 = vmatpush1.msra.mxu0 0.0
    %2567 = vmatprep.subr.mxu0 0.0
    %2568 = vmatpush1.msra.mxu0 0.0
    %2569 = vmatprep.mubr.f32.mxu0 0.0
    %v2570 = vand.u32 %v2496, 4294901760
    %v2571 = vsub.f32 %v2496, %v2570
    %v2572 = vand.u32 %v2571, 4294901760
    %v2573 = vsub.f32 %v2571, %v2572
    %v2574 = vand.u32 %v2573, 4294901760
    %2575 = vmatmul.mubr.f32.gmra.mrb[0].mxu0 %v2574
    %v2576 = vpop.f32.mrb[0].mxu0
    %v2577 = vadd.f32 %v2492, %v2576
    %v2578 = vpop.f32.mrb[0].mxu0
    %2579 = vmatprep.mubr.f32.mxu0 0.0
    %v2580 = vand.u32 %v2499, 4294901760
    %v2581 = vsub.f32 %v2499, %v2580
    %v2582 = vand.u32 %v2581, 4294901760
    %v2583 = vsub.f32 %v2581, %v2582
    %v2584 = vand.u32 %v2583, 4294901760
    %2585 = vmatmul.mubr.f32.gmra.mrb[0].mxu0 %v2584
    %v2586 = vpop.f32.mrb[0].mxu0
    %v2587 = vadd.f32 %v2492, %v2586
    %v2588 = vpop.f32.mrb[0].mxu0
    %2589 = vdwg.mxu0
    %2590 = vmatprep.subr.mxu0 0.0
    %v2591 = vand.u32 %v2483, 4294901760
    %v2592 = vsub.f32 %v2483, %v2591
    %v2593 = vand.u32 %v2592, 4294901760
    %v2594 = vsub.f32 %v2592, %v2593
    %v2595 = vand.u32 %v2594, 4294901760
    %2596 = vmatpush1.msra.mxu0 %v2595
    %2597 = vmatprep.subr.mxu0 0.0
    %v2598 = vand.u32 %v2484, 4294901760
    %v2599 = vsub.f32 %v2484, %v2598
    %v2600 = vand.u32 %v2599, 4294901760
    %v2601 = vsub.f32 %v2599, %v2600
    %v2602 = vand.u32 %v2601, 4294901760
    %2603 = vmatpush1.msra.mxu0 %v2602
    %2604 = vmatprep.subr.mxu0 0.0
    %v2605 = vand.u32 %v2485, 4294901760
    %v2606 = vsub.f32 %v2485, %v2605
    %v2607 = vand.u32 %v2606, 4294901760
    %v2608 = vsub.f32 %v2606, %v2607
    %v2609 = vand.u32 %v2608, 4294901760
    %2610 = vmatpush1.msra.mxu0 %v2609
    %2611 = vmatprep.subr.mxu0 0.0
    %v2612 = vand.u32 %v2486, 4294901760
    %v2613 = vsub.f32 %v2486, %v2612
    %v2614 = vand.u32 %v2613, 4294901760
    %v2615 = vsub.f32 %v2613, %v2614
    %v2616 = vand.u32 %v2615, 4294901760
    %2617 = vmatpush1.msra.mxu0 %v2616
    %2618 = vmatprep.subr.mxu0 0.0
    %2619 = vmatpush1.msra.mxu0 0.0
    %2620 = vmatprep.subr.mxu0 0.0
    %2621 = vmatpush1.msra.mxu0 0.0
    %2622 = vmatprep.subr.mxu0 0.0
    %2623 = vmatpush1.msra.mxu0 0.0
    %2624 = vmatprep.subr.mxu0 0.0
    %2625 = vmatpush1.msra.mxu0 0.0
    %2626 = vmatprep.subr.mxu0 0.0
    %2627 = vmatpush1.msra.mxu0 0.0
    %2628 = vmatprep.subr.mxu0 0.0
    %2629 = vmatpush1.msra.mxu0 0.0
    %2630 = vmatprep.subr.mxu0 0.0
    %2631 = vmatpush1.msra.mxu0 0.0
    %2632 = vmatprep.subr.mxu0 0.0
    %2633 = vmatpush1.msra.mxu0 0.0
    %2634 = vmatprep.subr.mxu0 0.0
    %2635 = vmatpush1.msra.mxu0 0.0
    %2636 = vmatprep.subr.mxu0 0.0
    %2637 = vmatpush1.msra.mxu0 0.0
    %2638 = vmatprep.subr.mxu0 0.0
    %2639 = vmatpush1.msra.mxu0 0.0
    %2640 = vmatprep.subr.mxu0 0.0
    %2641 = vmatpush1.msra.mxu0 0.0
    %2642 = vmatprep.subr.mxu0 0.0
    %2643 = vmatpush1.msra.mxu0 0.0
    %2644 = vmatprep.subr.mxu0 0.0
    %2645 = vmatpush1.msra.mxu0 0.0
    %2646 = vmatprep.subr.mxu0 0.0
    %2647 = vmatpush1.msra.mxu0 0.0
    %2648 = vmatprep.subr.mxu0 0.0
    %2649 = vmatpush1.msra.mxu0 0.0
    %2650 = vmatprep.subr.mxu0 0.0
    %2651 = vmatpush1.msra.mxu0 0.0
    %2652 = vmatprep.subr.mxu0 0.0
    %2653 = vmatpush1.msra.mxu0 0.0
    %2654 = vmatprep.subr.mxu0 0.0
    %2655 = vmatpush1.msra.mxu0 0.0
    %2656 = vmatprep.subr.mxu0 0.0
    %2657 = vmatpush1.msra.mxu0 0.0
    %2658 = vmatprep.subr.mxu0 0.0
    %2659 = vmatpush1.msra.mxu0 0.0
    %2660 = vmatprep.subr.mxu0 0.0
    %2661 = vmatpush1.msra.mxu0 0.0
    %2662 = vmatprep.subr.mxu0 0.0
    %2663 = vmatpush1.msra.mxu0 0.0
    %2664 = vmatprep.subr.mxu0 0.0
    %2665 = vmatpush1.msra.mxu0 0.0
    %2666 = vmatprep.subr.mxu0 0.0
    %2667 = vmatpush1.msra.mxu0 0.0
    %2668 = vmatprep.subr.mxu0 0.0
    %2669 = vmatpush1.msra.mxu0 0.0
    %2670 = vmatprep.subr.mxu0 0.0
    %2671 = vmatpush1.msra.mxu0 0.0
    %2672 = vmatprep.subr.mxu0 0.0
    %2673 = vmatpush1.msra.mxu0 0.0
    %2674 = vmatprep.mubr.f32.mxu0 0.0
    %v2675 = vand.u32 %v2496, 4294901760
    %2676 = vmatmul.mubr.f32.gmra.mrb[0].mxu0 %v2675
    %v2677 = vpop.f32.mrb[0].mxu0
    %v2678 = vadd.f32 %v2577, %v2677
    %v2679 = vpop.f32.mrb[0].mxu0
    %2680 = vmatprep.mubr.f32.mxu0 0.0
    %v2681 = vand.u32 %v2499, 4294901760
    %2682 = vmatmul.mubr.f32.gmra.mrb[0].mxu0 %v2681
    %v2683 = vpop.f32.mrb[0].mxu0
    %v2684 = vadd.f32 %v2587, %v2683
    %v2685 = vpop.f32.mrb[0].mxu0
    %2686 = vdwg.mxu0
    %2687 = vmatprep.subr.mxu0 0.0
    %v2688 = vand.u32 %v2483, 4294901760
    %v2689 = vsub.f32 %v2483, %v2688
    %2690 = vmatpush1.msra.mxu0 %v2689
    %2691 = vmatprep.subr.mxu0 0.0
    %v2692 = vand.u32 %v2484, 4294901760
    %v2693 = vsub.f32 %v2484, %v2692
    %2694 = vmatpush1.msra.mxu0 %v2693
    %2695 = vmatprep.subr.mxu0 0.0
    %v2696 = vand.u32 %v2485, 4294901760
    %v2697 = vsub.f32 %v2485, %v2696
    %2698 = vmatpush1.msra.mxu0 %v2697
    %2699 = vmatprep.subr.mxu0 0.0
    %v2700 = vand.u32 %v2486, 4294901760
    %v2701 = vsub.f32 %v2486, %v2700
    %2702 = vmatpush1.msra.mxu0 %v2701
    %2703 = vmatprep.subr.mxu0 0.0
    %2704 = vmatpush1.msra.mxu0 0.0
    %2705 = vmatprep.subr.mxu0 0.0
    %2706 = vmatpush1.msra.mxu0 0.0
    %2707 = vmatprep.subr.mxu0 0.0
    %2708 = vmatpush1.msra.mxu0 0.0
    %2709 = vmatprep.subr.mxu0 0.0
    %2710 = vmatpush1.msra.mxu0 0.0
    %2711 = vmatprep.subr.mxu0 0.0
    %2712 = vmatpush1.msra.mxu0 0.0
    %2713 = vmatprep.subr.mxu0 0.0
    %2714 = vmatpush1.msra.mxu0 0.0
    %2715 = vmatprep.subr.mxu0 0.0
    %2716 = vmatpush1.msra.mxu0 0.0
    %2717 = vmatprep.subr.mxu0 0.0
    %2718 = vmatpush1.msra.mxu0 0.0
    %2719 = vmatprep.subr.mxu0 0.0
    %2720 = vmatpush1.msra.mxu0 0.0
    %2721 = vmatprep.subr.mxu0 0.0
    %2722 = vmatpush1.msra.mxu0 0.0
    %2723 = vmatprep.subr.mxu0 0.0
    %2724 = vmatpush1.msra.mxu0 0.0
    %2725 = vmatprep.subr.mxu0 0.0
    %2726 = vmatpush1.msra.mxu0 0.0
    %2727 = vmatprep.subr.mxu0 0.0
    %2728 = vmatpush1.msra.mxu0 0.0
    %2729 = vmatprep.subr.mxu0 0.0
    %2730 = vmatpush1.msra.mxu0 0.0
    %2731 = vmatprep.subr.mxu0 0.0
    %2732 = vmatpush1.msra.mxu0 0.0
    %2733 = vmatprep.subr.mxu0 0.0
    %2734 = vmatpush1.msra.mxu0 0.0
    %2735 = vmatprep.subr.mxu0 0.0
    %2736 = vmatpush1.msra.mxu0 0.0
    %2737 = vmatprep.subr.mxu0 0.0
    %2738 = vmatpush1.msra.mxu0 0.0
    %2739 = vmatprep.subr.mxu0 0.0
    %2740 = vmatpush1.msra.mxu0 0.0
    %2741 = vmatprep.subr.mxu0 0.0
    %2742 = vmatpush1.msra.mxu0 0.0
    %2743 = vmatprep.subr.mxu0 0.0
    %2744 = vmatpush1.msra.mxu0 0.0
    %2745 = vmatprep.subr.mxu0 0.0
    %2746 = vmatpush1.msra.mxu0 0.0
    %2747 = vmatprep.subr.mxu0 0.0
    %2748 = vmatpush1.msra.mxu0 0.0
    %2749 = vmatprep.subr.mxu0 0.0
    %2750 = vmatpush1.msra.mxu0 0.0
    %2751 = vmatprep.subr.mxu0 0.0
    %2752 = vmatpush1.msra.mxu0 0.0
    %2753 = vmatprep.subr.mxu0 0.0
    %2754 = vmatpush1.msra.mxu0 0.0
    %2755 = vmatprep.subr.mxu0 0.0
    %2756 = vmatpush1.msra.mxu0 0.0
    %2757 = vmatprep.subr.mxu0 0.0
    %2758 = vmatpush1.msra.mxu0 0.0
    %2759 = vmatprep.mubr.f32.mxu0 0.0
    %v2760 = vand.u32 %v2496, 4294901760
    %v2761 = vsub.f32 %v2496, %v2760
    %2762 = vmatmul.mubr.f32.gmra.mrb[0].mxu0 %v2761
    %v2763 = vpop.f32.mrb[0].mxu0
    %v2764 = vadd.f32 %v2678, %v2763
    %v2765 = vpop.f32.mrb[0].mxu0
    %2766 = vmatprep.mubr.f32.mxu0 0.0
    %v2767 = vand.u32 %v2499, 4294901760
    %v2768 = vsub.f32 %v2499, %v2767
    %2769 = vmatmul.mubr.f32.gmra.mrb[0].mxu0 %v2768
    %v2770 = vpop.f32.mrb[0].mxu0
    %v2771 = vadd.f32 %v2684, %v2770
    %v2772 = vpop.f32.mrb[0].mxu0
    %2773 = vdwg.mxu0
    %2774 = vmatprep.subr.mxu0 0.0
    %v2775 = vand.u32 %v2483, 4294901760
    %2776 = vmatpush1.msra.mxu0 %v2775
    %2777 = vmatprep.subr.mxu0 0.0
    %v2778 = vand.u32 %v2484, 4294901760
    %2779 = vmatpush1.msra.mxu0 %v2778
    %2780 = vmatprep.subr.mxu0 0.0
    %v2781 = vand.u32 %v2485, 4294901760
    %2782 = vmatpush1.msra.mxu0 %v2781
    %2783 = vmatprep.subr.mxu0 0.0
    %v2784 = vand.u32 %v2486, 4294901760
    %2785 = vmatpush1.msra.mxu0 %v2784
    %2786 = vmatprep.subr.mxu0 0.0
    %2787 = vmatpush1.msra.mxu0 0.0
    %2788 = vmatprep.subr.mxu0 0.0
    %2789 = vmatpush1.msra.mxu0 0.0
    %2790 = vmatprep.subr.mxu0 0.0
    %2791 = vmatpush1.msra.mxu0 0.0
    %2792 = vmatprep.subr.mxu0 0.0
    %2793 = vmatpush1.msra.mxu0 0.0
    %2794 = vmatprep.subr.mxu0 0.0
    %2795 = vmatpush1.msra.mxu0 0.0
    %2796 = vmatprep.subr.mxu0 0.0
    %2797 = vmatpush1.msra.mxu0 0.0
    %2798 = vmatprep.subr.mxu0 0.0
    %2799 = vmatpush1.msra.mxu0 0.0
    %2800 = vmatprep.subr.mxu0 0.0
    %2801 = vmatpush1.msra.mxu0 0.0
    %2802 = vmatprep.subr.mxu0 0.0
    %2803 = vmatpush1.msra.mxu0 0.0
    %2804 = vmatprep.subr.mxu0 0.0
    %2805 = vmatpush1.msra.mxu0 0.0
    %2806 = vmatprep.subr.mxu0 0.0
    %2807 = vmatpush1.msra.mxu0 0.0
    %2808 = vmatprep.subr.mxu0 0.0
    %2809 = vmatpush1.msra.mxu0 0.0
    %2810 = vmatprep.subr.mxu0 0.0
    %2811 = vmatpush1.msra.mxu0 0.0
    %2812 = vmatprep.subr.mxu0 0.0
    %2813 = vmatpush1.msra.mxu0 0.0
    %2814 = vmatprep.subr.mxu0 0.0
    %2815 = vmatpush1.msra.mxu0 0.0
    %2816 = vmatprep.subr.mxu0 0.0
    %2817 = vmatpush1.msra.mxu0 0.0
    %2818 = vmatprep.subr.mxu0 0.0
    %2819 = vmatpush1.msra.mxu0 0.0
    %2820 = vmatprep.subr.mxu0 0.0
    %2821 = vmatpush1.msra.mxu0 0.0
    %2822 = vmatprep.subr.mxu0 0.0
    %2823 = vmatpush1.msra.mxu0 0.0
    %2824 = vmatprep.subr.mxu0 0.0
    %2825 = vmatpush1.msra.mxu0 0.0
    %2826 = vmatprep.subr.mxu0 0.0
    %2827 = vmatpush1.msra.mxu0 0.0
    %2828 = vmatprep.subr.mxu0 0.0
    %2829 = vmatpush1.msra.mxu0 0.0
    %2830 = vmatprep.subr.mxu0 0.0
    %2831 = vmatpush1.msra.mxu0 0.0
    %2832 = vmatprep.subr.mxu0 0.0
    %2833 = vmatpush1.msra.mxu0 0.0
    %2834 = vmatprep.subr.mxu0 0.0
    %2835 = vmatpush1.msra.mxu0 0.0
    %2836 = vmatprep.subr.mxu0 0.0
    %2837 = vmatpush1.msra.mxu0 0.0
    %2838 = vmatprep.subr.mxu0 0.0
    %2839 = vmatpush1.msra.mxu0 0.0
    %2840 = vmatprep.subr.mxu0 0.0
    %2841 = vmatpush1.msra.mxu0 0.0
    %2842 = vmatprep.mubr.f32.mxu0 0.0
    %v2843 = vand.u32 %v2496, 4294901760
    %v2844 = vsub.f32 %v2496, %v2843
    %v2845 = vand.u32 %v2844, 4294901760
    %2846 = vmatmul.mubr.f32.gmra.mrb[0].mxu0 %v2845
    %v2847 = vpop.f32.mrb[0].mxu0
    %v2848 = vadd.f32 %v2764, %v2847
    %v2849 = vpop.f32.mrb[0].mxu0
    %2850 = vmatprep.mubr.f32.mxu0 0.0
    %v2851 = vand.u32 %v2499, 4294901760
    %v2852 = vsub.f32 %v2499, %v2851
    %v2853 = vand.u32 %v2852, 4294901760
    %2854 = vmatmul.mubr.f32.gmra.mrb[0].mxu0 %v2853
    %v2855 = vpop.f32.mrb[0].mxu0
    %v2856 = vadd.f32 %v2771, %v2855
    %v2857 = vpop.f32.mrb[0].mxu0
    %2858 = vdwg.mxu0
    %2859 = vmatprep.subr.mxu0 0.0
    %v2860 = vand.u32 %v2483, 4294901760
    %v2861 = vsub.f32 %v2483, %v2860
    %v2862 = vand.u32 %v2861, 4294901760
    %2863 = vmatpush1.msra.mxu0 %v2862
    %2864 = vmatprep.subr.mxu0 0.0
    %v2865 = vand.u32 %v2484, 4294901760
    %v2866 = vsub.f32 %v2484, %v2865
    %v2867 = vand.u32 %v2866, 4294901760
    %2868 = vmatpush1.msra.mxu0 %v2867
    %2869 = vmatprep.subr.mxu0 0.0
    %v2870 = vand.u32 %v2485, 4294901760
    %v2871 = vsub.f32 %v2485, %v2870
    %v2872 = vand.u32 %v2871, 4294901760
    %2873 = vmatpush1.msra.mxu0 %v2872
    %2874 = vmatprep.subr.mxu0 0.0
    %v2875 = vand.u32 %v2486, 4294901760
    %v2876 = vsub.f32 %v2486, %v2875
    %v2877 = vand.u32 %v2876, 4294901760
    %2878 = vmatpush1.msra.mxu0 %v2877
    %2879 = vmatprep.subr.mxu0 0.0
    %2880 = vmatpush1.msra.mxu0 0.0
    %2881 = vmatprep.subr.mxu0 0.0
    %2882 = vmatpush1.msra.mxu0 0.0
    %2883 = vmatprep.subr.mxu0 0.0
    %2884 = vmatpush1.msra.mxu0 0.0
    %2885 = vmatprep.subr.mxu0 0.0
    %2886 = vmatpush1.msra.mxu0 0.0
    %2887 = vmatprep.subr.mxu0 0.0
    %2888 = vmatpush1.msra.mxu0 0.0
    %2889 = vmatprep.subr.mxu0 0.0
    %2890 = vmatpush1.msra.mxu0 0.0
    %2891 = vmatprep.subr.mxu0 0.0
    %2892 = vmatpush1.msra.mxu0 0.0
    %2893 = vmatprep.subr.mxu0 0.0
    %2894 = vmatpush1.msra.mxu0 0.0
    %2895 = vmatprep.subr.mxu0 0.0
    %2896 = vmatpush1.msra.mxu0 0.0
    %2897 = vmatprep.subr.mxu0 0.0
    %2898 = vmatpush1.msra.mxu0 0.0
    %2899 = vmatprep.subr.mxu0 0.0
    %2900 = vmatpush1.msra.mxu0 0.0
    %2901 = vmatprep.subr.mxu0 0.0
    %2902 = vmatpush1.msra.mxu0 0.0
    %2903 = vmatprep.subr.mxu0 0.0
    %2904 = vmatpush1.msra.mxu0 0.0
    %2905 = vmatprep.subr.mxu0 0.0
    %2906 = vmatpush1.msra.mxu0 0.0
    %2907 = vmatprep.subr.mxu0 0.0
    %2908 = vmatpush1.msra.mxu0 0.0
    %2909 = vmatprep.subr.mxu0 0.0
    %2910 = vmatpush1.msra.mxu0 0.0
    %2911 = vmatprep.subr.mxu0 0.0
    %2912 = vmatpush1.msra.mxu0 0.0
    %2913 = vmatprep.subr.mxu0 0.0
    %2914 = vmatpush1.msra.mxu0 0.0
    %2915 = vmatprep.subr.mxu0 0.0
    %2916 = vmatpush1.msra.mxu0 0.0
    %2917 = vmatprep.subr.mxu0 0.0
    %2918 = vmatpush1.msra.mxu0 0.0
    %2919 = vmatprep.subr.mxu0 0.0
    %2920 = vmatpush1.msra.mxu0 0.0
    %2921 = vmatprep.subr.mxu0 0.0
    %2922 = vmatpush1.msra.mxu0 0.0
    %2923 = vmatprep.subr.mxu0 0.0
    %2924 = vmatpush1.msra.mxu0 0.0
    %2925 = vmatprep.subr.mxu0 0.0
    %2926 = vmatpush1.msra.mxu0 0.0
    %2927 = vmatprep.subr.mxu0 0.0
    %2928 = vmatpush1.msra.mxu0 0.0
    %2929 = vmatprep.subr.mxu0 0.0
    %2930 = vmatpush1.msra.mxu0 0.0
    %2931 = vmatprep.subr.mxu0 0.0
    %2932 = vmatpush1.msra.mxu0 0.0
    %2933 = vmatprep.subr.mxu0 0.0
    %2934 = vmatpush1.msra.mxu0 0.0
    %2935 = vmatprep.mubr.f32.mxu0 0.0
    %v2936 = vand.u32 %v2496, 4294901760
    %2937 = vmatmul.mubr.f32.gmra.mrb[0].mxu0 %v2936
    %v2938 = vpop.f32.mrb[0].mxu0
    %v2939 = vadd.f32 %v2848, %v2938
    %v2940 = vpop.f32.mrb[0].mxu0
    %2941 = vmatprep.mubr.f32.mxu0 0.0
    %v2942 = vand.u32 %v2499, 4294901760
    %2943 = vmatmul.mubr.f32.gmra.mrb[0].mxu0 %v2942
    %v2944 = vpop.f32.mrb[0].mxu0
    %v2945 = vadd.f32 %v2856, %v2944
    %v2946 = vpop.f32.mrb[0].mxu0
    %2947 = vdwg.mxu0
    %2948 = vmatprep.subr.mxu0 0.0
    %v2949 = vand.u32 %v2483, 4294901760
    %2950 = vmatpush1.msra.mxu0 %v2949
    %2951 = vmatprep.subr.mxu0 0.0
    %v2952 = vand.u32 %v2484, 4294901760
    %2953 = vmatpush1.msra.mxu0 %v2952
    %2954 = vmatprep.subr.mxu0 0.0
    %v2955 = vand.u32 %v2485, 4294901760
    %2956 = vmatpush1.msra.mxu0 %v2955
    %2957 = vmatprep.subr.mxu0 0.0
    %v2958 = vand.u32 %v2486, 4294901760
    %2959 = vmatpush1.msra.mxu0 %v2958
    %2960 = vmatprep.subr.mxu0 0.0
    %2961 = vmatpush1.msra.mxu0 0.0
    %2962 = vmatprep.subr.mxu0 0.0
    %2963 = vmatpush1.msra.mxu0 0.0
    %2964 = vmatprep.subr.mxu0 0.0
    %2965 = vmatpush1.msra.mxu0 0.0
    %2966 = vmatprep.subr.mxu0 0.0
    %2967 = vmatpush1.msra.mxu0 0.0
    %2968 = vmatprep.subr.mxu0 0.0
    %2969 = vmatpush1.msra.mxu0 0.0
    %2970 = vmatprep.subr.mxu0 0.0
    %2971 = vmatpush1.msra.mxu0 0.0
    %2972 = vmatprep.subr.mxu0 0.0
    %2973 = vmatpush1.msra.mxu0 0.0
    %2974 = vmatprep.subr.mxu0 0.0
    %2975 = vmatpush1.msra.mxu0 0.0
    %2976 = vmatprep.subr.mxu0 0.0
    %2977 = vmatpush1.msra.mxu0 0.0
    %2978 = vmatprep.subr.mxu0 0.0
    %2979 = vmatpush1.msra.mxu0 0.0
    %2980 = vmatprep.subr.mxu0 0.0
    %2981 = vmatpush1.msra.mxu0 0.0
    %2982 = vmatprep.subr.mxu0 0.0
    %2983 = vmatpush1.msra.mxu0 0.0
    %2984 = vmatprep.subr.mxu0 0.0
    %2985 = vmatpush1.msra.mxu0 0.0
    %2986 = vmatprep.subr.mxu0 0.0
    %2987 = vmatpush1.msra.mxu0 0.0
    %2988 = vmatprep.subr.mxu0 0.0
    %2989 = vmatpush1.msra.mxu0 0.0
    %2990 = vmatprep.subr.mxu0 0.0
    %2991 = vmatpush1.msra.mxu0 0.0
    %2992 = vmatprep.subr.mxu0 0.0
    %2993 = vmatpush1.msra.mxu0 0.0
    %2994 = vmatprep.subr.mxu0 0.0
    %2995 = vmatpush1.msra.mxu0 0.0
    %2996 = vmatprep.subr.mxu0 0.0
    %2997 = vmatpush1.msra.mxu0 0.0
    %2998 = vmatprep.subr.mxu0 0.0
    %2999 = vmatpush1.msra.mxu0 0.0
    %3000 = vmatprep.subr.mxu0 0.0
    %3001 = vmatpush1.msra.mxu0 0.0
    %3002 = vmatprep.subr.mxu0 0.0
    %3003 = vmatpush1.msra.mxu0 0.0
    %3004 = vmatprep.subr.mxu0 0.0
    %3005 = vmatpush1.msra.mxu0 0.0
    %3006 = vmatprep.subr.mxu0 0.0
    %3007 = vmatpush1.msra.mxu0 0.0
    %3008 = vmatprep.subr.mxu0 0.0
    %3009 = vmatpush1.msra.mxu0 0.0
    %3010 = vmatprep.subr.mxu0 0.0
    %3011 = vmatpush1.msra.mxu0 0.0
    %3012 = vmatprep.subr.mxu0 0.0
    %3013 = vmatpush1.msra.mxu0 0.0
    %3014 = vmatprep.subr.mxu0 0.0
    %3015 = vmatpush1.msra.mxu0 0.0
    %3016 = vmatprep.mubr.f32.mxu0 0.0
    %v3017 = vand.u32 %v2496, 4294901760
    %3018 = vmatmul.mubr.f32.gmra.mrb[0].mxu0 %v3017
    %v3019 = vpop.f32.mrb[0].mxu0
    %v3020 = vadd.f32 %v2939, %v3019
    %v3021 = vpop.f32.mrb[0].mxu0
    %3022 = vmatprep.mubr.f32.mxu0 0.0
    %v3023 = vand.u32 %v2499, 4294901760
    %3024 = vmatmul.mubr.f32.gmra.mrb[0].mxu0 %v3023
    %v3025 = vpop.f32.mrb[0].mxu0
    %v3026 = vadd.f32 %v2945, %v3025
    %v3027 = vpop.f32.mrb[0].mxu0
    %3028 = vdwg.mxu0
    %3029 = vst [vmem:[#allocation2] sm:$0xff] %v3020
    %3030 = vst [vmem:[#allocation2 + $0x8] sm:$0xff] %v3026
    // Predicated region
    $region38: #{tpu_custom_call.1} parent=1 // pred_check
      _
    $region39: #{tpu_custom_call.1} parent=1 // pred_check_branch
      %3032 = sbr.rel (0) target = $region41
    $region40: #{tpu_custom_call.1} parent=1 // pred_region
      %s3034 = ssub.s32 256, 256
      %3035 = vsyncadd [#allocation3], %s3034
      %s3036 = sshll.u32 [#allocation2], 4
      %s3037 = int_to_ptr.vmem [resolvable:$true] %s3036
      %3042 = dma.vmem_to_hbm [thread:$0]  %s3037, 256, %s9, [#allocation3], 128, 128, 8
    $region41: #{tpu_custom_call.1} parent=1 // pred_fallthru
      _
    // Predicated region
    $region42: #{tpu_custom_call.1} parent=1 // pred_check
      _
    $region43: #{tpu_custom_call.1} parent=1 // pred_check_branch
      %3044 = sbr.rel (0) target = $region45
    $region44: #{tpu_custom_call.1} parent=1 // pred_region
      %3045 = dma.done [#allocation3], 256
    $region45: #{tpu_custom_call.1} parent=1 // pred_fallthru
      _
    %3046 = vsyncpa [#allocation3], 1

</llo_original>
